<compile_context>
chip_gen: v6e
topology: v6e:2x2x1
jax: 0.10.0
libtpu: 0.0.40
codegen_flags: <defaults>
</compile_context>

<pallas_src>
import functools

import jax
import jax.numpy as jnp
from jax import lax
from jax.experimental import pallas as pl
from jax.experimental.pallas import tpu as pltpu

# ----------------------------- model config (small) -------------------------
INPUT_DIM = 200        # vocab size (module uses 13844; shrunk for the demo)
EMB_DIM = 128          # module uses 300
HID_DIM = 128          # module uses 256
OUTPUT_DIM = 2
NUM_LAYERS = 2
PAD_IDX = 1            # specials = ['<unk>', '<pad>', '<bos>', '<eos>'] -> '<pad>' == 1
BATCH = 2
SEQ = 8


# ----------------------------- Pallas kernel --------------------------------
def _bilstm_layer_kernel(tmax_ref, len_ref, x_ref,
                         wih_f_ref, whh_f_ref, b_f_ref,
                         wih_b_ref, whh_b_ref, b_b_ref,
                         y_ref, hf_ref, hb_ref,
                         gx_f, gx_b, *, hid_dim):
    """One fused bidirectional LSTM layer over the full (packed) sequence.

    tmax_ref: (1,) int32 SMEM       max valid length in the batch (loop bound)
    len_ref:  (B, 1) int32 VMEM     per-sequence valid lengths (vector mask)
    x_ref:    (T, B, D_in) f32      layer input, time-major
    w*_ref:   bf16 (D_in, 4H) / (H, 4H) (PyTorch weights transposed)
    b*_ref:   (1, 4H) f32           bias_ih + bias_hh combined
    y_ref:    (T, B, 2H) f32        [..., :H] = forward, [..., H:] = backward
    hf_ref/hb_ref: (B, H) f32       final hidden per direction (packed semantics)
    gx_f/gx_b: (T*B, 4H) f32 VMEM   precomputed input projections
    """
    T, B, _ = x_ref.shape
    H = hid_dim
    n = tmax_ref[0]                              # recurrent step count (= max length)
    lengths = len_ref[...]                       # (B, 1) int32

    # ---- hoisted input projection: one big MXU matmul per direction --------
    x2d = x_ref[...].reshape(T * B, x_ref.shape[2]).astype(jnp.bfloat16)
    gx_f[...] = (jnp.dot(x2d, wih_f_ref[...], preferred_element_type=jnp.float32)
                 + b_f_ref[...])
    gx_b[...] = (jnp.dot(x2d, wih_b_ref[...], preferred_element_type=jnp.float32)
                 + b_b_ref[...])

    # Steps t >= max(lengths) are never visited by the loop; keep them zero
    # (pad_packed_sequence semantics).
    y_ref[...] = jnp.zeros(y_ref.shape, y_ref.dtype)

    def cell(h, c, gates, mask):
        # gate order i, f, g, o (PyTorch convention)
        i_g = jax.nn.sigmoid(gates[:, 0 * H:1 * H])
        f_g = jax.nn.sigmoid(gates[:, 1 * H:2 * H])
        g_g = jnp.tanh(gates[:, 2 * H:3 * H])
        o_g = jax.nn.sigmoid(gates[:, 3 * H:4 * H])
        c_new = f_g * c + i_g * g_g
        h_new = o_g * jnp.tanh(c_new)
        # Packed-sequence semantics: only update while t < L_b.
        h_out = jnp.where(mask, h_new, h)
        c_out = jnp.where(mask, c_new, c)
        y_val = jnp.where(mask, h_new, jnp.zeros_like(h_new))
        return h_out, c_out, y_val

    def step(i, carry):
        h_f, c_f, h_b, c_b = carry
        t_f = i
        t_b = n - 1 - i

        # Forward direction: only h @ W_hh is left on the serial critical path.
        row_f = pl.multiple_of(t_f * B, B)
        gates_f = (jnp.dot(h_f.astype(jnp.bfloat16), whh_f_ref[...],
                           preferred_element_type=jnp.float32)
                   + gx_f[pl.ds(row_f, B), :])
        h_f, c_f, y_f = cell(h_f, c_f, gates_f, t_f < lengths)
        y_ref[t_f, :, 0:H] = y_f

        # Backward direction: independent, hides under the forward dep chain.
        row_b = pl.multiple_of(t_b * B, B)
        gates_b = (jnp.dot(h_b.astype(jnp.bfloat16), whh_b_ref[...],
                           preferred_element_type=jnp.float32)
                   + gx_b[pl.ds(row_b, B), :])
        h_b, c_b, y_b = cell(h_b, c_b, gates_b, t_b < lengths)
        y_ref[t_b, :, H:2 * H] = y_b

        return h_f, c_f, h_b, c_b

    zeros = jnp.zeros((B, H), jnp.float32)
    h_f_fin, _, h_b_fin, _ = lax.fori_loop(0, n, step, (zeros, zeros, zeros, zeros))
    hf_ref[...] = h_f_fin
    hb_ref[...] = h_b_fin


# ----------------------------- wrapper ---------------------------------------
def bilstm_layer(x_tbd, lengths_b1, t_max, p):
    """x_tbd: (T, B, D_in) f32; returns (y (T,B,2H), h_fwd (B,H), h_bwd (B,H))."""
    T, B, _ = x_tbd.shape
    H = p['w_hh_f'].shape[0]
    kernel = functools.partial(_bilstm_layer_kernel, hid_dim=H)
    vmem = pl.BlockSpec(memory_space=pltpu.MemorySpace.VMEM)
    smem = pl.BlockSpec(memory_space=pltpu.MemorySpace.SMEM)
    # TODO(synk): for production T/B/H, stream T-chunks (pltpu.emit_pipeline,
    # h/c carried in scratch) instead of whole-sequence VMEM residency, and on
    # v7x run the two directions on a grid=(2,) "parallel" axis (one per TC).
    return pl.pallas_call(
        kernel,
        out_shape=(jax.ShapeDtypeStruct((T, B, 2 * H), jnp.float32),
                   jax.ShapeDtypeStruct((B, H), jnp.float32),
                   jax.ShapeDtypeStruct((B, H), jnp.float32)),
        in_specs=[smem, vmem, vmem, vmem, vmem, vmem, vmem, vmem, vmem],
        out_specs=(vmem, vmem, vmem),
        scratch_shapes=[pltpu.VMEM((T * B, 4 * H), jnp.float32),
                        pltpu.VMEM((T * B, 4 * H), jnp.float32)],
        compiler_params=pltpu.CompilerParams(vmem_limit_bytes=32 * 1024 * 1024),
    )(t_max, lengths_b1, x_tbd,
      p['w_ih_f'], p['w_hh_f'], p['b_f'],
      p['w_ih_b'], p['w_hh_b'], p['b_b'])


# ----------------------------- params ----------------------------------------
def init_params(key):
    keys = jax.random.split(key, 3 + 6 * NUM_LAYERS)
    ki = iter(keys)

    # Embedding: N(0,1) with the padding row zeroed (padding_idx semantics).
    emb = jax.random.normal(next(ki), (INPUT_DIM, EMB_DIM), jnp.float32)
    emb = emb.at[PAD_IDX].set(0.0)

    k = 1.0 / jnp.sqrt(HID_DIM)

    def u(key_, shape, dtype=jnp.float32):
        return jax.random.uniform(key_, shape, jnp.float32, -k, k).astype(dtype)

    lstm = []
    for layer in range(NUM_LAYERS):
        d_in = EMB_DIM if layer == 0 else 2 * HID_DIM
        layer_p = {
            # PyTorch weight_{ih,hh} transposed; kept in bf16 for the MXU
            # (f32 accumulation in-kernel, h/c carries stay f32).
            'w_ih_f': u(next(ki), (d_in, 4 * HID_DIM), jnp.bfloat16),
            'w_hh_f': u(next(ki), (HID_DIM, 4 * HID_DIM), jnp.bfloat16),
            'b_f':    u(next(ki), (1, 4 * HID_DIM)),   # bias_ih + bias_hh combined
            'w_ih_b': u(next(ki), (d_in, 4 * HID_DIM), jnp.bfloat16),
            'w_hh_b': u(next(ki), (HID_DIM, 4 * HID_DIM), jnp.bfloat16),
            'b_b':    u(next(ki), (1, 4 * HID_DIM)),
        }
        lstm.append(layer_p)

    kf = 1.0 / jnp.sqrt(2 * HID_DIM)
    fc_w = jax.random.uniform(next(ki), (2 * HID_DIM, OUTPUT_DIM), jnp.float32, -kf, kf)
    fc_b = jax.random.uniform(next(ki), (1, OUTPUT_DIM), jnp.float32, -kf, kf)
    return {'embedding': emb, 'lstm': lstm, 'fc_w': fc_w, 'fc_b': fc_b}


# ----------------------------- forward ----------------------------------------
@jax.jit
def model_forward(params, token_ids, lengths):
    """token_ids: (B, T) int32, lengths: (B,) int32 -> logits (B, OUTPUT_DIM)."""
    B, T = token_ids.shape
    # Embedding lookup (glue gather; pad row is zero).
    emb = jnp.take(params['embedding'], token_ids, axis=0)        # (B, T, E)
    x = jnp.transpose(emb, (1, 0, 2)).astype(jnp.float32)          # (T, B, E)

    # Pad batch to a multiple of 8 (f32 sublane). Padded rows get length 0, so
    # their state never updates and their outputs stay zero.
    B_pad = ((B + 7) // 8) * 8
    x = jnp.pad(x, ((0, 0), (0, B_pad - B), (0, 0)))
    lengths_p = jnp.pad(lengths.astype(jnp.int32), (0, B_pad - B))
    lengths_b1 = lengths_p[:, None]                                # (B_pad, 1)
    t_max = jnp.max(lengths_p)[None].astype(jnp.int32)             # (1,) SMEM scalar

    layer_in = x
    h_f = h_b = None
    for layer in range(NUM_LAYERS):
        layer_in, h_f, h_b = bilstm_layer(layer_in, lengths_b1, t_max,
                                          params['lstm'][layer])
        # TODO(synk): inter-layer dropout (p=0.5) is a no-op in eval-mode forward; skipped.

    # torch.cat((h[-1], h[-2]), dim=1) == [top-layer backward, top-layer forward]
    feat = jnp.concatenate([h_b, h_f], axis=-1)[:B]                # (B, 2H)
    # Final (B, 2H) @ (2H, 2) projection is too small to amortize a pallas_call;
    # keep it in plain XLA (per perf review).
    return feat @ params['fc_w'] + params['fc_b']                  # (B, OUTPUT_DIM)


if __name__ == "__main__":
    key = jax.random.PRNGKey(0)
    pkey, tkey = jax.random.split(key)
    params = init_params(pkey)

    # Deterministic toy batch: token ids in [4, vocab), with padding.
    token_ids = jax.random.randint(tkey, (BATCH, SEQ), 4, INPUT_DIM, dtype=jnp.int32)
    lengths = jnp.array([SEQ, 5], dtype=jnp.int32)
    pos = jnp.arange(SEQ, dtype=jnp.int32)[None, :]
    token_ids = jnp.where(pos < lengths[:, None], token_ids, PAD_IDX)

    logits = model_forward(params, token_ids, lengths)
    jax.block_until_ready(logits)
    assert logits.shape == (BATCH, OUTPUT_DIM)
    print("KERNEL_OK")
</pallas_src>

<mosaic_0001>
module attributes {stable_mosaic.version = 11 : i64} {
  func.func @_bilstm_layer_kernel(%arg0: memref<1xi32, #tpu.memory_space<smem>>, %arg1: memref<8x1xi32, #tpu.memory_space<vmem>>, %arg2: memref<8x8x128xf32, #tpu.memory_space<vmem>>, %arg3: memref<128x512xbf16, #tpu.memory_space<vmem>>, %arg4: memref<128x512xbf16, #tpu.memory_space<vmem>>, %arg5: memref<1x512xf32, #tpu.memory_space<vmem>>, %arg6: memref<128x512xbf16, #tpu.memory_space<vmem>>, %arg7: memref<128x512xbf16, #tpu.memory_space<vmem>>, %arg8: memref<1x512xf32, #tpu.memory_space<vmem>>, %arg9: memref<8x8x256xf32, #tpu.memory_space<vmem>>, %arg10: memref<8x128xf32, #tpu.memory_space<vmem>>, %arg11: memref<8x128xf32, #tpu.memory_space<vmem>>, %arg12: memref<64x512xf32, #tpu.memory_space<vmem>>, %arg13: memref<64x512xf32, #tpu.memory_space<vmem>>) attributes {dimension_semantics = [], scalar_prefetch = 0 : i64, scratch_operands = 2 : i64, tpu.core_type = #tpu.core_type<tc>} {
    %c0 = arith.constant 0 : index
    %0 = memref.load %arg0[%c0] : memref<1xi32, #tpu.memory_space<smem>>
    %c0_0 = arith.constant 0 : index
    %c0_1 = arith.constant 0 : index
    %1 = vector.load %arg1[%c0_0, %c0_1] : memref<8x1xi32, #tpu.memory_space<vmem>>, vector<8x1xi32>
    %c0_2 = arith.constant 0 : index
    %c0_3 = arith.constant 0 : index
    %c0_4 = arith.constant 0 : index
    %2 = vector.load %arg2[%c0_2, %c0_3, %c0_4] : memref<8x8x128xf32, #tpu.memory_space<vmem>>, vector<8x8x128xf32>
    %3 = vector.shape_cast %2 : vector<8x8x128xf32> to vector<64x128xf32>
    %4 = arith.truncf %3 : vector<64x128xf32> to vector<64x128xbf16>
    %c0_5 = arith.constant 0 : index
    %c0_6 = arith.constant 0 : index
    %5 = vector.load %arg3[%c0_5, %c0_6] : memref<128x512xbf16, #tpu.memory_space<vmem>>, vector<128x512xbf16>
    %cst = arith.constant dense<0.000000e+00> : vector<64x512xf32>
    %6 = tpu.matmul %4, %5, %cst {dimension_numbers = #tpu.dot_dimension_numbers<[1], [0], [0], [1], [0, 0, 1, 1], [], []>} : vector<64x128xbf16>, vector<128x512xbf16>, vector<64x512xf32> -> vector<64x512xf32>
    %c0_7 = arith.constant 0 : index
    %c0_8 = arith.constant 0 : index
    %7 = vector.load %arg5[%c0_7, %c0_8] : memref<1x512xf32, #tpu.memory_space<vmem>>, vector<1x512xf32>
    %8 = vector.broadcast %7 : vector<1x512xf32> to vector<64x512xf32>
    %9 = arith.addf %6, %8 : vector<64x512xf32>
    %c0_9 = arith.constant 0 : index
    %c0_10 = arith.constant 0 : index
    %10 = vector.load %arg12[%c0_9, %c0_10] : memref<64x512xf32, #tpu.memory_space<vmem>>, vector<64x512xf32>
    tpu.vector_store %arg12[%c0_9, %c0_10], %9 {strides = array<i32>} : memref<64x512xf32, #tpu.memory_space<vmem>>, vector<64x512xf32>,
    %c0_11 = arith.constant 0 : index
    %c0_12 = arith.constant 0 : index
    %11 = vector.load %arg6[%c0_11, %c0_12] : memref<128x512xbf16, #tpu.memory_space<vmem>>, vector<128x512xbf16>
    %cst_13 = arith.constant dense<0.000000e+00> : vector<64x512xf32>
    %12 = tpu.matmul %4, %11, %cst_13 {dimension_numbers = #tpu.dot_dimension_numbers<[1], [0], [0], [1], [0, 0, 1, 1], [], []>} : vector<64x128xbf16>, vector<128x512xbf16>, vector<64x512xf32> -> vector<64x512xf32>
    %c0_14 = arith.constant 0 : index
    %c0_15 = arith.constant 0 : index
    %13 = vector.load %arg8[%c0_14, %c0_15] : memref<1x512xf32, #tpu.memory_space<vmem>>, vector<1x512xf32>
    %14 = vector.broadcast %13 : vector<1x512xf32> to vector<64x512xf32>
    %15 = arith.addf %12, %14 : vector<64x512xf32>
    %c0_16 = arith.constant 0 : index
    %c0_17 = arith.constant 0 : index
    %16 = vector.load %arg13[%c0_16, %c0_17] : memref<64x512xf32, #tpu.memory_space<vmem>>, vector<64x512xf32>
    tpu.vector_store %arg13[%c0_16, %c0_17], %15 {strides = array<i32>} : memref<64x512xf32, #tpu.memory_space<vmem>>, vector<64x512xf32>,
    %cst_18 = arith.constant 0.000000e+00 : f32
    %17 = vector.broadcast %cst_18 : f32 to vector<8x8x256xf32>
    %c0_19 = arith.constant 0 : index
    %c0_20 = arith.constant 0 : index
    %c0_21 = arith.constant 0 : index
    %18 = vector.load %arg9[%c0_19, %c0_20, %c0_21] : memref<8x8x256xf32, #tpu.memory_space<vmem>>, vector<8x8x256xf32>
    tpu.vector_store %arg9[%c0_19, %c0_20, %c0_21], %17 {strides = array<i32>} : memref<8x8x256xf32, #tpu.memory_space<vmem>>, vector<8x8x256xf32>,
    %cst_22 = arith.constant 0.000000e+00 : f32
    %19 = vector.broadcast %cst_22 : f32 to vector<8x128xf32>
    %c0_i32 = arith.constant 0 : i32
    %20 = arith.subi %0, %c0_i32 : i32
    %21 = arith.addi %c0_i32, %20 : i32
    %c1_i32 = arith.constant 1 : i32
    %22:4 = scf.for %arg14 = %c0_i32 to %21 step %c1_i32 iter_args(%arg15 = %19, %arg16 = %19, %arg17 = %19, %arg18 = %19) -> (vector<8x128xf32>, vector<8x128xf32>, vector<8x128xf32>, vector<8x128xf32>)  : i32 {
      %c1_i32_27 = arith.constant 1 : i32
      %25 = arith.subi %0, %c1_i32_27 : i32
      %26 = arith.subi %25, %arg14 : i32
      %c8_i32 = arith.constant 8 : i32
      %27 = arith.muli %arg14, %c8_i32 : i32
      %28 = tpu.assume_multiple %27, 8 : i32
      %29 = arith.truncf %arg15 : vector<8x128xf32> to vector<8x128xbf16>
      %c0_28 = arith.constant 0 : index
      %c0_29 = arith.constant 0 : index
      %30 = vector.load %arg4[%c0_28, %c0_29] : memref<128x512xbf16, #tpu.memory_space<vmem>>, vector<128x512xbf16>
      %cst_30 = arith.constant dense<0.000000e+00> : vector<8x512xf32>
      %31 = tpu.matmul %29, %30, %cst_30 {dimension_numbers = #tpu.dot_dimension_numbers<[1], [0], [0], [1], [0, 0, 1, 1], [], []>} : vector<8x128xbf16>, vector<128x512xbf16>, vector<8x512xf32> -> vector<8x512xf32>
      %32 = arith.index_cast %28 : i32 to index
      %c0_31 = arith.constant 0 : index
      %33 = vector.load %arg12[%32, %c0_31] : memref<64x512xf32, #tpu.memory_space<vmem>>, vector<8x512xf32>
      %34 = arith.addf %31, %33 : vector<8x512xf32>
      %35 = vector.broadcast %arg14 : i32 to vector<8x1xi32>
      %36 = arith.cmpi slt, %35, %1 : vector<8x1xi32>
      %37 = vector.extract_strided_slice %34 {offsets = [0, 0], sizes = [8, 128], strides = [1, 1]} : vector<8x512xf32> to vector<8x128xf32>
      %38 = arith.negf %37 : vector<8x128xf32>
      %39 = math.exp %38 : vector<8x128xf32>
      %cst_32 = arith.constant 1.000000e+00 : f32
      %40 = vector.broadcast %cst_32 : f32 to vector<8x128xf32>
      %41 = arith.addf %40, %39 : vector<8x128xf32>
      %42 = arith.divf %40, %41 : vector<8x128xf32>
      %43 = vector.extract_strided_slice %34 {offsets = [0, 128], sizes = [8, 128], strides = [1, 1]} : vector<8x512xf32> to vector<8x128xf32>
      %44 = arith.negf %43 : vector<8x128xf32>
      %45 = math.exp %44 : vector<8x128xf32>
      %cst_33 = arith.constant 1.000000e+00 : f32
      %46 = vector.broadcast %cst_33 : f32 to vector<8x128xf32>
      %47 = arith.addf %46, %45 : vector<8x128xf32>
      %48 = arith.divf %46, %47 : vector<8x128xf32>
      %49 = vector.extract_strided_slice %34 {offsets = [0, 256], sizes = [8, 128], strides = [1, 1]} : vector<8x512xf32> to vector<8x128xf32>
      %50 = math.tanh %49 : vector<8x128xf32>
      %51 = vector.extract_strided_slice %34 {offsets = [0, 384], sizes = [8, 128], strides = [1, 1]} : vector<8x512xf32> to vector<8x128xf32>
      %52 = arith.negf %51 : vector<8x128xf32>
      %53 = math.exp %52 : vector<8x128xf32>
      %cst_34 = arith.constant 1.000000e+00 : f32
      %54 = vector.broadcast %cst_34 : f32 to vector<8x128xf32>
      %55 = arith.addf %54, %53 : vector<8x128xf32>
      %56 = arith.divf %54, %55 : vector<8x128xf32>
      %57 = arith.mulf %48, %arg16 : vector<8x128xf32>
      %58 = arith.mulf %42, %50 : vector<8x128xf32>
      %59 = arith.addf %57, %58 : vector<8x128xf32>
      %60 = math.tanh %59 : vector<8x128xf32>
      %61 = arith.mulf %56, %60 : vector<8x128xf32>
      %62 = vector.shape_cast %36 : vector<8x1xi1> to vector<8x1xi1>
      %63 = vector.broadcast %62 : vector<8x1xi1> to vector<8x128xi1>
      %64 = arith.select %63, %61, %arg15 : vector<8x128xi1>, vector<8x128xf32>
      %65 = vector.shape_cast %36 : vector<8x1xi1> to vector<8x1xi1>
      %66 = vector.broadcast %65 : vector<8x1xi1> to vector<8x128xi1>
      %67 = arith.select %66, %59, %arg16 : vector<8x128xi1>, vector<8x128xf32>
      %cst_35 = arith.constant 0.000000e+00 : f32
      %68 = vector.broadcast %cst_35 : f32 to vector<8x128xf32>
      %69 = vector.shape_cast %36 : vector<8x1xi1> to vector<8x1xi1>
      %70 = vector.broadcast %69 : vector<8x1xi1> to vector<8x128xi1>
      %71 = arith.select %70, %61, %68 : vector<8x128xi1>, vector<8x128xf32>
      %72 = arith.index_cast %arg14 : i32 to index
      %c0_36 = arith.constant 0 : index
      %c0_37 = arith.constant 0 : index
      %73 = vector.load %arg9[%72, %c0_36, %c0_37] : memref<8x8x256xf32, #tpu.memory_space<vmem>>, vector<1x8x128xf32>
      %74 = vector.shape_cast %73 : vector<1x8x128xf32> to vector<8x128xf32>
      %75 = vector.shape_cast %71 : vector<8x128xf32> to vector<1x8x128xf32>
      tpu.vector_store %arg9[%72, %c0_36, %c0_37], %75 {strides = array<i32>} : memref<8x8x256xf32, #tpu.memory_space<vmem>>, vector<1x8x128xf32>,
      %c8_i32_38 = arith.constant 8 : i32
      %76 = arith.muli %26, %c8_i32_38 : i32
      %77 = tpu.assume_multiple %76, 8 : i32
      %78 = arith.truncf %arg17 : vector<8x128xf32> to vector<8x128xbf16>
      %c0_39 = arith.constant 0 : index
      %c0_40 = arith.constant 0 : index
      %79 = vector.load %arg7[%c0_39, %c0_40] : memref<128x512xbf16, #tpu.memory_space<vmem>>, vector<128x512xbf16>
      %cst_41 = arith.constant dense<0.000000e+00> : vector<8x512xf32>
      %80 = tpu.matmul %78, %79, %cst_41 {dimension_numbers = #tpu.dot_dimension_numbers<[1], [0], [0], [1], [0, 0, 1, 1], [], []>} : vector<8x128xbf16>, vector<128x512xbf16>, vector<8x512xf32> -> vector<8x512xf32>
      %81 = arith.index_cast %77 : i32 to index
      %c0_42 = arith.constant 0 : index
      %82 = vector.load %arg13[%81, %c0_42] : memref<64x512xf32, #tpu.memory_space<vmem>>, vector<8x512xf32>
      %83 = arith.addf %80, %82 : vector<8x512xf32>
      %84 = vector.broadcast %26 : i32 to vector<8x1xi32>
      %85 = arith.cmpi slt, %84, %1 : vector<8x1xi32>
      %86 = vector.extract_strided_slice %83 {offsets = [0, 0], sizes = [8, 128], strides = [1, 1]} : vector<8x512xf32> to vector<8x128xf32>
      %87 = arith.negf %86 : vector<8x128xf32>
      %88 = math.exp %87 : vector<8x128xf32>
      %cst_43 = arith.constant 1.000000e+00 : f32
      %89 = vector.broadcast %cst_43 : f32 to vector<8x128xf32>
      %90 = arith.addf %89, %88 : vector<8x128xf32>
      %91 = arith.divf %89, %90 : vector<8x128xf32>
      %92 = vector.extract_strided_slice %83 {offsets = [0, 128], sizes = [8, 128], strides = [1, 1]} : vector<8x512xf32> to vector<8x128xf32>
      %93 = arith.negf %92 : vector<8x128xf32>
      %94 = math.exp %93 : vector<8x128xf32>
      %cst_44 = arith.constant 1.000000e+00 : f32
      %95 = vector.broadcast %cst_44 : f32 to vector<8x128xf32>
      %96 = arith.addf %95, %94 : vector<8x128xf32>
      %97 = arith.divf %95, %96 : vector<8x128xf32>
      %98 = vector.extract_strided_slice %83 {offsets = [0, 256], sizes = [8, 128], strides = [1, 1]} : vector<8x512xf32> to vector<8x128xf32>
      %99 = math.tanh %98 : vector<8x128xf32>
      %100 = vector.extract_strided_slice %83 {offsets = [0, 384], sizes = [8, 128], strides = [1, 1]} : vector<8x512xf32> to vector<8x128xf32>
      %101 = arith.negf %100 : vector<8x128xf32>
      %102 = math.exp %101 : vector<8x128xf32>
      %cst_45 = arith.constant 1.000000e+00 : f32
      %103 = vector.broadcast %cst_45 : f32 to vector<8x128xf32>
      %104 = arith.addf %103, %102 : vector<8x128xf32>
      %105 = arith.divf %103, %104 : vector<8x128xf32>
      %106 = arith.mulf %97, %arg18 : vector<8x128xf32>
      %107 = arith.mulf %91, %99 : vector<8x128xf32>
      %108 = arith.addf %106, %107 : vector<8x128xf32>
      %109 = math.tanh %108 : vector<8x128xf32>
      %110 = arith.mulf %105, %109 : vector<8x128xf32>
      %111 = vector.shape_cast %85 : vector<8x1xi1> to vector<8x1xi1>
      %112 = vector.broadcast %111 : vector<8x1xi1> to vector<8x128xi1>
      %113 = arith.select %112, %110, %arg17 : vector<8x128xi1>, vector<8x128xf32>
      %114 = vector.shape_cast %85 : vector<8x1xi1> to vector<8x1xi1>
      %115 = vector.broadcast %114 : vector<8x1xi1> to vector<8x128xi1>
      %116 = arith.select %115, %108, %arg18 : vector<8x128xi1>, vector<8x128xf32>
      %cst_46 = arith.constant 0.000000e+00 : f32
      %117 = vector.broadcast %cst_46 : f32 to vector<8x128xf32>
      %118 = vector.shape_cast %85 : vector<8x1xi1> to vector<8x1xi1>
      %119 = vector.broadcast %118 : vector<8x1xi1> to vector<8x128xi1>
      %120 = arith.select %119, %110, %117 : vector<8x128xi1>, vector<8x128xf32>
      %121 = arith.index_cast %26 : i32 to index
      %c0_47 = arith.constant 0 : index
      %c128 = arith.constant 128 : index
      %122 = vector.load %arg9[%121, %c0_47, %c128] : memref<8x8x256xf32, #tpu.memory_space<vmem>>, vector<1x8x128xf32>
      %123 = vector.shape_cast %122 : vector<1x8x128xf32> to vector<8x128xf32>
      %124 = vector.shape_cast %120 : vector<8x128xf32> to vector<1x8x128xf32>
      tpu.vector_store %arg9[%121, %c0_47, %c128], %124 {strides = array<i32>} : memref<8x8x256xf32, #tpu.memory_space<vmem>>, vector<1x8x128xf32>,
      scf.yield %64, %67, %113, %116 : vector<8x128xf32>, vector<8x128xf32>, vector<8x128xf32>, vector<8x128xf32>
    }
    %c0_23 = arith.constant 0 : index
    %c0_24 = arith.constant 0 : index
    %23 = vector.load %arg10[%c0_23, %c0_24] : memref<8x128xf32, #tpu.memory_space<vmem>>, vector<8x128xf32>
    tpu.vector_store %arg10[%c0_23, %c0_24], %22#0 {strides = array<i32>} : memref<8x128xf32, #tpu.memory_space<vmem>>, vector<8x128xf32>,
    %c0_25 = arith.constant 0 : index
    %c0_26 = arith.constant 0 : index
    %24 = vector.load %arg11[%c0_25, %c0_26] : memref<8x128xf32, #tpu.memory_space<vmem>>, vector<8x128xf32>
    tpu.vector_store %arg11[%c0_25, %c0_26], %22#2 {strides = array<i32>} : memref<8x128xf32, #tpu.memory_space<vmem>>, vector<8x128xf32>,
    return
  }
}

module attributes {stable_mosaic.version = 11 : i64} {
  func.func @_bilstm_layer_kernel(%arg0: memref<1xi32, #tpu.memory_space<smem>>, %arg1: memref<8x1xi32, #tpu.memory_space<vmem>>, %arg2: memref<8x8x256xf32, #tpu.memory_space<vmem>>, %arg3: memref<256x512xbf16, #tpu.memory_space<vmem>>, %arg4: memref<128x512xbf16, #tpu.memory_space<vmem>>, %arg5: memref<1x512xf32, #tpu.memory_space<vmem>>, %arg6: memref<256x512xbf16, #tpu.memory_space<vmem>>, %arg7: memref<128x512xbf16, #tpu.memory_space<vmem>>, %arg8: memref<1x512xf32, #tpu.memory_space<vmem>>, %arg9: memref<8x8x256xf32, #tpu.memory_space<vmem>>, %arg10: memref<8x128xf32, #tpu.memory_space<vmem>>, %arg11: memref<8x128xf32, #tpu.memory_space<vmem>>, %arg12: memref<64x512xf32, #tpu.memory_space<vmem>>, %arg13: memref<64x512xf32, #tpu.memory_space<vmem>>) attributes {dimension_semantics = [], scalar_prefetch = 0 : i64, scratch_operands = 2 : i64, tpu.core_type = #tpu.core_type<tc>} {
    %c0 = arith.constant 0 : index
    %0 = memref.load %arg0[%c0] : memref<1xi32, #tpu.memory_space<smem>>
    %c0_0 = arith.constant 0 : index
    %c0_1 = arith.constant 0 : index
    %1 = vector.load %arg1[%c0_0, %c0_1] : memref<8x1xi32, #tpu.memory_space<vmem>>, vector<8x1xi32>
    %c0_2 = arith.constant 0 : index
    %c0_3 = arith.constant 0 : index
    %c0_4 = arith.constant 0 : index
    %2 = vector.load %arg2[%c0_2, %c0_3, %c0_4] : memref<8x8x256xf32, #tpu.memory_space<vmem>>, vector<8x8x256xf32>
    %3 = vector.shape_cast %2 : vector<8x8x256xf32> to vector<64x256xf32>
    %4 = arith.truncf %3 : vector<64x256xf32> to vector<64x256xbf16>
    %c0_5 = arith.constant 0 : index
    %c0_6 = arith.constant 0 : index
    %5 = vector.load %arg3[%c0_5, %c0_6] : memref<256x512xbf16, #tpu.memory_space<vmem>>, vector<256x512xbf16>
    %cst = arith.constant dense<0.000000e+00> : vector<64x512xf32>
    %6 = tpu.matmul %4, %5, %cst {dimension_numbers = #tpu.dot_dimension_numbers<[1], [0], [0], [1], [0, 0, 1, 1], [], []>} : vector<64x256xbf16>, vector<256x512xbf16>, vector<64x512xf32> -> vector<64x512xf32>
    %c0_7 = arith.constant 0 : index
    %c0_8 = arith.constant 0 : index
    %7 = vector.load %arg5[%c0_7, %c0_8] : memref<1x512xf32, #tpu.memory_space<vmem>>, vector<1x512xf32>
    %8 = vector.broadcast %7 : vector<1x512xf32> to vector<64x512xf32>
    %9 = arith.addf %6, %8 : vector<64x512xf32>
    %c0_9 = arith.constant 0 : index
    %c0_10 = arith.constant 0 : index
    %10 = vector.load %arg12[%c0_9, %c0_10] : memref<64x512xf32, #tpu.memory_space<vmem>>, vector<64x512xf32>
    tpu.vector_store %arg12[%c0_9, %c0_10], %9 {strides = array<i32>} : memref<64x512xf32, #tpu.memory_space<vmem>>, vector<64x512xf32>,
    %c0_11 = arith.constant 0 : index
    %c0_12 = arith.constant 0 : index
    %11 = vector.load %arg6[%c0_11, %c0_12] : memref<256x512xbf16, #tpu.memory_space<vmem>>, vector<256x512xbf16>
    %cst_13 = arith.constant dense<0.000000e+00> : vector<64x512xf32>
    %12 = tpu.matmul %4, %11, %cst_13 {dimension_numbers = #tpu.dot_dimension_numbers<[1], [0], [0], [1], [0, 0, 1, 1], [], []>} : vector<64x256xbf16>, vector<256x512xbf16>, vector<64x512xf32> -> vector<64x512xf32>
    %c0_14 = arith.constant 0 : index
    %c0_15 = arith.constant 0 : index
    %13 = vector.load %arg8[%c0_14, %c0_15] : memref<1x512xf32, #tpu.memory_space<vmem>>, vector<1x512xf32>
    %14 = vector.broadcast %13 : vector<1x512xf32> to vector<64x512xf32>
    %15 = arith.addf %12, %14 : vector<64x512xf32>
    %c0_16 = arith.constant 0 : index
    %c0_17 = arith.constant 0 : index
    %16 = vector.load %arg13[%c0_16, %c0_17] : memref<64x512xf32, #tpu.memory_space<vmem>>, vector<64x512xf32>
    tpu.vector_store %arg13[%c0_16, %c0_17], %15 {strides = array<i32>} : memref<64x512xf32, #tpu.memory_space<vmem>>, vector<64x512xf32>,
    %cst_18 = arith.constant 0.000000e+00 : f32
    %17 = vector.broadcast %cst_18 : f32 to vector<8x8x256xf32>
    %c0_19 = arith.constant 0 : index
    %c0_20 = arith.constant 0 : index
    %c0_21 = arith.constant 0 : index
    %18 = vector.load %arg9[%c0_19, %c0_20, %c0_21] : memref<8x8x256xf32, #tpu.memory_space<vmem>>, vector<8x8x256xf32>
    tpu.vector_store %arg9[%c0_19, %c0_20, %c0_21], %17 {strides = array<i32>} : memref<8x8x256xf32, #tpu.memory_space<vmem>>, vector<8x8x256xf32>,
    %cst_22 = arith.constant 0.000000e+00 : f32
    %19 = vector.broadcast %cst_22 : f32 to vector<8x128xf32>
    %c0_i32 = arith.constant 0 : i32
    %20 = arith.subi %0, %c0_i32 : i32
    %21 = arith.addi %c0_i32, %20 : i32
    %c1_i32 = arith.constant 1 : i32
    %22:4 = scf.for %arg14 = %c0_i32 to %21 step %c1_i32 iter_args(%arg15 = %19, %arg16 = %19, %arg17 = %19, %arg18 = %19) -> (vector<8x128xf32>, vector<8x128xf32>, vector<8x128xf32>, vector<8x128xf32>)  : i32 {
      %c1_i32_27 = arith.constant 1 : i32
      %25 = arith.subi %0, %c1_i32_27 : i32
      %26 = arith.subi %25, %arg14 : i32
      %c8_i32 = arith.constant 8 : i32
      %27 = arith.muli %arg14, %c8_i32 : i32
      %28 = tpu.assume_multiple %27, 8 : i32
      %29 = arith.truncf %arg15 : vector<8x128xf32> to vector<8x128xbf16>
      %c0_28 = arith.constant 0 : index
      %c0_29 = arith.constant 0 : index
      %30 = vector.load %arg4[%c0_28, %c0_29] : memref<128x512xbf16, #tpu.memory_space<vmem>>, vector<128x512xbf16>
      %cst_30 = arith.constant dense<0.000000e+00> : vector<8x512xf32>
      %31 = tpu.matmul %29, %30, %cst_30 {dimension_numbers = #tpu.dot_dimension_numbers<[1], [0], [0], [1], [0, 0, 1, 1], [], []>} : vector<8x128xbf16>, vector<128x512xbf16>, vector<8x512xf32> -> vector<8x512xf32>
      %32 = arith.index_cast %28 : i32 to index
      %c0_31 = arith.constant 0 : index
      %33 = vector.load %arg12[%32, %c0_31] : memref<64x512xf32, #tpu.memory_space<vmem>>, vector<8x512xf32>
      %34 = arith.addf %31, %33 : vector<8x512xf32>
      %35 = vector.broadcast %arg14 : i32 to vector<8x1xi32>
      %36 = arith.cmpi slt, %35, %1 : vector<8x1xi32>
      %37 = vector.extract_strided_slice %34 {offsets = [0, 0], sizes = [8, 128], strides = [1, 1]} : vector<8x512xf32> to vector<8x128xf32>
      %38 = arith.negf %37 : vector<8x128xf32>
      %39 = math.exp %38 : vector<8x128xf32>
      %cst_32 = arith.constant 1.000000e+00 : f32
      %40 = vector.broadcast %cst_32 : f32 to vector<8x128xf32>
      %41 = arith.addf %40, %39 : vector<8x128xf32>
      %42 = arith.divf %40, %41 : vector<8x128xf32>
      %43 = vector.extract_strided_slice %34 {offsets = [0, 128], sizes = [8, 128], strides = [1, 1]} : vector<8x512xf32> to vector<8x128xf32>
      %44 = arith.negf %43 : vector<8x128xf32>
      %45 = math.exp %44 : vector<8x128xf32>
      %cst_33 = arith.constant 1.000000e+00 : f32
      %46 = vector.broadcast %cst_33 : f32 to vector<8x128xf32>
      %47 = arith.addf %46, %45 : vector<8x128xf32>
      %48 = arith.divf %46, %47 : vector<8x128xf32>
      %49 = vector.extract_strided_slice %34 {offsets = [0, 256], sizes = [8, 128], strides = [1, 1]} : vector<8x512xf32> to vector<8x128xf32>
      %50 = math.tanh %49 : vector<8x128xf32>
      %51 = vector.extract_strided_slice %34 {offsets = [0, 384], sizes = [8, 128], strides = [1, 1]} : vector<8x512xf32> to vector<8x128xf32>
      %52 = arith.negf %51 : vector<8x128xf32>
      %53 = math.exp %52 : vector<8x128xf32>
      %cst_34 = arith.constant 1.000000e+00 : f32
      %54 = vector.broadcast %cst_34 : f32 to vector<8x128xf32>
      %55 = arith.addf %54, %53 : vector<8x128xf32>
      %56 = arith.divf %54, %55 : vector<8x128xf32>
      %57 = arith.mulf %48, %arg16 : vector<8x128xf32>
      %58 = arith.mulf %42, %50 : vector<8x128xf32>
      %59 = arith.addf %57, %58 : vector<8x128xf32>
      %60 = math.tanh %59 : vector<8x128xf32>
      %61 = arith.mulf %56, %60 : vector<8x128xf32>
      %62 = vector.shape_cast %36 : vector<8x1xi1> to vector<8x1xi1>
      %63 = vector.broadcast %62 : vector<8x1xi1> to vector<8x128xi1>
      %64 = arith.select %63, %61, %arg15 : vector<8x128xi1>, vector<8x128xf32>
      %65 = vector.shape_cast %36 : vector<8x1xi1> to vector<8x1xi1>
      %66 = vector.broadcast %65 : vector<8x1xi1> to vector<8x128xi1>
      %67 = arith.select %66, %59, %arg16 : vector<8x128xi1>, vector<8x128xf32>
      %cst_35 = arith.constant 0.000000e+00 : f32
      %68 = vector.broadcast %cst_35 : f32 to vector<8x128xf32>
      %69 = vector.shape_cast %36 : vector<8x1xi1> to vector<8x1xi1>
      %70 = vector.broadcast %69 : vector<8x1xi1> to vector<8x128xi1>
      %71 = arith.select %70, %61, %68 : vector<8x128xi1>, vector<8x128xf32>
      %72 = arith.index_cast %arg14 : i32 to index
      %c0_36 = arith.constant 0 : index
      %c0_37 = arith.constant 0 : index
      %73 = vector.load %arg9[%72, %c0_36, %c0_37] : memref<8x8x256xf32, #tpu.memory_space<vmem>>, vector<1x8x128xf32>
      %74 = vector.shape_cast %73 : vector<1x8x128xf32> to vector<8x128xf32>
      %75 = vector.shape_cast %71 : vector<8x128xf32> to vector<1x8x128xf32>
      tpu.vector_store %arg9[%72, %c0_36, %c0_37], %75 {strides = array<i32>} : memref<8x8x256xf32, #tpu.memory_space<vmem>>, vector<1x8x128xf32>,
      %c8_i32_38 = arith.constant 8 : i32
      %76 = arith.muli %26, %c8_i32_38 : i32
      %77 = tpu.assume_multiple %76, 8 : i32
      %78 = arith.truncf %arg17 : vector<8x128xf32> to vector<8x128xbf16>
      %c0_39 = arith.constant 0 : index
      %c0_40 = arith.constant 0 : index
      %79 = vector.load %arg7[%c0_39, %c0_40] : memref<128x512xbf16, #tpu.memory_space<vmem>>, vector<128x512xbf16>
      %cst_41 = arith.constant dense<0.000000e+00> : vector<8x512xf32>
      %80 = tpu.matmul %78, %79, %cst_41 {dimension_numbers = #tpu.dot_dimension_numbers<[1], [0], [0], [1], [0, 0, 1, 1], [], []>} : vector<8x128xbf16>, vector<128x512xbf16>, vector<8x512xf32> -> vector<8x512xf32>
      %81 = arith.index_cast %77 : i32 to index
      %c0_42 = arith.constant 0 : index
      %82 = vector.load %arg13[%81, %c0_42] : memref<64x512xf32, #tpu.memory_space<vmem>>, vector<8x512xf32>
      %83 = arith.addf %80, %82 : vector<8x512xf32>
      %84 = vector.broadcast %26 : i32 to vector<8x1xi32>
      %85 = arith.cmpi slt, %84, %1 : vector<8x1xi32>
      %86 = vector.extract_strided_slice %83 {offsets = [0, 0], sizes = [8, 128], strides = [1, 1]} : vector<8x512xf32> to vector<8x128xf32>
      %87 = arith.negf %86 : vector<8x128xf32>
      %88 = math.exp %87 : vector<8x128xf32>
      %cst_43 = arith.constant 1.000000e+00 : f32
      %89 = vector.broadcast %cst_43 : f32 to vector<8x128xf32>
      %90 = arith.addf %89, %88 : vector<8x128xf32>
      %91 = arith.divf %89, %90 : vector<8x128xf32>
      %92 = vector.extract_strided_slice %83 {offsets = [0, 128], sizes = [8, 128], strides = [1, 1]} : vector<8x512xf32> to vector<8x128xf32>
      %93 = arith.negf %92 : vector<8x128xf32>
      %94 = math.exp %93 : vector<8x128xf32>
      %cst_44 = arith.constant 1.000000e+00 : f32
      %95 = vector.broadcast %cst_44 : f32 to vector<8x128xf32>
      %96 = arith.addf %95, %94 : vector<8x128xf32>
      %97 = arith.divf %95, %96 : vector<8x128xf32>
      %98 = vector.extract_strided_slice %83 {offsets = [0, 256], sizes = [8, 128], strides = [1, 1]} : vector<8x512xf32> to vector<8x128xf32>
      %99 = math.tanh %98 : vector<8x128xf32>
      %100 = vector.extract_strided_slice %83 {offsets = [0, 384], sizes = [8, 128], strides = [1, 1]} : vector<8x512xf32> to vector<8x128xf32>
      %101 = arith.negf %100 : vector<8x128xf32>
      %102 = math.exp %101 : vector<8x128xf32>
      %cst_45 = arith.constant 1.000000e+00 : f32
      %103 = vector.broadcast %cst_45 : f32 to vector<8x128xf32>
      %104 = arith.addf %103, %102 : vector<8x128xf32>
      %105 = arith.divf %103, %104 : vector<8x128xf32>
      %106 = arith.mulf %97, %arg18 : vector<8x128xf32>
      %107 = arith.mulf %91, %99 : vector<8x128xf32>
      %108 = arith.addf %106, %107 : vector<8x128xf32>
      %109 = math.tanh %108 : vector<8x128xf32>
      %110 = arith.mulf %105, %109 : vector<8x128xf32>
      %111 = vector.shape_cast %85 : vector<8x1xi1> to vector<8x1xi1>
      %112 = vector.broadcast %111 : vector<8x1xi1> to vector<8x128xi1>
      %113 = arith.select %112, %110, %arg17 : vector<8x128xi1>, vector<8x128xf32>
      %114 = vector.shape_cast %85 : vector<8x1xi1> to vector<8x1xi1>
      %115 = vector.broadcast %114 : vector<8x1xi1> to vector<8x128xi1>
      %116 = arith.select %115, %108, %arg18 : vector<8x128xi1>, vector<8x128xf32>
      %cst_46 = arith.constant 0.000000e+00 : f32
      %117 = vector.broadcast %cst_46 : f32 to vector<8x128xf32>
      %118 = vector.shape_cast %85 : vector<8x1xi1> to vector<8x1xi1>
      %119 = vector.broadcast %118 : vector<8x1xi1> to vector<8x128xi1>
      %120 = arith.select %119, %110, %117 : vector<8x128xi1>, vector<8x128xf32>
      %121 = arith.index_cast %26 : i32 to index
      %c0_47 = arith.constant 0 : index
      %c128 = arith.constant 128 : index
      %122 = vector.load %arg9[%121, %c0_47, %c128] : memref<8x8x256xf32, #tpu.memory_space<vmem>>, vector<1x8x128xf32>
      %123 = vector.shape_cast %122 : vector<1x8x128xf32> to vector<8x128xf32>
      %124 = vector.shape_cast %120 : vector<8x128xf32> to vector<1x8x128xf32>
      tpu.vector_store %arg9[%121, %c0_47, %c128], %124 {strides = array<i32>} : memref<8x8x256xf32, #tpu.memory_space<vmem>>, vector<1x8x128xf32>,
      scf.yield %64, %67, %113, %116 : vector<8x128xf32>, vector<8x128xf32>, vector<8x128xf32>, vector<8x128xf32>
    }
    %c0_23 = arith.constant 0 : index
    %c0_24 = arith.constant 0 : index
    %23 = vector.load %arg10[%c0_23, %c0_24] : memref<8x128xf32, #tpu.memory_space<vmem>>, vector<8x128xf32>
    tpu.vector_store %arg10[%c0_23, %c0_24], %22#0 {strides = array<i32>} : memref<8x128xf32, #tpu.memory_space<vmem>>, vector<8x128xf32>,
    %c0_25 = arith.constant 0 : index
    %c0_26 = arith.constant 0 : index
    %24 = vector.load %arg11[%c0_25, %c0_26] : memref<8x128xf32, #tpu.memory_space<vmem>>, vector<8x128xf32>
    tpu.vector_store %arg11[%c0_25, %c0_26], %22#2 {strides = array<i32>} : memref<8x128xf32, #tpu.memory_space<vmem>>, vector<8x128xf32>,
    return
  }
}

</mosaic_0001>

<llo_original>
// kernel: model_forward.2
$region0: #{model_forward.2}
  #allocation0 [shape = 'u32[]', space=smem, size = 0x4, offset = 0x4, fixed_abs, tag = 'smem constant byte address 0x4 - core index']
  #allocation1 [shape = 'u32[144,128]{1,0:T(1,128)}', space=vmem, size = 0x12000, scoped, tag = 'internal scratch']
  #allocation2 [shape = 'f32[64,512]{1,0:T(8,128)}', space=vmem, size = 0x20000, scoped, tag = 'scratch operand']
  #allocation3 [shape = 'f32[64,512]{1,0:T(8,128)}', space=vmem, size = 0x20000, scoped, tag = 'scratch operand']
  #allocation4 [shape = 's32[1]{0:T(128)S(6)}', space=smem, size = 0x200, scoped, tag = 'scoped memory for model_forward.2']
  %s0 = inlined_call_operand.<no memory space> [shape: s32[1], index: 0, kind: input, shape index: {}]
  %s1 = inlined_call_operand.vmem [shape: s32[8,1], index: 1, kind: input, shape index: {}]
  %s2 = inlined_call_operand.vmem [shape: f32[8,8,128], index: 2, kind: input, shape index: {}]
  %s3 = inlined_call_operand.vmem [shape: bf16[128,512], index: 3, kind: input, shape index: {}]
  %s4 = inlined_call_operand.hbm [shape: bf16[128,512], index: 4, kind: input, shape index: {}]
  %s5 = inlined_call_operand.vmem [shape: f32[1,512], index: 5, kind: input, shape index: {}]
  %s6 = inlined_call_operand.hbm [shape: bf16[128,512], index: 6, kind: input, shape index: {}]
  %s7 = inlined_call_operand.hbm [shape: bf16[128,512], index: 7, kind: input, shape index: {}]
  %s8 = inlined_call_operand.vmem [shape: f32[1,512], index: 8, kind: input, shape index: {}]
  %s9 = inlined_call_operand.vmem [shape: f32[8,8,256], index: 9, kind: output, shape index: {0}]
  %s10 = inlined_call_operand.hbm [shape: f32[8,128], index: 10, kind: output, shape index: {1}]
  %s11 = inlined_call_operand.hbm [shape: f32[8,128], index: 11, kind: output, shape index: {2}]
  %12 = xla_tuple %s9, %s10, %s11
  %s13 = sld [smem:[#allocation0]]
  $region81: #{model_forward.2} parent=0
    _
  %s15 = ssub.s32 1, %s13
  %s16 = scalar_select 0, %s15, %s13
  %17 = sst [smem:[#allocation4]] %s0
  $region1: #{model_forward.2} parent=0
    #allocation5 [shape = 'u8[131072]{0}', space=vmem, size = 0x20000, scoped, tag = 'input window, operand 4, single buffered']
    #allocation6 [shape = 's32[1]{0}', space=sflag, size = 0x4, scoped, tag = 'scoped memory for model_forward.2']
    #allocation7 [shape = 's32[1]{0}', space=sflag, size = 0x4, scoped, tag = 'scoped memory for model_forward.2']
    #allocation8 [shape = 'u8[131072]{0}', space=vmem, size = 0x20000, scoped, tag = 'input window, operand 6, single buffered']
    #allocation9 [shape = 's32[1]{0}', space=sflag, size = 0x4, scoped, tag = 'scoped memory for model_forward.2']
    #allocation10 [shape = 'u8[131072]{0}', space=vmem, size = 0x20000, scoped, tag = 'input window, operand 7, single buffered']
    #allocation11 [shape = 'u8[4096]{0}', space=vmem, size = 0x1000, scoped, tag = 'output window, operand 1, single buffered']
    #allocation12 [shape = 'u8[4096]{0}', space=vmem, size = 0x1000, scoped, tag = 'output window, operand 2, single buffered']
    #allocation13 [shape = 's32[1]{0}', space=sflag, size = 0x4, scoped, tag = 'scoped memory for model_forward.2']
    %18 = vsyncpa [#allocation6], 0
    %19 = vsyncpa [#allocation9], 0
    %20 = vsyncpa [#allocation7], 0
    %21 = vsyncpa [#allocation13], 0
    // Predicated region
    $region2: #{model_forward.2} parent=1 // pred_check
      _
    $region3: #{model_forward.2} parent=1 // pred_check_branch
      %23 = sbr.rel (0) target = $region5
    $region4: #{model_forward.2} parent=1 // pred_region
      _
    $region5: #{model_forward.2} parent=1 // pred_fallthru
      _
    // Predicated region
    $region6: #{model_forward.2} parent=1 // pred_check
      _
    $region7: #{model_forward.2} parent=1 // pred_check_branch
      %25 = sbr.rel (0) target = $region9
    $region8: #{model_forward.2} parent=1 // pred_region
      _
    $region9: #{model_forward.2} parent=1 // pred_fallthru
      _
    // Predicated region
    $region10: #{model_forward.2} parent=1 // pred_check
      _
    $region11: #{model_forward.2} parent=1 // pred_check_branch
      %27 = sbr.rel (0) target = $region13
    $region12: #{model_forward.2} parent=1 // pred_region
      _
    $region13: #{model_forward.2} parent=1 // pred_fallthru
      _
    // Predicated region
    $region14: #{model_forward.2} parent=1 // pred_check
      _
    $region15: #{model_forward.2} parent=1 // pred_check_branch
      %29 = sbr.rel (0) target = $region17
    $region16: #{model_forward.2} parent=1 // pred_region
      _
    $region17: #{model_forward.2} parent=1 // pred_fallthru
      _
    // Predicated region
    $region18: #{model_forward.2} parent=1 // pred_check
      _
    $region19: #{model_forward.2} parent=1 // pred_check_branch
      %31 = sbr.rel (0) target = $region21
    $region20: #{model_forward.2} parent=1 // pred_region
      %s33 = ssub.s32 4096, 4096
      %34 = vsyncadd [#allocation6], %s33
      %s35 = sshll.u32 [#allocation5], 4
      %s36 = int_to_ptr.vmem [resolvable:$true] %s35
      %41 = dma.hbm_to_vmem [thread:$0]  %s4, 4096, %s36, [#allocation6], 256, 256, 16
    $region21: #{model_forward.2} parent=1 // pred_fallthru
      _
    // Predicated region
    $region22: #{model_forward.2} parent=1 // pred_check
      _
    $region23: #{model_forward.2} parent=1 // pred_check_branch
      %43 = sbr.rel (0) target = $region25
    $region24: #{model_forward.2} parent=1 // pred_region
      _
    $region25: #{model_forward.2} parent=1 // pred_fallthru
      _
    // Predicated region
    $region26: #{model_forward.2} parent=1 // pred_check
      _
    $region27: #{model_forward.2} parent=1 // pred_check_branch
      %45 = sbr.rel (0) target = $region29
    $region28: #{model_forward.2} parent=1 // pred_region
      %s47 = ssub.s32 4096, 4096
      %48 = vsyncadd [#allocation9], %s47
      %s49 = sshll.u32 [#allocation8], 4
      %s50 = int_to_ptr.vmem [resolvable:$true] %s49
      %55 = dma.hbm_to_vmem [thread:$0]  %s6, 4096, %s50, [#allocation9], 256, 256, 16
    $region29: #{model_forward.2} parent=1 // pred_fallthru
      _
    // Predicated region
    $region30: #{model_forward.2} parent=1 // pred_check
      _
    $region31: #{model_forward.2} parent=1 // pred_check_branch
      %57 = sbr.rel (0) target = $region33
    $region32: #{model_forward.2} parent=1 // pred_region
      %s59 = ssub.s32 4096, 4096
      %60 = vsyncadd [#allocation9], %s59
      %s61 = sshll.u32 [#allocation10], 4
      %s62 = int_to_ptr.vmem [resolvable:$true] %s61
      %67 = dma.hbm_to_vmem [thread:$0]  %s7, 4096, %s62, [#allocation9], 256, 256, 16
    $region33: #{model_forward.2} parent=1 // pred_fallthru
      _
    // Predicated region
    $region34: #{model_forward.2} parent=1 // pred_check
      _
    $region35: #{model_forward.2} parent=1 // pred_check_branch
      %69 = sbr.rel (0) target = $region37
    $region36: #{model_forward.2} parent=1 // pred_region
      _
    $region37: #{model_forward.2} parent=1 // pred_fallthru
      _
    // Predicated region
    $region38: #{model_forward.2} parent=1 // pred_check
      _
    $region39: #{model_forward.2} parent=1 // pred_check_branch
      %71 = sbr.rel (0) target = $region41
    $region40: #{model_forward.2} parent=1 // pred_region
      %72 = dma.done [#allocation6], 4096
    $region41: #{model_forward.2} parent=1 // pred_fallthru
      _
    // Predicated region
    $region42: #{model_forward.2} parent=1 // pred_check
      _
    $region43: #{model_forward.2} parent=1 // pred_check_branch
      %74 = sbr.rel (0) target = $region45
    $region44: #{model_forward.2} parent=1 // pred_region
      %75 = dma.done [#allocation9], 4096
    $region45: #{model_forward.2} parent=1 // pred_fallthru
      _
    // Predicated region
    $region46: #{model_forward.2} parent=1 // pred_check
      _
    $region47: #{model_forward.2} parent=1 // pred_check_branch
      %77 = sbr.rel (0) target = $region49
    $region48: #{model_forward.2} parent=1 // pred_region
      %78 = dma.done [#allocation9], 4096
    $region49: #{model_forward.2} parent=1 // pred_fallthru
      _
    %s80 = sld [smem:[#allocation4]]
    %v81 = vld [vmem:[%s1] sm:$0xff]
    %v82 = vld [vmem:[%s2] sm:$0xff]
    %v83 = vld [vmem:[%s2 + $0x8] sm:$0xff]
    %v84 = vld [vmem:[%s2 + $0x10] sm:$0xff]
    %v85 = vld [vmem:[%s2 + $0x18] sm:$0xff]
    %v86 = vld [vmem:[%s2 + $0x20] sm:$0xff]
    %v87 = vld [vmem:[%s2 + $0x28] sm:$0xff]
    %v88 = vld [vmem:[%s2 + $0x30] sm:$0xff]
    %v89 = vld [vmem:[%s2 + $0x38] sm:$0xff]
    %v90 = vpack.c.bf16 %v83, %v82
    %v91 = vpack.c.bf16 %v85, %v84
    %v92 = vpack.c.bf16 %v87, %v86
    %v93 = vpack.c.bf16 %v89, %v88
    %v94 = vld [vmem:[%s3] sm:$0xff]
    %v95 = vld [vmem:[%s3 + $0x8] sm:$0xff]
    %v96 = vld [vmem:[%s3 + $0x10] sm:$0xff]
    %v97 = vld [vmem:[%s3 + $0x18] sm:$0xff]
    %v98 = vld [vmem:[%s3 + $0x20] sm:$0xff]
    %v99 = vld [vmem:[%s3 + $0x28] sm:$0xff]
    %v100 = vld [vmem:[%s3 + $0x30] sm:$0xff]
    %v101 = vld [vmem:[%s3 + $0x38] sm:$0xff]
    %v102 = vld [vmem:[%s3 + $0x40] sm:$0xff]
    %v103 = vld [vmem:[%s3 + $0x48] sm:$0xff]
    %v104 = vld [vmem:[%s3 + $0x50] sm:$0xff]
    %v105 = vld [vmem:[%s3 + $0x58] sm:$0xff]
    %v106 = vld [vmem:[%s3 + $0x60] sm:$0xff]
    %v107 = vld [vmem:[%s3 + $0x68] sm:$0xff]
    %v108 = vld [vmem:[%s3 + $0x70] sm:$0xff]
    %v109 = vld [vmem:[%s3 + $0x78] sm:$0xff]
    %v110 = vld [vmem:[%s3 + $0x80] sm:$0xff]
    %v111 = vld [vmem:[%s3 + $0x88] sm:$0xff]
    %v112 = vld [vmem:[%s3 + $0x90] sm:$0xff]
    %v113 = vld [vmem:[%s3 + $0x98] sm:$0xff]
    %v114 = vld [vmem:[%s3 + $0xa0] sm:$0xff]
    %v115 = vld [vmem:[%s3 + $0xa8] sm:$0xff]
    %v116 = vld [vmem:[%s3 + $0xb0] sm:$0xff]
    %v117 = vld [vmem:[%s3 + $0xb8] sm:$0xff]
    %v118 = vld [vmem:[%s3 + $0xc0] sm:$0xff]
    %v119 = vld [vmem:[%s3 + $0xc8] sm:$0xff]
    %v120 = vld [vmem:[%s3 + $0xd0] sm:$0xff]
    %v121 = vld [vmem:[%s3 + $0xd8] sm:$0xff]
    %v122 = vld [vmem:[%s3 + $0xe0] sm:$0xff]
    %v123 = vld [vmem:[%s3 + $0xe8] sm:$0xff]
    %v124 = vld [vmem:[%s3 + $0xf0] sm:$0xff]
    %v125 = vld [vmem:[%s3 + $0xf8] sm:$0xff]
    %v126 = vld [vmem:[%s5] sm:$0xf]
    %v128 = vlaneseq
    %v129 = vshrl.u32 %v128, 7
    %v130 = vsub.s32 0, %v129
    %v131 = vrot.slane %v126, %v130
    %v132 = vlaneseq
    %v133 = vshrl.u32 %v132, 7
    %v134 = vsub.s32 1, %v133
    %v135 = vrot.slane %v126, %v134
    %v136 = vlaneseq
    %v137 = vshrl.u32 %v136, 7
    %v138 = vsub.s32 2, %v137
    %v139 = vrot.slane %v126, %v138
    %v140 = vlaneseq
    %v141 = vshrl.u32 %v140, 7
    %v142 = vsub.s32 3, %v141
    %v143 = vrot.slane %v126, %v142
    %v180 = vunpack.c.l.b16 %v94
    %v181 = vunpack.c.h.b16 %v94
    %v182 = vunpack.c.l.b16 %v95
    %v183 = vunpack.c.h.b16 %v95
    %v184 = vunpack.c.l.b16 %v96
    %v185 = vunpack.c.h.b16 %v96
    %v186 = vunpack.c.l.b16 %v97
    %v187 = vunpack.c.h.b16 %v97
    %v188 = vunpack.c.l.b16 %v98
    %v189 = vunpack.c.h.b16 %v98
    %v190 = vunpack.c.l.b16 %v99
    %v191 = vunpack.c.h.b16 %v99
    %v192 = vunpack.c.l.b16 %v100
    %v193 = vunpack.c.h.b16 %v100
    %v194 = vunpack.c.l.b16 %v101
    %v195 = vunpack.c.h.b16 %v101
    %v196 = vunpack.c.l.b16 %v102
    %v197 = vunpack.c.h.b16 %v102
    %v198 = vunpack.c.l.b16 %v103
    %v199 = vunpack.c.h.b16 %v103
    %v200 = vunpack.c.l.b16 %v104
    %v201 = vunpack.c.h.b16 %v104
    %v202 = vunpack.c.l.b16 %v105
    %v203 = vunpack.c.h.b16 %v105
    %v204 = vunpack.c.l.b16 %v106
    %v205 = vunpack.c.h.b16 %v106
    %v206 = vunpack.c.l.b16 %v107
    %v207 = vunpack.c.h.b16 %v107
    %v208 = vunpack.c.l.b16 %v108
    %v209 = vunpack.c.h.b16 %v108
    %v210 = vunpack.c.l.b16 %v109
    %v211 = vunpack.c.h.b16 %v109
    %v212 = vunpack.c.l.b16 %v110
    %v213 = vunpack.c.h.b16 %v110
    %v214 = vunpack.c.l.b16 %v111
    %v215 = vunpack.c.h.b16 %v111
    %v216 = vunpack.c.l.b16 %v112
    %v217 = vunpack.c.h.b16 %v112
    %v218 = vunpack.c.l.b16 %v113
    %v219 = vunpack.c.h.b16 %v113
    %v220 = vunpack.c.l.b16 %v114
    %v221 = vunpack.c.h.b16 %v114
    %v222 = vunpack.c.l.b16 %v115
    %v223 = vunpack.c.h.b16 %v115
    %v224 = vunpack.c.l.b16 %v116
    %v225 = vunpack.c.h.b16 %v116
    %v226 = vunpack.c.l.b16 %v117
    %v227 = vunpack.c.h.b16 %v117
    %v228 = vunpack.c.l.b16 %v118
    %v229 = vunpack.c.h.b16 %v118
    %v230 = vunpack.c.l.b16 %v119
    %v231 = vunpack.c.h.b16 %v119
    %v232 = vunpack.c.l.b16 %v120
    %v233 = vunpack.c.h.b16 %v120
    %v234 = vunpack.c.l.b16 %v121
    %v235 = vunpack.c.h.b16 %v121
    %v236 = vunpack.c.l.b16 %v122
    %v237 = vunpack.c.h.b16 %v122
    %v238 = vunpack.c.l.b16 %v123
    %v239 = vunpack.c.h.b16 %v123
    %v240 = vunpack.c.l.b16 %v124
    %v241 = vunpack.c.h.b16 %v124
    %v242 = vunpack.c.l.b16 %v125
    %v243 = vunpack.c.h.b16 %v125
    %v244 = vpack.c.b16 %v184, %v180
    %v245 = vpack.c.b16 %v185, %v181
    %v246 = vpack.c.b16 %v186, %v182
    %v247 = vpack.c.b16 %v187, %v183
    %v248 = vpack.c.b16 %v192, %v188
    %v249 = vpack.c.b16 %v193, %v189
    %v250 = vpack.c.b16 %v194, %v190
    %v251 = vpack.c.b16 %v195, %v191
    %v252 = vpack.c.b16 %v200, %v196
    %v253 = vpack.c.b16 %v201, %v197
    %v254 = vpack.c.b16 %v202, %v198
    %v255 = vpack.c.b16 %v203, %v199
    %v256 = vpack.c.b16 %v208, %v204
    %v257 = vpack.c.b16 %v209, %v205
    %v258 = vpack.c.b16 %v210, %v206
    %v259 = vpack.c.b16 %v211, %v207
    %v260 = vpack.c.b16 %v216, %v212
    %v261 = vpack.c.b16 %v217, %v213
    %v262 = vpack.c.b16 %v218, %v214
    %v263 = vpack.c.b16 %v219, %v215
    %v264 = vpack.c.b16 %v224, %v220
    %v265 = vpack.c.b16 %v225, %v221
    %v266 = vpack.c.b16 %v226, %v222
    %v267 = vpack.c.b16 %v227, %v223
    %v268 = vpack.c.b16 %v232, %v228
    %v269 = vpack.c.b16 %v233, %v229
    %v270 = vpack.c.b16 %v234, %v230
    %v271 = vpack.c.b16 %v235, %v231
    %v272 = vpack.c.b16 %v240, %v236
    %v273 = vpack.c.b16 %v241, %v237
    %v274 = vpack.c.b16 %v242, %v238
    %v275 = vpack.c.b16 %v243, %v239
    %308 = vmatprep.subr.bf16.mxu0 %v273
    %309 = vmatpush1.bf16.msra.mxu0 %v272
    %310 = vmatprep.subr.bf16.mxu0 %v269
    %311 = vmatpush1.bf16.msra.mxu0 %v268
    %312 = vmatprep.subr.bf16.mxu0 %v265
    %313 = vmatpush1.bf16.msra.mxu0 %v264
    %314 = vmatprep.subr.bf16.mxu0 %v261
    %315 = vmatpush1.bf16.msra.mxu0 %v260
    %316 = vmatprep.subr.bf16.mxu0 %v257
    %317 = vmatpush1.bf16.msra.mxu0 %v256
    %318 = vmatprep.subr.bf16.mxu0 %v253
    %319 = vmatpush1.bf16.msra.mxu0 %v252
    %320 = vmatprep.subr.bf16.mxu0 %v249
    %321 = vmatpush1.bf16.msra.mxu0 %v248
    %322 = vmatprep.subr.bf16.mxu0 %v245
    %323 = vmatpush1.bf16.msra.mxu0 %v244
    %324 = vmatprep.subr.bf16.mxu0 0
    %325 = vmatpush2.bf16.msra.mxu0 0
    %326 = vmatprep.subr.bf16.mxu0 0
    %327 = vmatpush2.bf16.msra.mxu0 0
    %328 = vmatprep.subr.bf16.mxu0 0
    %329 = vmatpush2.bf16.msra.mxu0 0
    %330 = vmatprep.subr.bf16.mxu0 0
    %331 = vmatpush2.bf16.msra.mxu0 0
    %332 = vmatprep.subr.bf16.mxu0 0
    %333 = vmatpush2.bf16.msra.mxu0 0
    %334 = vmatprep.subr.bf16.mxu0 0
    %335 = vmatpush2.bf16.msra.mxu0 0
    %336 = vmatprep.subr.bf16.mxu0 0
    %337 = vmatpush2.bf16.msra.mxu0 0
    %338 = vmatprep.subr.bf16.mxu0 0
    %339 = vmatpush2.bf16.msra.mxu0 0
    %340 = vmatprep.mubr.bf16.mxu0 0
    %341 = vmatmul.mubr.bf16.gmra.mxu0 %v90
    %v342 = vpop.f32.mrf.mxu0
    %v343 = vadd.f32 %v131, %v342
    %v344 = vpop.f32.mrf.mxu0
    %v345 = vadd.f32 %v135, %v344
    %v346 = vpop.f32.mrf.mxu0
    %v347 = vadd.f32 %v131, %v346
    %v348 = vpop.f32.mrf.mxu0
    %v349 = vadd.f32 %v135, %v348
    %350 = vmatprep.mubr.bf16.mxu0 0
    %351 = vmatmul.mubr.bf16.gmra.mxu0 %v91
    %v352 = vpop.f32.mrf.mxu0
    %v353 = vadd.f32 %v131, %v352
    %v354 = vpop.f32.mrf.mxu0
    %v355 = vadd.f32 %v135, %v354
    %v356 = vpop.f32.mrf.mxu0
    %v357 = vadd.f32 %v131, %v356
    %v358 = vpop.f32.mrf.mxu0
    %v359 = vadd.f32 %v135, %v358
    %360 = vmatprep.mubr.bf16.mxu0 0
    %361 = vmatmul.mubr.bf16.gmra.mxu0 %v92
    %v362 = vpop.f32.mrf.mxu0
    %v363 = vadd.f32 %v131, %v362
    %v364 = vpop.f32.mrf.mxu0
    %v365 = vadd.f32 %v135, %v364
    %v366 = vpop.f32.mrf.mxu0
    %v367 = vadd.f32 %v131, %v366
    %v368 = vpop.f32.mrf.mxu0
    %v369 = vadd.f32 %v135, %v368
    %370 = vmatprep.mubr.bf16.mxu0 0
    %371 = vmatmul.mubr.bf16.gmra.mxu0 %v93
    %v372 = vpop.f32.mrf.mxu0
    %v373 = vadd.f32 %v131, %v372
    %v374 = vpop.f32.mrf.mxu0
    %v375 = vadd.f32 %v135, %v374
    %v376 = vpop.f32.mrf.mxu0
    %v377 = vadd.f32 %v131, %v376
    %v378 = vpop.f32.mrf.mxu0
    %v379 = vadd.f32 %v135, %v378
    %380 = vdwg.mxu0
    %381 = vmatprep.subr.bf16.mxu0 %v275
    %382 = vmatpush1.bf16.msra.mxu0 %v274
    %383 = vmatprep.subr.bf16.mxu0 %v271
    %384 = vmatpush1.bf16.msra.mxu0 %v270
    %385 = vmatprep.subr.bf16.mxu0 %v267
    %386 = vmatpush1.bf16.msra.mxu0 %v266
    %387 = vmatprep.subr.bf16.mxu0 %v263
    %388 = vmatpush1.bf16.msra.mxu0 %v262
    %389 = vmatprep.subr.bf16.mxu0 %v259
    %390 = vmatpush1.bf16.msra.mxu0 %v258
    %391 = vmatprep.subr.bf16.mxu0 %v255
    %392 = vmatpush1.bf16.msra.mxu0 %v254
    %393 = vmatprep.subr.bf16.mxu0 %v251
    %394 = vmatpush1.bf16.msra.mxu0 %v250
    %395 = vmatprep.subr.bf16.mxu0 %v247
    %396 = vmatpush1.bf16.msra.mxu0 %v246
    %397 = vmatprep.subr.bf16.mxu0 0
    %398 = vmatpush2.bf16.msra.mxu0 0
    %399 = vmatprep.subr.bf16.mxu0 0
    %400 = vmatpush2.bf16.msra.mxu0 0
    %401 = vmatprep.subr.bf16.mxu0 0
    %402 = vmatpush2.bf16.msra.mxu0 0
    %403 = vmatprep.subr.bf16.mxu0 0
    %404 = vmatpush2.bf16.msra.mxu0 0
    %405 = vmatprep.subr.bf16.mxu0 0
    %406 = vmatpush2.bf16.msra.mxu0 0
    %407 = vmatprep.subr.bf16.mxu0 0
    %408 = vmatpush2.bf16.msra.mxu0 0
    %409 = vmatprep.subr.bf16.mxu0 0
    %410 = vmatpush2.bf16.msra.mxu0 0
    %411 = vmatprep.subr.bf16.mxu0 0
    %412 = vmatpush2.bf16.msra.mxu0 0
    %413 = vmatprep.mubr.bf16.mxu0 0
    %414 = vmatmul.mubr.bf16.gmra.mxu0 %v90
    %v415 = vpop.f32.mrf.mxu0
    %v416 = vadd.f32 %v139, %v415
    %v417 = vpop.f32.mrf.mxu0
    %v418 = vadd.f32 %v143, %v417
    %v419 = vpop.f32.mrf.mxu0
    %v420 = vadd.f32 %v139, %v419
    %v421 = vpop.f32.mrf.mxu0
    %v422 = vadd.f32 %v143, %v421
    %423 = vmatprep.mubr.bf16.mxu0 0
    %424 = vmatmul.mubr.bf16.gmra.mxu0 %v91
    %v425 = vpop.f32.mrf.mxu0
    %v426 = vadd.f32 %v139, %v425
    %v427 = vpop.f32.mrf.mxu0
    %v428 = vadd.f32 %v143, %v427
    %v429 = vpop.f32.mrf.mxu0
    %v430 = vadd.f32 %v139, %v429
    %v431 = vpop.f32.mrf.mxu0
    %v432 = vadd.f32 %v143, %v431
    %433 = vmatprep.mubr.bf16.mxu0 0
    %434 = vmatmul.mubr.bf16.gmra.mxu0 %v92
    %v435 = vpop.f32.mrf.mxu0
    %v436 = vadd.f32 %v139, %v435
    %v437 = vpop.f32.mrf.mxu0
    %v438 = vadd.f32 %v143, %v437
    %v439 = vpop.f32.mrf.mxu0
    %v440 = vadd.f32 %v139, %v439
    %v441 = vpop.f32.mrf.mxu0
    %v442 = vadd.f32 %v143, %v441
    %443 = vmatprep.mubr.bf16.mxu0 0
    %444 = vmatmul.mubr.bf16.gmra.mxu0 %v93
    %v445 = vpop.f32.mrf.mxu0
    %v446 = vadd.f32 %v139, %v445
    %v447 = vpop.f32.mrf.mxu0
    %v448 = vadd.f32 %v143, %v447
    %v449 = vpop.f32.mrf.mxu0
    %v450 = vadd.f32 %v139, %v449
    %v451 = vpop.f32.mrf.mxu0
    %v452 = vadd.f32 %v143, %v451
    %453 = vdwg.mxu0
    %454 = vst [vmem:[#allocation2] sm:$0xff] %v343
    %455 = vst [vmem:[#allocation2 + $0x8] sm:$0xff] %v345
    %456 = vst [vmem:[#allocation2 + $0x10] sm:$0xff] %v416
    %457 = vst [vmem:[#allocation2 + $0x18] sm:$0xff] %v418
    %458 = vst [vmem:[#allocation2 + $0x20] sm:$0xff] %v347
    %459 = vst [vmem:[#allocation2 + $0x28] sm:$0xff] %v349
    %460 = vst [vmem:[#allocation2 + $0x30] sm:$0xff] %v420
    %461 = vst [vmem:[#allocation2 + $0x38] sm:$0xff] %v422
    %462 = vst [vmem:[#allocation2 + $0x40] sm:$0xff] %v353
    %463 = vst [vmem:[#allocation2 + $0x48] sm:$0xff] %v355
    %464 = vst [vmem:[#allocation2 + $0x50] sm:$0xff] %v426
    %465 = vst [vmem:[#allocation2 + $0x58] sm:$0xff] %v428
    %466 = vst [vmem:[#allocation2 + $0x60] sm:$0xff] %v357
    %467 = vst [vmem:[#allocation2 + $0x68] sm:$0xff] %v359
    %468 = vst [vmem:[#allocation2 + $0x70] sm:$0xff] %v430
    %469 = vst [vmem:[#allocation2 + $0x78] sm:$0xff] %v432
    %470 = vst [vmem:[#allocation2 + $0x80] sm:$0xff] %v363
    %471 = vst [vmem:[#allocation2 + $0x88] sm:$0xff] %v365
    %472 = vst [vmem:[#allocation2 + $0x90] sm:$0xff] %v436
    %473 = vst [vmem:[#allocation2 + $0x98] sm:$0xff] %v438
    %474 = vst [vmem:[#allocation2 + $0xa0] sm:$0xff] %v367
    %475 = vst [vmem:[#allocation2 + $0xa8] sm:$0xff] %v369
    %476 = vst [vmem:[#allocation2 + $0xb0] sm:$0xff] %v440
    %477 = vst [vmem:[#allocation2 + $0xb8] sm:$0xff] %v442
    %478 = vst [vmem:[#allocation2 + $0xc0] sm:$0xff] %v373
    %479 = vst [vmem:[#allocation2 + $0xc8] sm:$0xff] %v375
    %480 = vst [vmem:[#allocation2 + $0xd0] sm:$0xff] %v446
    %481 = vst [vmem:[#allocation2 + $0xd8] sm:$0xff] %v448
    %482 = vst [vmem:[#allocation2 + $0xe0] sm:$0xff] %v377
    %483 = vst [vmem:[#allocation2 + $0xe8] sm:$0xff] %v379
    %484 = vst [vmem:[#allocation2 + $0xf0] sm:$0xff] %v450
    %485 = vst [vmem:[#allocation2 + $0xf8] sm:$0xff] %v452
    %v486 = vld [vmem:[#allocation8] sm:$0xff]
    %v487 = vld [vmem:[#allocation8 + $0x8] sm:$0xff]
    %v488 = vld [vmem:[#allocation8 + $0x10] sm:$0xff]
    %v489 = vld [vmem:[#allocation8 + $0x18] sm:$0xff]
    %v490 = vld [vmem:[#allocation8 + $0x20] sm:$0xff]
    %v491 = vld [vmem:[#allocation8 + $0x28] sm:$0xff]
    %v492 = vld [vmem:[#allocation8 + $0x30] sm:$0xff]
    %v493 = vld [vmem:[#allocation8 + $0x38] sm:$0xff]
    %v494 = vld [vmem:[#allocation8 + $0x40] sm:$0xff]
    %v495 = vld [vmem:[#allocation8 + $0x48] sm:$0xff]
    %v496 = vld [vmem:[#allocation8 + $0x50] sm:$0xff]
    %v497 = vld [vmem:[#allocation8 + $0x58] sm:$0xff]
    %v498 = vld [vmem:[#allocation8 + $0x60] sm:$0xff]
    %v499 = vld [vmem:[#allocation8 + $0x68] sm:$0xff]
    %v500 = vld [vmem:[#allocation8 + $0x70] sm:$0xff]
    %v501 = vld [vmem:[#allocation8 + $0x78] sm:$0xff]
    %v502 = vld [vmem:[#allocation8 + $0x80] sm:$0xff]
    %v503 = vld [vmem:[#allocation8 + $0x88] sm:$0xff]
    %v504 = vld [vmem:[#allocation8 + $0x90] sm:$0xff]
    %v505 = vld [vmem:[#allocation8 + $0x98] sm:$0xff]
    %v506 = vld [vmem:[#allocation8 + $0xa0] sm:$0xff]
    %v507 = vld [vmem:[#allocation8 + $0xa8] sm:$0xff]
    %v508 = vld [vmem:[#allocation8 + $0xb0] sm:$0xff]
    %v509 = vld [vmem:[#allocation8 + $0xb8] sm:$0xff]
    %v510 = vld [vmem:[#allocation8 + $0xc0] sm:$0xff]
    %v511 = vld [vmem:[#allocation8 + $0xc8] sm:$0xff]
    %v512 = vld [vmem:[#allocation8 + $0xd0] sm:$0xff]
    %v513 = vld [vmem:[#allocation8 + $0xd8] sm:$0xff]
    %v514 = vld [vmem:[#allocation8 + $0xe0] sm:$0xff]
    %v515 = vld [vmem:[#allocation8 + $0xe8] sm:$0xff]
    %v516 = vld [vmem:[#allocation8 + $0xf0] sm:$0xff]
    %v517 = vld [vmem:[#allocation8 + $0xf8] sm:$0xff]
    %v518 = vld [vmem:[%s8] sm:$0xf]
    %v520 = vlaneseq
    %v521 = vshrl.u32 %v520, 7
    %v522 = vsub.s32 0, %v521
    %v523 = vrot.slane %v518, %v522
    %v524 = vlaneseq
    %v525 = vshrl.u32 %v524, 7
    %v526 = vsub.s32 1, %v525
    %v527 = vrot.slane %v518, %v526
    %v528 = vlaneseq
    %v529 = vshrl.u32 %v528, 7
    %v530 = vsub.s32 2, %v529
    %v531 = vrot.slane %v518, %v530
    %v532 = vlaneseq
    %v533 = vshrl.u32 %v532, 7
    %v534 = vsub.s32 3, %v533
    %v535 = vrot.slane %v518, %v534
    %v572 = vunpack.c.l.b16 %v486
    %v573 = vunpack.c.h.b16 %v486
    %v574 = vunpack.c.l.b16 %v487
    %v575 = vunpack.c.h.b16 %v487
    %v576 = vunpack.c.l.b16 %v488
    %v577 = vunpack.c.h.b16 %v488
    %v578 = vunpack.c.l.b16 %v489
    %v579 = vunpack.c.h.b16 %v489
    %v580 = vunpack.c.l.b16 %v490
    %v581 = vunpack.c.h.b16 %v490
    %v582 = vunpack.c.l.b16 %v491
    %v583 = vunpack.c.h.b16 %v491
    %v584 = vunpack.c.l.b16 %v492
    %v585 = vunpack.c.h.b16 %v492
    %v586 = vunpack.c.l.b16 %v493
    %v587 = vunpack.c.h.b16 %v493
    %v588 = vunpack.c.l.b16 %v494
    %v589 = vunpack.c.h.b16 %v494
    %v590 = vunpack.c.l.b16 %v495
    %v591 = vunpack.c.h.b16 %v495
    %v592 = vunpack.c.l.b16 %v496
    %v593 = vunpack.c.h.b16 %v496
    %v594 = vunpack.c.l.b16 %v497
    %v595 = vunpack.c.h.b16 %v497
    %v596 = vunpack.c.l.b16 %v498
    %v597 = vunpack.c.h.b16 %v498
    %v598 = vunpack.c.l.b16 %v499
    %v599 = vunpack.c.h.b16 %v499
    %v600 = vunpack.c.l.b16 %v500
    %v601 = vunpack.c.h.b16 %v500
    %v602 = vunpack.c.l.b16 %v501
    %v603 = vunpack.c.h.b16 %v501
    %v604 = vunpack.c.l.b16 %v502
    %v605 = vunpack.c.h.b16 %v502
    %v606 = vunpack.c.l.b16 %v503
    %v607 = vunpack.c.h.b16 %v503
    %v608 = vunpack.c.l.b16 %v504
    %v609 = vunpack.c.h.b16 %v504
    %v610 = vunpack.c.l.b16 %v505
    %v611 = vunpack.c.h.b16 %v505
    %v612 = vunpack.c.l.b16 %v506
    %v613 = vunpack.c.h.b16 %v506
    %v614 = vunpack.c.l.b16 %v507
    %v615 = vunpack.c.h.b16 %v507
    %v616 = vunpack.c.l.b16 %v508
    %v617 = vunpack.c.h.b16 %v508
    %v618 = vunpack.c.l.b16 %v509
    %v619 = vunpack.c.h.b16 %v509
    %v620 = vunpack.c.l.b16 %v510
    %v621 = vunpack.c.h.b16 %v510
    %v622 = vunpack.c.l.b16 %v511
    %v623 = vunpack.c.h.b16 %v511
    %v624 = vunpack.c.l.b16 %v512
    %v625 = vunpack.c.h.b16 %v512
    %v626 = vunpack.c.l.b16 %v513
    %v627 = vunpack.c.h.b16 %v513
    %v628 = vunpack.c.l.b16 %v514
    %v629 = vunpack.c.h.b16 %v514
    %v630 = vunpack.c.l.b16 %v515
    %v631 = vunpack.c.h.b16 %v515
    %v632 = vunpack.c.l.b16 %v516
    %v633 = vunpack.c.h.b16 %v516
    %v634 = vunpack.c.l.b16 %v517
    %v635 = vunpack.c.h.b16 %v517
    %v636 = vpack.c.b16 %v576, %v572
    %v637 = vpack.c.b16 %v577, %v573
    %v638 = vpack.c.b16 %v578, %v574
    %v639 = vpack.c.b16 %v579, %v575
    %v640 = vpack.c.b16 %v584, %v580
    %v641 = vpack.c.b16 %v585, %v581
    %v642 = vpack.c.b16 %v586, %v582
    %v643 = vpack.c.b16 %v587, %v583
    %v644 = vpack.c.b16 %v592, %v588
    %v645 = vpack.c.b16 %v593, %v589
    %v646 = vpack.c.b16 %v594, %v590
    %v647 = vpack.c.b16 %v595, %v591
    %v648 = vpack.c.b16 %v600, %v596
    %v649 = vpack.c.b16 %v601, %v597
    %v650 = vpack.c.b16 %v602, %v598
    %v651 = vpack.c.b16 %v603, %v599
    %v652 = vpack.c.b16 %v608, %v604
    %v653 = vpack.c.b16 %v609, %v605
    %v654 = vpack.c.b16 %v610, %v606
    %v655 = vpack.c.b16 %v611, %v607
    %v656 = vpack.c.b16 %v616, %v612
    %v657 = vpack.c.b16 %v617, %v613
    %v658 = vpack.c.b16 %v618, %v614
    %v659 = vpack.c.b16 %v619, %v615
    %v660 = vpack.c.b16 %v624, %v620
    %v661 = vpack.c.b16 %v625, %v621
    %v662 = vpack.c.b16 %v626, %v622
    %v663 = vpack.c.b16 %v627, %v623
    %v664 = vpack.c.b16 %v632, %v628
    %v665 = vpack.c.b16 %v633, %v629
    %v666 = vpack.c.b16 %v634, %v630
    %v667 = vpack.c.b16 %v635, %v631
    %700 = vmatprep.subr.bf16.mxu0 %v665
    %701 = vmatpush1.bf16.msra.mxu0 %v664
    %702 = vmatprep.subr.bf16.mxu0 %v661
    %703 = vmatpush1.bf16.msra.mxu0 %v660
    %704 = vmatprep.subr.bf16.mxu0 %v657
    %705 = vmatpush1.bf16.msra.mxu0 %v656
    %706 = vmatprep.subr.bf16.mxu0 %v653
    %707 = vmatpush1.bf16.msra.mxu0 %v652
    %708 = vmatprep.subr.bf16.mxu0 %v649
    %709 = vmatpush1.bf16.msra.mxu0 %v648
    %710 = vmatprep.subr.bf16.mxu0 %v645
    %711 = vmatpush1.bf16.msra.mxu0 %v644
    %712 = vmatprep.subr.bf16.mxu0 %v641
    %713 = vmatpush1.bf16.msra.mxu0 %v640
    %714 = vmatprep.subr.bf16.mxu0 %v637
    %715 = vmatpush1.bf16.msra.mxu0 %v636
    %716 = vmatprep.subr.bf16.mxu0 0
    %717 = vmatpush2.bf16.msra.mxu0 0
    %718 = vmatprep.subr.bf16.mxu0 0
    %719 = vmatpush2.bf16.msra.mxu0 0
    %720 = vmatprep.subr.bf16.mxu0 0
    %721 = vmatpush2.bf16.msra.mxu0 0
    %722 = vmatprep.subr.bf16.mxu0 0
    %723 = vmatpush2.bf16.msra.mxu0 0
    %724 = vmatprep.subr.bf16.mxu0 0
    %725 = vmatpush2.bf16.msra.mxu0 0
    %726 = vmatprep.subr.bf16.mxu0 0
    %727 = vmatpush2.bf16.msra.mxu0 0
    %728 = vmatprep.subr.bf16.mxu0 0
    %729 = vmatpush2.bf16.msra.mxu0 0
    %730 = vmatprep.subr.bf16.mxu0 0
    %731 = vmatpush2.bf16.msra.mxu0 0
    %732 = vmatprep.mubr.bf16.mxu0 0
    %733 = vmatmul.mubr.bf16.gmra.mxu0 %v90
    %v734 = vpop.f32.mrf.mxu0
    %v735 = vadd.f32 %v523, %v734
    %v736 = vpop.f32.mrf.mxu0
    %v737 = vadd.f32 %v527, %v736
    %v738 = vpop.f32.mrf.mxu0
    %v739 = vadd.f32 %v523, %v738
    %v740 = vpop.f32.mrf.mxu0
    %v741 = vadd.f32 %v527, %v740
    %742 = vmatprep.mubr.bf16.mxu0 0
    %743 = vmatmul.mubr.bf16.gmra.mxu0 %v91
    %v744 = vpop.f32.mrf.mxu0
    %v745 = vadd.f32 %v523, %v744
    %v746 = vpop.f32.mrf.mxu0
    %v747 = vadd.f32 %v527, %v746
    %v748 = vpop.f32.mrf.mxu0
    %v749 = vadd.f32 %v523, %v748
    %v750 = vpop.f32.mrf.mxu0
    %v751 = vadd.f32 %v527, %v750
    %752 = vmatprep.mubr.bf16.mxu0 0
    %753 = vmatmul.mubr.bf16.gmra.mxu0 %v92
    %v754 = vpop.f32.mrf.mxu0
    %v755 = vadd.f32 %v523, %v754
    %v756 = vpop.f32.mrf.mxu0
    %v757 = vadd.f32 %v527, %v756
    %v758 = vpop.f32.mrf.mxu0
    %v759 = vadd.f32 %v523, %v758
    %v760 = vpop.f32.mrf.mxu0
    %v761 = vadd.f32 %v527, %v760
    %762 = vmatprep.mubr.bf16.mxu0 0
    %763 = vmatmul.mubr.bf16.gmra.mxu0 %v93
    %v764 = vpop.f32.mrf.mxu0
    %v765 = vadd.f32 %v523, %v764
    %v766 = vpop.f32.mrf.mxu0
    %v767 = vadd.f32 %v527, %v766
    %v768 = vpop.f32.mrf.mxu0
    %v769 = vadd.f32 %v523, %v768
    %v770 = vpop.f32.mrf.mxu0
    %v771 = vadd.f32 %v527, %v770
    %772 = vdwg.mxu0
    %773 = vmatprep.subr.bf16.mxu0 %v667
    %774 = vmatpush1.bf16.msra.mxu0 %v666
    %775 = vmatprep.subr.bf16.mxu0 %v663
    %776 = vmatpush1.bf16.msra.mxu0 %v662
    %777 = vmatprep.subr.bf16.mxu0 %v659
    %778 = vmatpush1.bf16.msra.mxu0 %v658
    %779 = vmatprep.subr.bf16.mxu0 %v655
    %780 = vmatpush1.bf16.msra.mxu0 %v654
    %781 = vmatprep.subr.bf16.mxu0 %v651
    %782 = vmatpush1.bf16.msra.mxu0 %v650
    %783 = vmatprep.subr.bf16.mxu0 %v647
    %784 = vmatpush1.bf16.msra.mxu0 %v646
    %785 = vmatprep.subr.bf16.mxu0 %v643
    %786 = vmatpush1.bf16.msra.mxu0 %v642
    %787 = vmatprep.subr.bf16.mxu0 %v639
    %788 = vmatpush1.bf16.msra.mxu0 %v638
    %789 = vmatprep.subr.bf16.mxu0 0
    %790 = vmatpush2.bf16.msra.mxu0 0
    %791 = vmatprep.subr.bf16.mxu0 0
    %792 = vmatpush2.bf16.msra.mxu0 0
    %793 = vmatprep.subr.bf16.mxu0 0
    %794 = vmatpush2.bf16.msra.mxu0 0
    %795 = vmatprep.subr.bf16.mxu0 0
    %796 = vmatpush2.bf16.msra.mxu0 0
    %797 = vmatprep.subr.bf16.mxu0 0
    %798 = vmatpush2.bf16.msra.mxu0 0
    %799 = vmatprep.subr.bf16.mxu0 0
    %800 = vmatpush2.bf16.msra.mxu0 0
    %801 = vmatprep.subr.bf16.mxu0 0
    %802 = vmatpush2.bf16.msra.mxu0 0
    %803 = vmatprep.subr.bf16.mxu0 0
    %804 = vmatpush2.bf16.msra.mxu0 0
    %805 = vmatprep.mubr.bf16.mxu0 0
    %806 = vmatmul.mubr.bf16.gmra.mxu0 %v90
    %v807 = vpop.f32.mrf.mxu0
    %v808 = vadd.f32 %v531, %v807
    %v809 = vpop.f32.mrf.mxu0
    %v810 = vadd.f32 %v535, %v809
    %v811 = vpop.f32.mrf.mxu0
    %v812 = vadd.f32 %v531, %v811
    %v813 = vpop.f32.mrf.mxu0
    %v814 = vadd.f32 %v535, %v813
    %815 = vmatprep.mubr.bf16.mxu0 0
    %816 = vmatmul.mubr.bf16.gmra.mxu0 %v91
    %v817 = vpop.f32.mrf.mxu0
    %v818 = vadd.f32 %v531, %v817
    %v819 = vpop.f32.mrf.mxu0
    %v820 = vadd.f32 %v535, %v819
    %v821 = vpop.f32.mrf.mxu0
    %v822 = vadd.f32 %v531, %v821
    %v823 = vpop.f32.mrf.mxu0
    %v824 = vadd.f32 %v535, %v823
    %825 = vmatprep.mubr.bf16.mxu0 0
    %826 = vmatmul.mubr.bf16.gmra.mxu0 %v92
    %v827 = vpop.f32.mrf.mxu0
    %v828 = vadd.f32 %v531, %v827
    %v829 = vpop.f32.mrf.mxu0
    %v830 = vadd.f32 %v535, %v829
    %v831 = vpop.f32.mrf.mxu0
    %v832 = vadd.f32 %v531, %v831
    %v833 = vpop.f32.mrf.mxu0
    %v834 = vadd.f32 %v535, %v833
    %835 = vmatprep.mubr.bf16.mxu0 0
    %836 = vmatmul.mubr.bf16.gmra.mxu0 %v93
    %v837 = vpop.f32.mrf.mxu0
    %v838 = vadd.f32 %v531, %v837
    %v839 = vpop.f32.mrf.mxu0
    %v840 = vadd.f32 %v535, %v839
    %v841 = vpop.f32.mrf.mxu0
    %v842 = vadd.f32 %v531, %v841
    %v843 = vpop.f32.mrf.mxu0
    %v844 = vadd.f32 %v535, %v843
    %845 = vdwg.mxu0
    %846 = vst [vmem:[#allocation3] sm:$0xff] %v735
    %847 = vst [vmem:[#allocation3 + $0x8] sm:$0xff] %v737
    %848 = vst [vmem:[#allocation3 + $0x10] sm:$0xff] %v808
    %849 = vst [vmem:[#allocation3 + $0x18] sm:$0xff] %v810
    %850 = vst [vmem:[#allocation3 + $0x20] sm:$0xff] %v739
    %851 = vst [vmem:[#allocation3 + $0x28] sm:$0xff] %v741
    %852 = vst [vmem:[#allocation3 + $0x30] sm:$0xff] %v812
    %853 = vst [vmem:[#allocation3 + $0x38] sm:$0xff] %v814
    %854 = vst [vmem:[#allocation3 + $0x40] sm:$0xff] %v745
    %855 = vst [vmem:[#allocation3 + $0x48] sm:$0xff] %v747
    %856 = vst [vmem:[#allocation3 + $0x50] sm:$0xff] %v818
    %857 = vst [vmem:[#allocation3 + $0x58] sm:$0xff] %v820
    %858 = vst [vmem:[#allocation3 + $0x60] sm:$0xff] %v749
    %859 = vst [vmem:[#allocation3 + $0x68] sm:$0xff] %v751
    %860 = vst [vmem:[#allocation3 + $0x70] sm:$0xff] %v822
    %861 = vst [vmem:[#allocation3 + $0x78] sm:$0xff] %v824
    %862 = vst [vmem:[#allocation3 + $0x80] sm:$0xff] %v755
    %863 = vst [vmem:[#allocation3 + $0x88] sm:$0xff] %v757
    %864 = vst [vmem:[#allocation3 + $0x90] sm:$0xff] %v828
    %865 = vst [vmem:[#allocation3 + $0x98] sm:$0xff] %v830
    %866 = vst [vmem:[#allocation3 + $0xa0] sm:$0xff] %v759
    %867 = vst [vmem:[#allocation3 + $0xa8] sm:$0xff] %v761
    %868 = vst [vmem:[#allocation3 + $0xb0] sm:$0xff] %v832
    %869 = vst [vmem:[#allocation3 + $0xb8] sm:$0xff] %v834
    %870 = vst [vmem:[#allocation3 + $0xc0] sm:$0xff] %v765
    %871 = vst [vmem:[#allocation3 + $0xc8] sm:$0xff] %v767
    %872 = vst [vmem:[#allocation3 + $0xd0] sm:$0xff] %v838
    %873 = vst [vmem:[#allocation3 + $0xd8] sm:$0xff] %v840
    %874 = vst [vmem:[#allocation3 + $0xe0] sm:$0xff] %v769
    %875 = vst [vmem:[#allocation3 + $0xe8] sm:$0xff] %v771
    %876 = vst [vmem:[#allocation3 + $0xf0] sm:$0xff] %v842
    %877 = vst [vmem:[#allocation3 + $0xf8] sm:$0xff] %v844
    %878 = vst [vmem:[%s9] sm:$0xff] 0.0
    %879 = vst [vmem:[%s9 + $0x8] sm:$0xff] 0.0
    %880 = vst [vmem:[%s9 + $0x10] sm:$0xff] 0.0
    %881 = vst [vmem:[%s9 + $0x18] sm:$0xff] 0.0
    %882 = vst [vmem:[%s9 + $0x20] sm:$0xff] 0.0
    %883 = vst [vmem:[%s9 + $0x28] sm:$0xff] 0.0
    %884 = vst [vmem:[%s9 + $0x30] sm:$0xff] 0.0
    %885 = vst [vmem:[%s9 + $0x38] sm:$0xff] 0.0
    %886 = vst [vmem:[%s9 + $0x40] sm:$0xff] 0.0
    %887 = vst [vmem:[%s9 + $0x48] sm:$0xff] 0.0
    %888 = vst [vmem:[%s9 + $0x50] sm:$0xff] 0.0
    %889 = vst [vmem:[%s9 + $0x58] sm:$0xff] 0.0
    %890 = vst [vmem:[%s9 + $0x60] sm:$0xff] 0.0
    %891 = vst [vmem:[%s9 + $0x68] sm:$0xff] 0.0
    %892 = vst [vmem:[%s9 + $0x70] sm:$0xff] 0.0
    %893 = vst [vmem:[%s9 + $0x78] sm:$0xff] 0.0
    // While loop
    $region50: #{model_forward.2} parent=1 // loop_pre_header
      _
    $region51: #{model_forward.2} parent=1 // loop_header
      %s895 = sphi 0, %s897
      %p896 = scmp.ge.s32.totalorder %s895, %s80
      %v900 = vphi 0.0, %v1222
      %v901 = vphi 0.0, %v1223
      %v902 = vphi 0.0, %v1545
      %v903 = vphi 0.0, %v1546
    $region52: #{model_forward.2} parent=1 // loop_header_branch
      %899 = sbr.rel (%p896) target = $region56
    $region53: #{model_forward.2} parent=1 // loop_body
      %s904 = ssub.s32 %s80, 1
      %s905 = ssub.s32 %s904, %s895
      %s906 = smul.u32 %s895, 8
      %v907 = vpack.c.bf16 %v900, %v900
      %v908 = vld [vmem:[#allocation5] sm:$0xff]
      %v909 = vld [vmem:[#allocation5 + $0x8] sm:$0xff]
      %v910 = vld [vmem:[#allocation5 + $0x10] sm:$0xff]
      %v911 = vld [vmem:[#allocation5 + $0x18] sm:$0xff]
      %v912 = vld [vmem:[#allocation5 + $0x20] sm:$0xff]
      %v913 = vld [vmem:[#allocation5 + $0x28] sm:$0xff]
      %v914 = vld [vmem:[#allocation5 + $0x30] sm:$0xff]
      %v915 = vld [vmem:[#allocation5 + $0x38] sm:$0xff]
      %v916 = vld [vmem:[#allocation5 + $0x40] sm:$0xff]
      %v917 = vld [vmem:[#allocation5 + $0x48] sm:$0xff]
      %v918 = vld [vmem:[#allocation5 + $0x50] sm:$0xff]
      %v919 = vld [vmem:[#allocation5 + $0x58] sm:$0xff]
      %v920 = vld [vmem:[#allocation5 + $0x60] sm:$0xff]
      %v921 = vld [vmem:[#allocation5 + $0x68] sm:$0xff]
      %v922 = vld [vmem:[#allocation5 + $0x70] sm:$0xff]
      %v923 = vld [vmem:[#allocation5 + $0x78] sm:$0xff]
      %v924 = vld [vmem:[#allocation5 + $0x80] sm:$0xff]
      %v925 = vld [vmem:[#allocation5 + $0x88] sm:$0xff]
      %v926 = vld [vmem:[#allocation5 + $0x90] sm:$0xff]
      %v927 = vld [vmem:[#allocation5 + $0x98] sm:$0xff]
      %v928 = vld [vmem:[#allocation5 + $0xa0] sm:$0xff]
      %v929 = vld [vmem:[#allocation5 + $0xa8] sm:$0xff]
      %v930 = vld [vmem:[#allocation5 + $0xb0] sm:$0xff]
      %v931 = vld [vmem:[#allocation5 + $0xb8] sm:$0xff]
      %v932 = vld [vmem:[#allocation5 + $0xc0] sm:$0xff]
      %v933 = vld [vmem:[#allocation5 + $0xc8] sm:$0xff]
      %v934 = vld [vmem:[#allocation5 + $0xd0] sm:$0xff]
      %v935 = vld [vmem:[#allocation5 + $0xd8] sm:$0xff]
      %v936 = vld [vmem:[#allocation5 + $0xe0] sm:$0xff]
      %v937 = vld [vmem:[#allocation5 + $0xe8] sm:$0xff]
      %v938 = vld [vmem:[#allocation5 + $0xf0] sm:$0xff]
      %v939 = vld [vmem:[#allocation5 + $0xf8] sm:$0xff]
      %s940 = sshra.s32 %s906, 3
      %s941 = sand.u32 %s906, 7
      %s942 = smul.u32 %s940, 4
      %s943 = smul.addr %s942, 8
      %s944 = scalar_lea.vmem [#allocation2], %s943
      %v945 = vld [vmem:[%s944] sm:$0xff]
      %v946 = vld [vmem:[%s944 + $0x8] sm:$0xff]
      %v947 = vld [vmem:[%s944 + $0x10] sm:$0xff]
      %v948 = vld [vmem:[%s944 + $0x18] sm:$0xff]
      %v981 = vunpack.c.l.b16 %v908
      %v982 = vunpack.c.h.b16 %v908
      %v983 = vunpack.c.l.b16 %v909
      %v984 = vunpack.c.h.b16 %v909
      %v985 = vunpack.c.l.b16 %v910
      %v986 = vunpack.c.h.b16 %v910
      %v987 = vunpack.c.l.b16 %v911
      %v988 = vunpack.c.h.b16 %v911
      %v989 = vunpack.c.l.b16 %v912
      %v990 = vunpack.c.h.b16 %v912
      %v991 = vunpack.c.l.b16 %v913
      %v992 = vunpack.c.h.b16 %v913
      %v993 = vunpack.c.l.b16 %v914
      %v994 = vunpack.c.h.b16 %v914
      %v995 = vunpack.c.l.b16 %v915
      %v996 = vunpack.c.h.b16 %v915
      %v997 = vunpack.c.l.b16 %v916
      %v998 = vunpack.c.h.b16 %v916
      %v999 = vunpack.c.l.b16 %v917
      %v1000 = vunpack.c.h.b16 %v917
      %v1001 = vunpack.c.l.b16 %v918
      %v1002 = vunpack.c.h.b16 %v918
      %v1003 = vunpack.c.l.b16 %v919
      %v1004 = vunpack.c.h.b16 %v919
      %v1005 = vunpack.c.l.b16 %v920
      %v1006 = vunpack.c.h.b16 %v920
      %v1007 = vunpack.c.l.b16 %v921
      %v1008 = vunpack.c.h.b16 %v921
      %v1009 = vunpack.c.l.b16 %v922
      %v1010 = vunpack.c.h.b16 %v922
      %v1011 = vunpack.c.l.b16 %v923
      %v1012 = vunpack.c.h.b16 %v923
      %v1013 = vunpack.c.l.b16 %v924
      %v1014 = vunpack.c.h.b16 %v924
      %v1015 = vunpack.c.l.b16 %v925
      %v1016 = vunpack.c.h.b16 %v925
      %v1017 = vunpack.c.l.b16 %v926
      %v1018 = vunpack.c.h.b16 %v926
      %v1019 = vunpack.c.l.b16 %v927
      %v1020 = vunpack.c.h.b16 %v927
      %v1021 = vunpack.c.l.b16 %v928
      %v1022 = vunpack.c.h.b16 %v928
      %v1023 = vunpack.c.l.b16 %v929
      %v1024 = vunpack.c.h.b16 %v929
      %v1025 = vunpack.c.l.b16 %v930
      %v1026 = vunpack.c.h.b16 %v930
      %v1027 = vunpack.c.l.b16 %v931
      %v1028 = vunpack.c.h.b16 %v931
      %v1029 = vunpack.c.l.b16 %v932
      %v1030 = vunpack.c.h.b16 %v932
      %v1031 = vunpack.c.l.b16 %v933
      %v1032 = vunpack.c.h.b16 %v933
      %v1033 = vunpack.c.l.b16 %v934
      %v1034 = vunpack.c.h.b16 %v934
      %v1035 = vunpack.c.l.b16 %v935
      %v1036 = vunpack.c.h.b16 %v935
      %v1037 = vunpack.c.l.b16 %v936
      %v1038 = vunpack.c.h.b16 %v936
      %v1039 = vunpack.c.l.b16 %v937
      %v1040 = vunpack.c.h.b16 %v937
      %v1041 = vunpack.c.l.b16 %v938
      %v1042 = vunpack.c.h.b16 %v938
      %v1043 = vunpack.c.l.b16 %v939
      %v1044 = vunpack.c.h.b16 %v939
      %v1045 = vpack.c.b16 %v985, %v981
      %v1046 = vpack.c.b16 %v986, %v982
      %v1047 = vpack.c.b16 %v987, %v983
      %v1048 = vpack.c.b16 %v988, %v984
      %v1049 = vpack.c.b16 %v993, %v989
      %v1050 = vpack.c.b16 %v994, %v990
      %v1051 = vpack.c.b16 %v995, %v991
      %v1052 = vpack.c.b16 %v996, %v992
      %v1053 = vpack.c.b16 %v1001, %v997
      %v1054 = vpack.c.b16 %v1002, %v998
      %v1055 = vpack.c.b16 %v1003, %v999
      %v1056 = vpack.c.b16 %v1004, %v1000
      %v1057 = vpack.c.b16 %v1009, %v1005
      %v1058 = vpack.c.b16 %v1010, %v1006
      %v1059 = vpack.c.b16 %v1011, %v1007
      %v1060 = vpack.c.b16 %v1012, %v1008
      %v1061 = vpack.c.b16 %v1017, %v1013
      %v1062 = vpack.c.b16 %v1018, %v1014
      %v1063 = vpack.c.b16 %v1019, %v1015
      %v1064 = vpack.c.b16 %v1020, %v1016
      %v1065 = vpack.c.b16 %v1025, %v1021
      %v1066 = vpack.c.b16 %v1026, %v1022
      %v1067 = vpack.c.b16 %v1027, %v1023
      %v1068 = vpack.c.b16 %v1028, %v1024
      %v1069 = vpack.c.b16 %v1033, %v1029
      %v1070 = vpack.c.b16 %v1034, %v1030
      %v1071 = vpack.c.b16 %v1035, %v1031
      %v1072 = vpack.c.b16 %v1036, %v1032
      %v1073 = vpack.c.b16 %v1041, %v1037
      %v1074 = vpack.c.b16 %v1042, %v1038
      %v1075 = vpack.c.b16 %v1043, %v1039
      %v1076 = vpack.c.b16 %v1044, %v1040
      %1109 = vmatprep.subr.bf16.mxu0 %v1074
      %1110 = vmatpush1.bf16.msra.mxu0 %v1073
      %1111 = vmatprep.subr.bf16.mxu0 %v1070
      %1112 = vmatpush1.bf16.msra.mxu0 %v1069
      %1113 = vmatprep.subr.bf16.mxu0 %v1066
      %1114 = vmatpush1.bf16.msra.mxu0 %v1065
      %1115 = vmatprep.subr.bf16.mxu0 %v1062
      %1116 = vmatpush1.bf16.msra.mxu0 %v1061
      %1117 = vmatprep.subr.bf16.mxu0 %v1058
      %1118 = vmatpush1.bf16.msra.mxu0 %v1057
      %1119 = vmatprep.subr.bf16.mxu0 %v1054
      %1120 = vmatpush1.bf16.msra.mxu0 %v1053
      %1121 = vmatprep.subr.bf16.mxu0 %v1050
      %1122 = vmatpush1.bf16.msra.mxu0 %v1049
      %1123 = vmatprep.subr.bf16.mxu0 %v1046
      %1124 = vmatpush1.bf16.msra.mxu0 %v1045
      %1125 = vmatprep.subr.bf16.mxu0 0
      %1126 = vmatpush2.bf16.msra.mxu0 0
      %1127 = vmatprep.subr.bf16.mxu0 0
      %1128 = vmatpush2.bf16.msra.mxu0 0
      %1129 = vmatprep.subr.bf16.mxu0 0
      %1130 = vmatpush2.bf16.msra.mxu0 0
      %1131 = vmatprep.subr.bf16.mxu0 0
      %1132 = vmatpush2.bf16.msra.mxu0 0
      %1133 = vmatprep.subr.bf16.mxu0 0
      %1134 = vmatpush2.bf16.msra.mxu0 0
      %1135 = vmatprep.subr.bf16.mxu0 0
      %1136 = vmatpush2.bf16.msra.mxu0 0
      %1137 = vmatprep.subr.bf16.mxu0 0
      %1138 = vmatpush2.bf16.msra.mxu0 0
      %1139 = vmatprep.subr.bf16.mxu0 0
      %1140 = vmatpush2.bf16.msra.mxu0 0
      %1141 = vmatprep.mubr.bf16.mxu0 0
      %1142 = vmatmul.mubr.bf16.gmra.mxu0 %v907
      %v1143 = vpop.f32.mrf.mxu0
      %v1144 = vadd.f32 %v945, %v1143
      %v1145 = vpop.f32.mrf.mxu0
      %v1146 = vadd.f32 %v946, %v1145
      %v1147 = vpop.f32.mrf.mxu0
      %v1148 = vpop.f32.mrf.mxu0
      %1149 = vdwg.mxu0
      %1150 = vmatprep.subr.bf16.mxu0 %v1076
      %1151 = vmatpush1.bf16.msra.mxu0 %v1075
      %1152 = vmatprep.subr.bf16.mxu0 %v1072
      %1153 = vmatpush1.bf16.msra.mxu0 %v1071
      %1154 = vmatprep.subr.bf16.mxu0 %v1068
      %1155 = vmatpush1.bf16.msra.mxu0 %v1067
      %1156 = vmatprep.subr.bf16.mxu0 %v1064
      %1157 = vmatpush1.bf16.msra.mxu0 %v1063
      %1158 = vmatprep.subr.bf16.mxu0 %v1060
      %1159 = vmatpush1.bf16.msra.mxu0 %v1059
      %1160 = vmatprep.subr.bf16.mxu0 %v1056
      %1161 = vmatpush1.bf16.msra.mxu0 %v1055
      %1162 = vmatprep.subr.bf16.mxu0 %v1052
      %1163 = vmatpush1.bf16.msra.mxu0 %v1051
      %1164 = vmatprep.subr.bf16.mxu0 %v1048
      %1165 = vmatpush1.bf16.msra.mxu0 %v1047
      %1166 = vmatprep.subr.bf16.mxu0 0
      %1167 = vmatpush2.bf16.msra.mxu0 0
      %1168 = vmatprep.subr.bf16.mxu0 0
      %1169 = vmatpush2.bf16.msra.mxu0 0
      %1170 = vmatprep.subr.bf16.mxu0 0
      %1171 = vmatpush2.bf16.msra.mxu0 0
      %1172 = vmatprep.subr.bf16.mxu0 0
      %1173 = vmatpush2.bf16.msra.mxu0 0
      %1174 = vmatprep.subr.bf16.mxu0 0
      %1175 = vmatpush2.bf16.msra.mxu0 0
      %1176 = vmatprep.subr.bf16.mxu0 0
      %1177 = vmatpush2.bf16.msra.mxu0 0
      %1178 = vmatprep.subr.bf16.mxu0 0
      %1179 = vmatpush2.bf16.msra.mxu0 0
      %1180 = vmatprep.subr.bf16.mxu0 0
      %1181 = vmatpush2.bf16.msra.mxu0 0
      %1182 = vmatprep.mubr.bf16.mxu0 0
      %1183 = vmatmul.mubr.bf16.gmra.mxu0 %v907
      %v1184 = vpop.f32.mrf.mxu0
      %v1185 = vadd.f32 %v947, %v1184
      %v1186 = vpop.f32.mrf.mxu0
      %v1187 = vadd.f32 %v948, %v1186
      %v1188 = vpop.f32.mrf.mxu0
      %v1189 = vpop.f32.mrf.mxu0
      %1190 = vdwg.mxu0
      %v1191 = vstv %s895
      %vm1192 = vcmp.lt.s32.totalorder %v1191, %v81
      %v1193 = vxor.u32 %v1144, 2147483648
      %v1194 = vmul.f32 %v1193, 1.442695
      %v1195 = vpow.pop %v1194
      %v1196 = vadd.f32 %v1195, 1.0
      %v1197 = vrcp.pop %v1196
      %v1198 = vmul.f32 1.0, %v1197
      %v1199 = vxor.u32 %v1146, 2147483648
      %v1200 = vmul.f32 %v1199, 1.442695
      %v1201 = vpow.pop %v1200
      %v1202 = vadd.f32 %v1201, 1.0
      %v1203 = vrcp.pop %v1202
      %v1204 = vmul.f32 1.0, %v1203
      %v1205 = vtanh.pop %v1185
      %v1206 = vxor.u32 %v1187, 2147483648
      %v1207 = vmul.f32 %v1206, 1.442695
      %v1208 = vpow.pop %v1207
      %v1209 = vadd.f32 %v1208, 1.0
      %v1210 = vrcp.pop %v1209
      %v1211 = vmul.f32 1.0, %v1210
      %v1212 = vmul.f32 %v1204, %v901
      %v1213 = vmul.f32 %v1198, %v1205
      %v1214 = vadd.f32 %v1212, %v1213
      %v1215 = vtanh.pop %v1214
      %v1216 = vmul.f32 %v1211, %v1215
      %v1217 = vsel %vm1192, 1, 0
      %1218 = vset.pattern.permute.xlu0 0
      %1219 = vperm.xlu0 %1218, %v1217
      %v1220 = vpop.permute.xlu0 %1219
      %vm1221 = vcmp.eq.s32.totalorder %v1220, 1
      %v1222 = vsel %vm1221, %v1216, %v900
      %v1223 = vsel %vm1221, %v1214, %v901
      %v1224 = vsel %vm1221, %v1216, 0.0
      %s1225 = smul.u32 %s895, 2
      %s1226 = smul.addr %s1225, 8
      %s1227 = scalar_lea.vmem %s9, %s1226
      %1228 = vst [vmem:[%s1227] sm:$0xff] %v1224
      %s1229 = smul.u32 %s905, 8
      %v1230 = vpack.c.bf16 %v902, %v902
      %v1231 = vld [vmem:[#allocation10] sm:$0xff]
      %v1232 = vld [vmem:[#allocation10 + $0x8] sm:$0xff]
      %v1233 = vld [vmem:[#allocation10 + $0x10] sm:$0xff]
      %v1234 = vld [vmem:[#allocation10 + $0x18] sm:$0xff]
      %v1235 = vld [vmem:[#allocation10 + $0x20] sm:$0xff]
      %v1236 = vld [vmem:[#allocation10 + $0x28] sm:$0xff]
      %v1237 = vld [vmem:[#allocation10 + $0x30] sm:$0xff]
      %v1238 = vld [vmem:[#allocation10 + $0x38] sm:$0xff]
      %v1239 = vld [vmem:[#allocation10 + $0x40] sm:$0xff]
      %v1240 = vld [vmem:[#allocation10 + $0x48] sm:$0xff]
      %v1241 = vld [vmem:[#allocation10 + $0x50] sm:$0xff]
      %v1242 = vld [vmem:[#allocation10 + $0x58] sm:$0xff]
      %v1243 = vld [vmem:[#allocation10 + $0x60] sm:$0xff]
      %v1244 = vld [vmem:[#allocation10 + $0x68] sm:$0xff]
      %v1245 = vld [vmem:[#allocation10 + $0x70] sm:$0xff]
      %v1246 = vld [vmem:[#allocation10 + $0x78] sm:$0xff]
      %v1247 = vld [vmem:[#allocation10 + $0x80] sm:$0xff]
      %v1248 = vld [vmem:[#allocation10 + $0x88] sm:$0xff]
      %v1249 = vld [vmem:[#allocation10 + $0x90] sm:$0xff]
      %v1250 = vld [vmem:[#allocation10 + $0x98] sm:$0xff]
      %v1251 = vld [vmem:[#allocation10 + $0xa0] sm:$0xff]
      %v1252 = vld [vmem:[#allocation10 + $0xa8] sm:$0xff]
      %v1253 = vld [vmem:[#allocation10 + $0xb0] sm:$0xff]
      %v1254 = vld [vmem:[#allocation10 + $0xb8] sm:$0xff]
      %v1255 = vld [vmem:[#allocation10 + $0xc0] sm:$0xff]
      %v1256 = vld [vmem:[#allocation10 + $0xc8] sm:$0xff]
      %v1257 = vld [vmem:[#allocation10 + $0xd0] sm:$0xff]
      %v1258 = vld [vmem:[#allocation10 + $0xd8] sm:$0xff]
      %v1259 = vld [vmem:[#allocation10 + $0xe0] sm:$0xff]
      %v1260 = vld [vmem:[#allocation10 + $0xe8] sm:$0xff]
      %v1261 = vld [vmem:[#allocation10 + $0xf0] sm:$0xff]
      %v1262 = vld [vmem:[#allocation10 + $0xf8] sm:$0xff]
      %s1263 = sshra.s32 %s1229, 3
      %s1264 = sand.u32 %s1229, 7
      %s1265 = smul.u32 %s1263, 4
      %s1266 = smul.addr %s1265, 8
      %s1267 = scalar_lea.vmem [#allocation3], %s1266
      %v1268 = vld [vmem:[%s1267] sm:$0xff]
      %v1269 = vld [vmem:[%s1267 + $0x8] sm:$0xff]
      %v1270 = vld [vmem:[%s1267 + $0x10] sm:$0xff]
      %v1271 = vld [vmem:[%s1267 + $0x18] sm:$0xff]
      %v1304 = vunpack.c.l.b16 %v1231
      %v1305 = vunpack.c.h.b16 %v1231
      %v1306 = vunpack.c.l.b16 %v1232
      %v1307 = vunpack.c.h.b16 %v1232
      %v1308 = vunpack.c.l.b16 %v1233
      %v1309 = vunpack.c.h.b16 %v1233
      %v1310 = vunpack.c.l.b16 %v1234
      %v1311 = vunpack.c.h.b16 %v1234
      %v1312 = vunpack.c.l.b16 %v1235
      %v1313 = vunpack.c.h.b16 %v1235
      %v1314 = vunpack.c.l.b16 %v1236
      %v1315 = vunpack.c.h.b16 %v1236
      %v1316 = vunpack.c.l.b16 %v1237
      %v1317 = vunpack.c.h.b16 %v1237
      %v1318 = vunpack.c.l.b16 %v1238
      %v1319 = vunpack.c.h.b16 %v1238
      %v1320 = vunpack.c.l.b16 %v1239
      %v1321 = vunpack.c.h.b16 %v1239
      %v1322 = vunpack.c.l.b16 %v1240
      %v1323 = vunpack.c.h.b16 %v1240
      %v1324 = vunpack.c.l.b16 %v1241
      %v1325 = vunpack.c.h.b16 %v1241
      %v1326 = vunpack.c.l.b16 %v1242
      %v1327 = vunpack.c.h.b16 %v1242
      %v1328 = vunpack.c.l.b16 %v1243
      %v1329 = vunpack.c.h.b16 %v1243
      %v1330 = vunpack.c.l.b16 %v1244
      %v1331 = vunpack.c.h.b16 %v1244
      %v1332 = vunpack.c.l.b16 %v1245
      %v1333 = vunpack.c.h.b16 %v1245
      %v1334 = vunpack.c.l.b16 %v1246
      %v1335 = vunpack.c.h.b16 %v1246
      %v1336 = vunpack.c.l.b16 %v1247
      %v1337 = vunpack.c.h.b16 %v1247
      %v1338 = vunpack.c.l.b16 %v1248
      %v1339 = vunpack.c.h.b16 %v1248
      %v1340 = vunpack.c.l.b16 %v1249
      %v1341 = vunpack.c.h.b16 %v1249
      %v1342 = vunpack.c.l.b16 %v1250
      %v1343 = vunpack.c.h.b16 %v1250
      %v1344 = vunpack.c.l.b16 %v1251
      %v1345 = vunpack.c.h.b16 %v1251
      %v1346 = vunpack.c.l.b16 %v1252
      %v1347 = vunpack.c.h.b16 %v1252
      %v1348 = vunpack.c.l.b16 %v1253
      %v1349 = vunpack.c.h.b16 %v1253
      %v1350 = vunpack.c.l.b16 %v1254
      %v1351 = vunpack.c.h.b16 %v1254
      %v1352 = vunpack.c.l.b16 %v1255
      %v1353 = vunpack.c.h.b16 %v1255
      %v1354 = vunpack.c.l.b16 %v1256
      %v1355 = vunpack.c.h.b16 %v1256
      %v1356 = vunpack.c.l.b16 %v1257
      %v1357 = vunpack.c.h.b16 %v1257
      %v1358 = vunpack.c.l.b16 %v1258
      %v1359 = vunpack.c.h.b16 %v1258
      %v1360 = vunpack.c.l.b16 %v1259
      %v1361 = vunpack.c.h.b16 %v1259
      %v1362 = vunpack.c.l.b16 %v1260
      %v1363 = vunpack.c.h.b16 %v1260
      %v1364 = vunpack.c.l.b16 %v1261
      %v1365 = vunpack.c.h.b16 %v1261
      %v1366 = vunpack.c.l.b16 %v1262
      %v1367 = vunpack.c.h.b16 %v1262
      %v1368 = vpack.c.b16 %v1308, %v1304
      %v1369 = vpack.c.b16 %v1309, %v1305
      %v1370 = vpack.c.b16 %v1310, %v1306
      %v1371 = vpack.c.b16 %v1311, %v1307
      %v1372 = vpack.c.b16 %v1316, %v1312
      %v1373 = vpack.c.b16 %v1317, %v1313
      %v1374 = vpack.c.b16 %v1318, %v1314
      %v1375 = vpack.c.b16 %v1319, %v1315
      %v1376 = vpack.c.b16 %v1324, %v1320
      %v1377 = vpack.c.b16 %v1325, %v1321
      %v1378 = vpack.c.b16 %v1326, %v1322
      %v1379 = vpack.c.b16 %v1327, %v1323
      %v1380 = vpack.c.b16 %v1332, %v1328
      %v1381 = vpack.c.b16 %v1333, %v1329
      %v1382 = vpack.c.b16 %v1334, %v1330
      %v1383 = vpack.c.b16 %v1335, %v1331
      %v1384 = vpack.c.b16 %v1340, %v1336
      %v1385 = vpack.c.b16 %v1341, %v1337
      %v1386 = vpack.c.b16 %v1342, %v1338
      %v1387 = vpack.c.b16 %v1343, %v1339
      %v1388 = vpack.c.b16 %v1348, %v1344
      %v1389 = vpack.c.b16 %v1349, %v1345
      %v1390 = vpack.c.b16 %v1350, %v1346
      %v1391 = vpack.c.b16 %v1351, %v1347
      %v1392 = vpack.c.b16 %v1356, %v1352
      %v1393 = vpack.c.b16 %v1357, %v1353
      %v1394 = vpack.c.b16 %v1358, %v1354
      %v1395 = vpack.c.b16 %v1359, %v1355
      %v1396 = vpack.c.b16 %v1364, %v1360
      %v1397 = vpack.c.b16 %v1365, %v1361
      %v1398 = vpack.c.b16 %v1366, %v1362
      %v1399 = vpack.c.b16 %v1367, %v1363
      %1432 = vmatprep.subr.bf16.mxu0 %v1397
      %1433 = vmatpush1.bf16.msra.mxu0 %v1396
      %1434 = vmatprep.subr.bf16.mxu0 %v1393
      %1435 = vmatpush1.bf16.msra.mxu0 %v1392
      %1436 = vmatprep.subr.bf16.mxu0 %v1389
      %1437 = vmatpush1.bf16.msra.mxu0 %v1388
      %1438 = vmatprep.subr.bf16.mxu0 %v1385
      %1439 = vmatpush1.bf16.msra.mxu0 %v1384
      %1440 = vmatprep.subr.bf16.mxu0 %v1381
      %1441 = vmatpush1.bf16.msra.mxu0 %v1380
      %1442 = vmatprep.subr.bf16.mxu0 %v1377
      %1443 = vmatpush1.bf16.msra.mxu0 %v1376
      %1444 = vmatprep.subr.bf16.mxu0 %v1373
      %1445 = vmatpush1.bf16.msra.mxu0 %v1372
      %1446 = vmatprep.subr.bf16.mxu0 %v1369
      %1447 = vmatpush1.bf16.msra.mxu0 %v1368
      %1448 = vmatprep.subr.bf16.mxu0 0
      %1449 = vmatpush2.bf16.msra.mxu0 0
      %1450 = vmatprep.subr.bf16.mxu0 0
      %1451 = vmatpush2.bf16.msra.mxu0 0
      %1452 = vmatprep.subr.bf16.mxu0 0
      %1453 = vmatpush2.bf16.msra.mxu0 0
      %1454 = vmatprep.subr.bf16.mxu0 0
      %1455 = vmatpush2.bf16.msra.mxu0 0
      %1456 = vmatprep.subr.bf16.mxu0 0
      %1457 = vmatpush2.bf16.msra.mxu0 0
      %1458 = vmatprep.subr.bf16.mxu0 0
      %1459 = vmatpush2.bf16.msra.mxu0 0
      %1460 = vmatprep.subr.bf16.mxu0 0
      %1461 = vmatpush2.bf16.msra.mxu0 0
      %1462 = vmatprep.subr.bf16.mxu0 0
      %1463 = vmatpush2.bf16.msra.mxu0 0
      %1464 = vmatprep.mubr.bf16.mxu0 0
      %1465 = vmatmul.mubr.bf16.gmra.mxu0 %v1230
      %v1466 = vpop.f32.mrf.mxu0
      %v1467 = vadd.f32 %v1268, %v1466
      %v1468 = vpop.f32.mrf.mxu0
      %v1469 = vadd.f32 %v1269, %v1468
      %v1470 = vpop.f32.mrf.mxu0
      %v1471 = vpop.f32.mrf.mxu0
      %1472 = vdwg.mxu0
      %1473 = vmatprep.subr.bf16.mxu0 %v1399
      %1474 = vmatpush1.bf16.msra.mxu0 %v1398
      %1475 = vmatprep.subr.bf16.mxu0 %v1395
      %1476 = vmatpush1.bf16.msra.mxu0 %v1394
      %1477 = vmatprep.subr.bf16.mxu0 %v1391
      %1478 = vmatpush1.bf16.msra.mxu0 %v1390
      %1479 = vmatprep.subr.bf16.mxu0 %v1387
      %1480 = vmatpush1.bf16.msra.mxu0 %v1386
      %1481 = vmatprep.subr.bf16.mxu0 %v1383
      %1482 = vmatpush1.bf16.msra.mxu0 %v1382
      %1483 = vmatprep.subr.bf16.mxu0 %v1379
      %1484 = vmatpush1.bf16.msra.mxu0 %v1378
      %1485 = vmatprep.subr.bf16.mxu0 %v1375
      %1486 = vmatpush1.bf16.msra.mxu0 %v1374
      %1487 = vmatprep.subr.bf16.mxu0 %v1371
      %1488 = vmatpush1.bf16.msra.mxu0 %v1370
      %1489 = vmatprep.subr.bf16.mxu0 0
      %1490 = vmatpush2.bf16.msra.mxu0 0
      %1491 = vmatprep.subr.bf16.mxu0 0
      %1492 = vmatpush2.bf16.msra.mxu0 0
      %1493 = vmatprep.subr.bf16.mxu0 0
      %1494 = vmatpush2.bf16.msra.mxu0 0
      %1495 = vmatprep.subr.bf16.mxu0 0
      %1496 = vmatpush2.bf16.msra.mxu0 0
      %1497 = vmatprep.subr.bf16.mxu0 0
      %1498 = vmatpush2.bf16.msra.mxu0 0
      %1499 = vmatprep.subr.bf16.mxu0 0
      %1500 = vmatpush2.bf16.msra.mxu0 0
      %1501 = vmatprep.subr.bf16.mxu0 0
      %1502 = vmatpush2.bf16.msra.mxu0 0
      %1503 = vmatprep.subr.bf16.mxu0 0
      %1504 = vmatpush2.bf16.msra.mxu0 0
      %1505 = vmatprep.mubr.bf16.mxu0 0
      %1506 = vmatmul.mubr.bf16.gmra.mxu0 %v1230
      %v1507 = vpop.f32.mrf.mxu0
      %v1508 = vadd.f32 %v1270, %v1507
      %v1509 = vpop.f32.mrf.mxu0
      %v1510 = vadd.f32 %v1271, %v1509
      %v1511 = vpop.f32.mrf.mxu0
      %v1512 = vpop.f32.mrf.mxu0
      %1513 = vdwg.mxu0
      %v1514 = vstv %s905
      %vm1515 = vcmp.lt.s32.totalorder %v1514, %v81
      %v1516 = vxor.u32 %v1467, 2147483648
      %v1517 = vmul.f32 %v1516, 1.442695
      %v1518 = vpow.pop %v1517
      %v1519 = vadd.f32 %v1518, 1.0
      %v1520 = vrcp.pop %v1519
      %v1521 = vmul.f32 1.0, %v1520
      %v1522 = vxor.u32 %v1469, 2147483648
      %v1523 = vmul.f32 %v1522, 1.442695
      %v1524 = vpow.pop %v1523
      %v1525 = vadd.f32 %v1524, 1.0
      %v1526 = vrcp.pop %v1525
      %v1527 = vmul.f32 1.0, %v1526
      %v1528 = vtanh.pop %v1508
      %v1529 = vxor.u32 %v1510, 2147483648
      %v1530 = vmul.f32 %v1529, 1.442695
      %v1531 = vpow.pop %v1530
      %v1532 = vadd.f32 %v1531, 1.0
      %v1533 = vrcp.pop %v1532
      %v1534 = vmul.f32 1.0, %v1533
      %v1535 = vmul.f32 %v1527, %v903
      %v1536 = vmul.f32 %v1521, %v1528
      %v1537 = vadd.f32 %v1535, %v1536
      %v1538 = vtanh.pop %v1537
      %v1539 = vmul.f32 %v1534, %v1538
      %v1540 = vsel %vm1515, 1, 0
      %1541 = vset.pattern.permute.xlu0 0
      %1542 = vperm.xlu0 %1541, %v1540
      %v1543 = vpop.permute.xlu0 %1542
      %vm1544 = vcmp.eq.s32.totalorder %v1543, 1
      %v1545 = vsel %vm1544, %v1539, %v902
      %v1546 = vsel %vm1544, %v1537, %v903
      %v1547 = vsel %vm1544, %v1539, 0.0
      %s1548 = smul.u32 %s905, 2
      %s1549 = smul.addr %s1548, 8
      %s1550 = scalar_lea.vmem %s9, %s1549
      %1551 = vst [vmem:[%s1550 + $0x8] sm:$0xff] %v1547
    $region54: #{model_forward.2} parent=1 // loop_footer
      %s897 = sadd.s32 %s895, 1
    $region55: #{model_forward.2} parent=1 // loop_footer_branch
      %894 = sbr.rel target = $region51
    $region56: #{model_forward.2} parent=1 // loop_exit
      _
    %1552 = vst [vmem:[#allocation11] sm:$0xff] %v900
    %1553 = vst [vmem:[#allocation12] sm:$0xff] %v902
    // Predicated region
    $region57: #{model_forward.2} parent=1 // pred_check
      _
    $region58: #{model_forward.2} parent=1 // pred_check_branch
      %1555 = sbr.rel (0) target = $region60
    $region59: #{model_forward.2} parent=1 // pred_region
      _
    $region60: #{model_forward.2} parent=1 // pred_fallthru
      _
    // Predicated region
    $region61: #{model_forward.2} parent=1 // pred_check
      _
    $region62: #{model_forward.2} parent=1 // pred_check_branch
      %1557 = sbr.rel (0) target = $region64
    $region63: #{model_forward.2} parent=1 // pred_region
      %s1559 = ssub.s32 128, 128
      %1560 = vsyncadd [#allocation7], %s1559
      %s1562 = sshll.u32 [#allocation11], 4
      %s1563 = int_to_ptr.vmem [resolvable:$true] %s1562
      %1565 = dma.vmem_to_hbm [thread:$0]  %s1563, 128, %s10, [#allocation7]
    $region64: #{model_forward.2} parent=1 // pred_fallthru
      _
    // Predicated region
    $region65: #{model_forward.2} parent=1 // pred_check
      _
    $region66: #{model_forward.2} parent=1 // pred_check_branch
      %1567 = sbr.rel (0) target = $region68
    $region67: #{model_forward.2} parent=1 // pred_region
      %s1569 = ssub.s32 128, 128
      %1570 = vsyncadd [#allocation13], %s1569
      %s1572 = sshll.u32 [#allocation12], 4
      %s1573 = int_to_ptr.vmem [resolvable:$true] %s1572
      %1575 = dma.vmem_to_hbm [thread:$0]  %s1573, 128, %s11, [#allocation13]
    $region68: #{model_forward.2} parent=1 // pred_fallthru
      _
    // Predicated region
    $region69: #{model_forward.2} parent=1 // pred_check
      _
    $region70: #{model_forward.2} parent=1 // pred_check_branch
      %1577 = sbr.rel (0) target = $region72
    $region71: #{model_forward.2} parent=1 // pred_region
      _
    $region72: #{model_forward.2} parent=1 // pred_fallthru
      _
    // Predicated region
    $region73: #{model_forward.2} parent=1 // pred_check
      _
    $region74: #{model_forward.2} parent=1 // pred_check_branch
      %1579 = sbr.rel (0) target = $region76
    $region75: #{model_forward.2} parent=1 // pred_region
      %1580 = dma.done [#allocation7], 128
    $region76: #{model_forward.2} parent=1 // pred_fallthru
      _
    // Predicated region
    $region77: #{model_forward.2} parent=1 // pred_check
      _
    $region78: #{model_forward.2} parent=1 // pred_check_branch
      %1582 = sbr.rel (0) target = $region80
    $region79: #{model_forward.2} parent=1 // pred_region
      %1583 = dma.done [#allocation13], 128
    $region80: #{model_forward.2} parent=1 // pred_fallthru
      _
    %1584 = vsyncpa [#allocation6], 1
    %1585 = vsyncpa [#allocation9], 1
    %1586 = vsyncpa [#allocation7], 1
    %1587 = vsyncpa [#allocation13], 1

// kernel: model_forward.3
$region0: #{model_forward.3}
  #allocation0 [shape = 'u32[]', space=smem, size = 0x4, offset = 0x4, fixed_abs, tag = 'smem constant byte address 0x4 - core index']
  #allocation1 [shape = 'u32[144,128]{1,0:T(1,128)}', space=vmem, size = 0x12000, scoped, tag = 'internal scratch']
  #allocation2 [shape = 'f32[64,512]{1,0:T(8,128)}', space=vmem, size = 0x20000, scoped, tag = 'scratch operand']
  #allocation3 [shape = 'f32[64,512]{1,0:T(8,128)}', space=vmem, size = 0x20000, scoped, tag = 'scratch operand']
  #allocation4 [shape = 's32[1]{0:T(128)S(6)}', space=smem, size = 0x200, scoped, tag = 'scoped memory for model_forward.3']
  %s0 = inlined_call_operand.<no memory space> [shape: s32[1], index: 0, kind: input, shape index: {}]
  %s1 = inlined_call_operand.vmem [shape: s32[8,1], index: 1, kind: input, shape index: {}]
  %s2 = inlined_call_operand.vmem [shape: f32[8,8,256], index: 2, kind: input, shape index: {}]
  %s3 = inlined_call_operand.vmem [shape: bf16[256,512], index: 3, kind: input, shape index: {}]
  %s4 = inlined_call_operand.hbm [shape: bf16[128,512], index: 4, kind: input, shape index: {}]
  %s5 = inlined_call_operand.vmem [shape: f32[1,512], index: 5, kind: input, shape index: {}]
  %s6 = inlined_call_operand.vmem [shape: bf16[256,512], index: 6, kind: input, shape index: {}]
  %s7 = inlined_call_operand.hbm [shape: bf16[128,512], index: 7, kind: input, shape index: {}]
  %s8 = inlined_call_operand.vmem [shape: f32[1,512], index: 8, kind: input, shape index: {}]
  %s9 = inlined_call_operand.hbm [shape: f32[8,8,256], index: 9, kind: output, shape index: {0}]
  %s10 = inlined_call_operand.vmem [shape: f32[8,128], index: 10, kind: output, shape index: {1}]
  %s11 = inlined_call_operand.vmem [shape: f32[8,128], index: 11, kind: output, shape index: {2}]
  %12 = xla_tuple %s9, %s10, %s11
  %s13 = sld [smem:[#allocation0]]
  $region77: #{model_forward.3} parent=0
    _
  %s15 = ssub.s32 1, %s13
  %s16 = scalar_select 0, %s15, %s13
  %17 = sst [smem:[#allocation4]] %s0
  $region1: #{model_forward.3} parent=0
    #allocation5 [shape = 'u8[131072]{0}', space=vmem, size = 0x20000, scoped, tag = 'input window, operand 4, single buffered']
    #allocation6 [shape = 's32[1]{0}', space=sflag, size = 0x4, scoped, tag = 'scoped memory for model_forward.3']
    #allocation7 [shape = 's32[1]{0}', space=sflag, size = 0x4, scoped, tag = 'scoped memory for model_forward.3']
    #allocation8 [shape = 'u8[131072]{0}', space=vmem, size = 0x20000, scoped, tag = 'input window, operand 7, single buffered']
    #allocation9 [shape = 's32[1]{0}', space=sflag, size = 0x4, scoped, tag = 'scoped memory for model_forward.3']
    #allocation10 [shape = 'u8[65536]{0}', space=vmem, size = 0x10000, scoped, tag = 'output window, operand 0, single buffered']
    %18 = vsyncpa [#allocation6], 0
    %19 = vsyncpa [#allocation9], 0
    %20 = vsyncpa [#allocation7], 0
    // Predicated region
    $region2: #{model_forward.3} parent=1 // pred_check
      _
    $region3: #{model_forward.3} parent=1 // pred_check_branch
      %22 = sbr.rel (0) target = $region5
    $region4: #{model_forward.3} parent=1 // pred_region
      _
    $region5: #{model_forward.3} parent=1 // pred_fallthru
      _
    // Predicated region
    $region6: #{model_forward.3} parent=1 // pred_check
      _
    $region7: #{model_forward.3} parent=1 // pred_check_branch
      %24 = sbr.rel (0) target = $region9
    $region8: #{model_forward.3} parent=1 // pred_region
      _
    $region9: #{model_forward.3} parent=1 // pred_fallthru
      _
    // Predicated region
    $region10: #{model_forward.3} parent=1 // pred_check
      _
    $region11: #{model_forward.3} parent=1 // pred_check_branch
      %26 = sbr.rel (0) target = $region13
    $region12: #{model_forward.3} parent=1 // pred_region
      _
    $region13: #{model_forward.3} parent=1 // pred_fallthru
      _
    // Predicated region
    $region14: #{model_forward.3} parent=1 // pred_check
      _
    $region15: #{model_forward.3} parent=1 // pred_check_branch
      %28 = sbr.rel (0) target = $region17
    $region16: #{model_forward.3} parent=1 // pred_region
      _
    $region17: #{model_forward.3} parent=1 // pred_fallthru
      _
    // Predicated region
    $region18: #{model_forward.3} parent=1 // pred_check
      _
    $region19: #{model_forward.3} parent=1 // pred_check_branch
      %30 = sbr.rel (0) target = $region21
    $region20: #{model_forward.3} parent=1 // pred_region
      %s32 = ssub.s32 4096, 4096
      %33 = vsyncadd [#allocation6], %s32
      %s34 = sshll.u32 [#allocation5], 4
      %s35 = int_to_ptr.vmem [resolvable:$true] %s34
      %40 = dma.hbm_to_vmem [thread:$0]  %s4, 4096, %s35, [#allocation6], 256, 256, 16
    $region21: #{model_forward.3} parent=1 // pred_fallthru
      _
    // Predicated region
    $region22: #{model_forward.3} parent=1 // pred_check
      _
    $region23: #{model_forward.3} parent=1 // pred_check_branch
      %42 = sbr.rel (0) target = $region25
    $region24: #{model_forward.3} parent=1 // pred_region
      _
    $region25: #{model_forward.3} parent=1 // pred_fallthru
      _
    // Predicated region
    $region26: #{model_forward.3} parent=1 // pred_check
      _
    $region27: #{model_forward.3} parent=1 // pred_check_branch
      %44 = sbr.rel (0) target = $region29
    $region28: #{model_forward.3} parent=1 // pred_region
      _
    $region29: #{model_forward.3} parent=1 // pred_fallthru
      _
    // Predicated region
    $region30: #{model_forward.3} parent=1 // pred_check
      _
    $region31: #{model_forward.3} parent=1 // pred_check_branch
      %46 = sbr.rel (0) target = $region33
    $region32: #{model_forward.3} parent=1 // pred_region
      %s48 = ssub.s32 4096, 4096
      %49 = vsyncadd [#allocation9], %s48
      %s50 = sshll.u32 [#allocation8], 4
      %s51 = int_to_ptr.vmem [resolvable:$true] %s50
      %56 = dma.hbm_to_vmem [thread:$0]  %s7, 4096, %s51, [#allocation9], 256, 256, 16
    $region33: #{model_forward.3} parent=1 // pred_fallthru
      _
    // Predicated region
    $region34: #{model_forward.3} parent=1 // pred_check
      _
    $region35: #{model_forward.3} parent=1 // pred_check_branch
      %58 = sbr.rel (0) target = $region37
    $region36: #{model_forward.3} parent=1 // pred_region
      _
    $region37: #{model_forward.3} parent=1 // pred_fallthru
      _
    // Predicated region
    $region38: #{model_forward.3} parent=1 // pred_check
      _
    $region39: #{model_forward.3} parent=1 // pred_check_branch
      %60 = sbr.rel (0) target = $region41
    $region40: #{model_forward.3} parent=1 // pred_region
      %61 = dma.done [#allocation6], 4096
    $region41: #{model_forward.3} parent=1 // pred_fallthru
      _
    // Predicated region
    $region42: #{model_forward.3} parent=1 // pred_check
      _
    $region43: #{model_forward.3} parent=1 // pred_check_branch
      %63 = sbr.rel (0) target = $region45
    $region44: #{model_forward.3} parent=1 // pred_region
      %64 = dma.done [#allocation9], 4096
    $region45: #{model_forward.3} parent=1 // pred_fallthru
      _
    %s66 = sld [smem:[#allocation4]]
    %v67 = vld [vmem:[%s1] sm:$0xff]
    %v68 = vld [vmem:[%s2] sm:$0xff]
    %v69 = vld [vmem:[%s2 + $0x8] sm:$0xff]
    %v70 = vld [vmem:[%s2 + $0x10] sm:$0xff]
    %v71 = vld [vmem:[%s2 + $0x18] sm:$0xff]
    %v72 = vld [vmem:[%s2 + $0x20] sm:$0xff]
    %v73 = vld [vmem:[%s2 + $0x28] sm:$0xff]
    %v74 = vld [vmem:[%s2 + $0x30] sm:$0xff]
    %v75 = vld [vmem:[%s2 + $0x38] sm:$0xff]
    %v76 = vld [vmem:[%s2 + $0x40] sm:$0xff]
    %v77 = vld [vmem:[%s2 + $0x48] sm:$0xff]
    %v78 = vld [vmem:[%s2 + $0x50] sm:$0xff]
    %v79 = vld [vmem:[%s2 + $0x58] sm:$0xff]
    %v80 = vld [vmem:[%s2 + $0x60] sm:$0xff]
    %v81 = vld [vmem:[%s2 + $0x68] sm:$0xff]
    %v82 = vld [vmem:[%s2 + $0x70] sm:$0xff]
    %v83 = vld [vmem:[%s2 + $0x78] sm:$0xff]
    %v84 = vpack.c.bf16 %v70, %v68
    %v85 = vpack.c.bf16 %v71, %v69
    %v86 = vpack.c.bf16 %v74, %v72
    %v87 = vpack.c.bf16 %v75, %v73
    %v88 = vpack.c.bf16 %v78, %v76
    %v89 = vpack.c.bf16 %v79, %v77
    %v90 = vpack.c.bf16 %v82, %v80
    %v91 = vpack.c.bf16 %v83, %v81
    %v92 = vld [vmem:[%s3] sm:$0xff]
    %v93 = vld [vmem:[%s3 + $0x8] sm:$0xff]
    %v94 = vld [vmem:[%s3 + $0x10] sm:$0xff]
    %v95 = vld [vmem:[%s3 + $0x18] sm:$0xff]
    %v96 = vld [vmem:[%s3 + $0x20] sm:$0xff]
    %v97 = vld [vmem:[%s3 + $0x28] sm:$0xff]
    %v98 = vld [vmem:[%s3 + $0x30] sm:$0xff]
    %v99 = vld [vmem:[%s3 + $0x38] sm:$0xff]
    %v100 = vld [vmem:[%s3 + $0x40] sm:$0xff]
    %v101 = vld [vmem:[%s3 + $0x48] sm:$0xff]
    %v102 = vld [vmem:[%s3 + $0x50] sm:$0xff]
    %v103 = vld [vmem:[%s3 + $0x58] sm:$0xff]
    %v104 = vld [vmem:[%s3 + $0x60] sm:$0xff]
    %v105 = vld [vmem:[%s3 + $0x68] sm:$0xff]
    %v106 = vld [vmem:[%s3 + $0x70] sm:$0xff]
    %v107 = vld [vmem:[%s3 + $0x78] sm:$0xff]
    %v108 = vld [vmem:[%s3 + $0x80] sm:$0xff]
    %v109 = vld [vmem:[%s3 + $0x88] sm:$0xff]
    %v110 = vld [vmem:[%s3 + $0x90] sm:$0xff]
    %v111 = vld [vmem:[%s3 + $0x98] sm:$0xff]
    %v112 = vld [vmem:[%s3 + $0xa0] sm:$0xff]
    %v113 = vld [vmem:[%s3 + $0xa8] sm:$0xff]
    %v114 = vld [vmem:[%s3 + $0xb0] sm:$0xff]
    %v115 = vld [vmem:[%s3 + $0xb8] sm:$0xff]
    %v116 = vld [vmem:[%s3 + $0xc0] sm:$0xff]
    %v117 = vld [vmem:[%s3 + $0xc8] sm:$0xff]
    %v118 = vld [vmem:[%s3 + $0xd0] sm:$0xff]
    %v119 = vld [vmem:[%s3 + $0xd8] sm:$0xff]
    %v120 = vld [vmem:[%s3 + $0xe0] sm:$0xff]
    %v121 = vld [vmem:[%s3 + $0xe8] sm:$0xff]
    %v122 = vld [vmem:[%s3 + $0xf0] sm:$0xff]
    %v123 = vld [vmem:[%s3 + $0xf8] sm:$0xff]
    %v124 = vld [vmem:[%s3 + $0x100] sm:$0xff]
    %v125 = vld [vmem:[%s3 + $0x108] sm:$0xff]
    %v126 = vld [vmem:[%s3 + $0x110] sm:$0xff]
    %v127 = vld [vmem:[%s3 + $0x118] sm:$0xff]
    %v128 = vld [vmem:[%s3 + $0x120] sm:$0xff]
    %v129 = vld [vmem:[%s3 + $0x128] sm:$0xff]
    %v130 = vld [vmem:[%s3 + $0x130] sm:$0xff]
    %v131 = vld [vmem:[%s3 + $0x138] sm:$0xff]
    %v132 = vld [vmem:[%s3 + $0x140] sm:$0xff]
    %v133 = vld [vmem:[%s3 + $0x148] sm:$0xff]
    %v134 = vld [vmem:[%s3 + $0x150] sm:$0xff]
    %v135 = vld [vmem:[%s3 + $0x158] sm:$0xff]
    %v136 = vld [vmem:[%s3 + $0x160] sm:$0xff]
    %v137 = vld [vmem:[%s3 + $0x168] sm:$0xff]
    %v138 = vld [vmem:[%s3 + $0x170] sm:$0xff]
    %v139 = vld [vmem:[%s3 + $0x178] sm:$0xff]
    %v140 = vld [vmem:[%s3 + $0x180] sm:$0xff]
    %v141 = vld [vmem:[%s3 + $0x188] sm:$0xff]
    %v142 = vld [vmem:[%s3 + $0x190] sm:$0xff]
    %v143 = vld [vmem:[%s3 + $0x198] sm:$0xff]
    %v144 = vld [vmem:[%s3 + $0x1a0] sm:$0xff]
    %v145 = vld [vmem:[%s3 + $0x1a8] sm:$0xff]
    %v146 = vld [vmem:[%s3 + $0x1b0] sm:$0xff]
    %v147 = vld [vmem:[%s3 + $0x1b8] sm:$0xff]
    %v148 = vld [vmem:[%s3 + $0x1c0] sm:$0xff]
    %v149 = vld [vmem:[%s3 + $0x1c8] sm:$0xff]
    %v150 = vld [vmem:[%s3 + $0x1d0] sm:$0xff]
    %v151 = vld [vmem:[%s3 + $0x1d8] sm:$0xff]
    %v152 = vld [vmem:[%s3 + $0x1e0] sm:$0xff]
    %v153 = vld [vmem:[%s3 + $0x1e8] sm:$0xff]
    %v154 = vld [vmem:[%s3 + $0x1f0] sm:$0xff]
    %v155 = vld [vmem:[%s3 + $0x1f8] sm:$0xff]
    %v156 = vld [vmem:[%s5] sm:$0xf]
    %v158 = vlaneseq
    %v159 = vshrl.u32 %v158, 7
    %v160 = vsub.s32 0, %v159
    %v161 = vrot.slane %v156, %v160
    %v162 = vlaneseq
    %v163 = vshrl.u32 %v162, 7
    %v164 = vsub.s32 1, %v163
    %v165 = vrot.slane %v156, %v164
    %v166 = vlaneseq
    %v167 = vshrl.u32 %v166, 7
    %v168 = vsub.s32 2, %v167
    %v169 = vrot.slane %v156, %v168
    %v170 = vlaneseq
    %v171 = vshrl.u32 %v170, 7
    %v172 = vsub.s32 3, %v171
    %v173 = vrot.slane %v156, %v172
    %v242 = vunpack.c.l.b16 %v92
    %v243 = vunpack.c.h.b16 %v92
    %v244 = vunpack.c.l.b16 %v93
    %v245 = vunpack.c.h.b16 %v93
    %v246 = vunpack.c.l.b16 %v94
    %v247 = vunpack.c.h.b16 %v94
    %v248 = vunpack.c.l.b16 %v95
    %v249 = vunpack.c.h.b16 %v95
    %v250 = vunpack.c.l.b16 %v96
    %v251 = vunpack.c.h.b16 %v96
    %v252 = vunpack.c.l.b16 %v97
    %v253 = vunpack.c.h.b16 %v97
    %v254 = vunpack.c.l.b16 %v98
    %v255 = vunpack.c.h.b16 %v98
    %v256 = vunpack.c.l.b16 %v99
    %v257 = vunpack.c.h.b16 %v99
    %v258 = vunpack.c.l.b16 %v100
    %v259 = vunpack.c.h.b16 %v100
    %v260 = vunpack.c.l.b16 %v101
    %v261 = vunpack.c.h.b16 %v101
    %v262 = vunpack.c.l.b16 %v102
    %v263 = vunpack.c.h.b16 %v102
    %v264 = vunpack.c.l.b16 %v103
    %v265 = vunpack.c.h.b16 %v103
    %v266 = vunpack.c.l.b16 %v104
    %v267 = vunpack.c.h.b16 %v104
    %v268 = vunpack.c.l.b16 %v105
    %v269 = vunpack.c.h.b16 %v105
    %v270 = vunpack.c.l.b16 %v106
    %v271 = vunpack.c.h.b16 %v106
    %v272 = vunpack.c.l.b16 %v107
    %v273 = vunpack.c.h.b16 %v107
    %v274 = vunpack.c.l.b16 %v108
    %v275 = vunpack.c.h.b16 %v108
    %v276 = vunpack.c.l.b16 %v109
    %v277 = vunpack.c.h.b16 %v109
    %v278 = vunpack.c.l.b16 %v110
    %v279 = vunpack.c.h.b16 %v110
    %v280 = vunpack.c.l.b16 %v111
    %v281 = vunpack.c.h.b16 %v111
    %v282 = vunpack.c.l.b16 %v112
    %v283 = vunpack.c.h.b16 %v112
    %v284 = vunpack.c.l.b16 %v113
    %v285 = vunpack.c.h.b16 %v113
    %v286 = vunpack.c.l.b16 %v114
    %v287 = vunpack.c.h.b16 %v114
    %v288 = vunpack.c.l.b16 %v115
    %v289 = vunpack.c.h.b16 %v115
    %v290 = vunpack.c.l.b16 %v116
    %v291 = vunpack.c.h.b16 %v116
    %v292 = vunpack.c.l.b16 %v117
    %v293 = vunpack.c.h.b16 %v117
    %v294 = vunpack.c.l.b16 %v118
    %v295 = vunpack.c.h.b16 %v118
    %v296 = vunpack.c.l.b16 %v119
    %v297 = vunpack.c.h.b16 %v119
    %v298 = vunpack.c.l.b16 %v120
    %v299 = vunpack.c.h.b16 %v120
    %v300 = vunpack.c.l.b16 %v121
    %v301 = vunpack.c.h.b16 %v121
    %v302 = vunpack.c.l.b16 %v122
    %v303 = vunpack.c.h.b16 %v122
    %v304 = vunpack.c.l.b16 %v123
    %v305 = vunpack.c.h.b16 %v123
    %v306 = vunpack.c.l.b16 %v124
    %v307 = vunpack.c.h.b16 %v124
    %v308 = vunpack.c.l.b16 %v125
    %v309 = vunpack.c.h.b16 %v125
    %v310 = vunpack.c.l.b16 %v126
    %v311 = vunpack.c.h.b16 %v126
    %v312 = vunpack.c.l.b16 %v127
    %v313 = vunpack.c.h.b16 %v127
    %v314 = vunpack.c.l.b16 %v128
    %v315 = vunpack.c.h.b16 %v128
    %v316 = vunpack.c.l.b16 %v129
    %v317 = vunpack.c.h.b16 %v129
    %v318 = vunpack.c.l.b16 %v130
    %v319 = vunpack.c.h.b16 %v130
    %v320 = vunpack.c.l.b16 %v131
    %v321 = vunpack.c.h.b16 %v131
    %v322 = vunpack.c.l.b16 %v132
    %v323 = vunpack.c.h.b16 %v132
    %v324 = vunpack.c.l.b16 %v133
    %v325 = vunpack.c.h.b16 %v133
    %v326 = vunpack.c.l.b16 %v134
    %v327 = vunpack.c.h.b16 %v134
    %v328 = vunpack.c.l.b16 %v135
    %v329 = vunpack.c.h.b16 %v135
    %v330 = vunpack.c.l.b16 %v136
    %v331 = vunpack.c.h.b16 %v136
    %v332 = vunpack.c.l.b16 %v137
    %v333 = vunpack.c.h.b16 %v137
    %v334 = vunpack.c.l.b16 %v138
    %v335 = vunpack.c.h.b16 %v138
    %v336 = vunpack.c.l.b16 %v139
    %v337 = vunpack.c.h.b16 %v139
    %v338 = vunpack.c.l.b16 %v140
    %v339 = vunpack.c.h.b16 %v140
    %v340 = vunpack.c.l.b16 %v141
    %v341 = vunpack.c.h.b16 %v141
    %v342 = vunpack.c.l.b16 %v142
    %v343 = vunpack.c.h.b16 %v142
    %v344 = vunpack.c.l.b16 %v143
    %v345 = vunpack.c.h.b16 %v143
    %v346 = vunpack.c.l.b16 %v144
    %v347 = vunpack.c.h.b16 %v144
    %v348 = vunpack.c.l.b16 %v145
    %v349 = vunpack.c.h.b16 %v145
    %v350 = vunpack.c.l.b16 %v146
    %v351 = vunpack.c.h.b16 %v146
    %v352 = vunpack.c.l.b16 %v147
    %v353 = vunpack.c.h.b16 %v147
    %v354 = vunpack.c.l.b16 %v148
    %v355 = vunpack.c.h.b16 %v148
    %v356 = vunpack.c.l.b16 %v149
    %v357 = vunpack.c.h.b16 %v149
    %v358 = vunpack.c.l.b16 %v150
    %v359 = vunpack.c.h.b16 %v150
    %v360 = vunpack.c.l.b16 %v151
    %v361 = vunpack.c.h.b16 %v151
    %v362 = vunpack.c.l.b16 %v152
    %v363 = vunpack.c.h.b16 %v152
    %v364 = vunpack.c.l.b16 %v153
    %v365 = vunpack.c.h.b16 %v153
    %v366 = vunpack.c.l.b16 %v154
    %v367 = vunpack.c.h.b16 %v154
    %v368 = vunpack.c.l.b16 %v155
    %v369 = vunpack.c.h.b16 %v155
    %v370 = vpack.c.b16 %v246, %v242
    %v371 = vpack.c.b16 %v247, %v243
    %v372 = vpack.c.b16 %v248, %v244
    %v373 = vpack.c.b16 %v249, %v245
    %v374 = vpack.c.b16 %v254, %v250
    %v375 = vpack.c.b16 %v255, %v251
    %v376 = vpack.c.b16 %v256, %v252
    %v377 = vpack.c.b16 %v257, %v253
    %v378 = vpack.c.b16 %v262, %v258
    %v379 = vpack.c.b16 %v263, %v259
    %v380 = vpack.c.b16 %v264, %v260
    %v381 = vpack.c.b16 %v265, %v261
    %v382 = vpack.c.b16 %v270, %v266
    %v383 = vpack.c.b16 %v271, %v267
    %v384 = vpack.c.b16 %v272, %v268
    %v385 = vpack.c.b16 %v273, %v269
    %v386 = vpack.c.b16 %v278, %v274
    %v387 = vpack.c.b16 %v279, %v275
    %v388 = vpack.c.b16 %v280, %v276
    %v389 = vpack.c.b16 %v281, %v277
    %v390 = vpack.c.b16 %v286, %v282
    %v391 = vpack.c.b16 %v287, %v283
    %v392 = vpack.c.b16 %v288, %v284
    %v393 = vpack.c.b16 %v289, %v285
    %v394 = vpack.c.b16 %v294, %v290
    %v395 = vpack.c.b16 %v295, %v291
    %v396 = vpack.c.b16 %v296, %v292
    %v397 = vpack.c.b16 %v297, %v293
    %v398 = vpack.c.b16 %v302, %v298
    %v399 = vpack.c.b16 %v303, %v299
    %v400 = vpack.c.b16 %v304, %v300
    %v401 = vpack.c.b16 %v305, %v301
    %v402 = vpack.c.b16 %v310, %v306
    %v403 = vpack.c.b16 %v311, %v307
    %v404 = vpack.c.b16 %v312, %v308
    %v405 = vpack.c.b16 %v313, %v309
    %v406 = vpack.c.b16 %v318, %v314
    %v407 = vpack.c.b16 %v319, %v315
    %v408 = vpack.c.b16 %v320, %v316
    %v409 = vpack.c.b16 %v321, %v317
    %v410 = vpack.c.b16 %v326, %v322
    %v411 = vpack.c.b16 %v327, %v323
    %v412 = vpack.c.b16 %v328, %v324
    %v413 = vpack.c.b16 %v329, %v325
    %v414 = vpack.c.b16 %v334, %v330
    %v415 = vpack.c.b16 %v335, %v331
    %v416 = vpack.c.b16 %v336, %v332
    %v417 = vpack.c.b16 %v337, %v333
    %v418 = vpack.c.b16 %v342, %v338
    %v419 = vpack.c.b16 %v343, %v339
    %v420 = vpack.c.b16 %v344, %v340
    %v421 = vpack.c.b16 %v345, %v341
    %v422 = vpack.c.b16 %v350, %v346
    %v423 = vpack.c.b16 %v351, %v347
    %v424 = vpack.c.b16 %v352, %v348
    %v425 = vpack.c.b16 %v353, %v349
    %v426 = vpack.c.b16 %v358, %v354
    %v427 = vpack.c.b16 %v359, %v355
    %v428 = vpack.c.b16 %v360, %v356
    %v429 = vpack.c.b16 %v361, %v357
    %v430 = vpack.c.b16 %v366, %v362
    %v431 = vpack.c.b16 %v367, %v363
    %v432 = vpack.c.b16 %v368, %v364
    %v433 = vpack.c.b16 %v369, %v365
    %498 = vmatprep.subr.bf16.mxu0 %v399
    %499 = vmatpush1.bf16.msra.mxu0 %v398
    %500 = vmatprep.subr.bf16.mxu0 %v395
    %501 = vmatpush1.bf16.msra.mxu0 %v394
    %502 = vmatprep.subr.bf16.mxu0 %v391
    %503 = vmatpush1.bf16.msra.mxu0 %v390
    %504 = vmatprep.subr.bf16.mxu0 %v387
    %505 = vmatpush1.bf16.msra.mxu0 %v386
    %506 = vmatprep.subr.bf16.mxu0 %v383
    %507 = vmatpush1.bf16.msra.mxu0 %v382
    %508 = vmatprep.subr.bf16.mxu0 %v379
    %509 = vmatpush1.bf16.msra.mxu0 %v378
    %510 = vmatprep.subr.bf16.mxu0 %v375
    %511 = vmatpush1.bf16.msra.mxu0 %v374
    %512 = vmatprep.subr.bf16.mxu0 %v371
    %513 = vmatpush1.bf16.msra.mxu0 %v370
    %514 = vmatprep.subr.bf16.mxu0 %v431
    %515 = vmatpush2.bf16.msra.mxu0 %v430
    %516 = vmatprep.subr.bf16.mxu0 %v427
    %517 = vmatpush2.bf16.msra.mxu0 %v426
    %518 = vmatprep.subr.bf16.mxu0 %v423
    %519 = vmatpush2.bf16.msra.mxu0 %v422
    %520 = vmatprep.subr.bf16.mxu0 %v419
    %521 = vmatpush2.bf16.msra.mxu0 %v418
    %522 = vmatprep.subr.bf16.mxu0 %v415
    %523 = vmatpush2.bf16.msra.mxu0 %v414
    %524 = vmatprep.subr.bf16.mxu0 %v411
    %525 = vmatpush2.bf16.msra.mxu0 %v410
    %526 = vmatprep.subr.bf16.mxu0 %v407
    %527 = vmatpush2.bf16.msra.mxu0 %v406
    %528 = vmatprep.subr.bf16.mxu0 %v403
    %529 = vmatpush2.bf16.msra.mxu0 %v402
    %530 = vmatprep.mubr.bf16.mxu0 %v85
    %531 = vmatmul.mubr.bf16.gmra.mxu0 %v84
    %v532 = vpop.f32.mrf.mxu0
    %v533 = vadd.f32 %v161, %v532
    %v534 = vpop.f32.mrf.mxu0
    %v535 = vadd.f32 %v165, %v534
    %v536 = vpop.f32.mrf.mxu0
    %v537 = vadd.f32 %v161, %v536
    %v538 = vpop.f32.mrf.mxu0
    %v539 = vadd.f32 %v165, %v538
    %540 = vmatprep.mubr.bf16.mxu0 %v87
    %541 = vmatmul.mubr.bf16.gmra.mxu0 %v86
    %v542 = vpop.f32.mrf.mxu0
    %v543 = vadd.f32 %v161, %v542
    %v544 = vpop.f32.mrf.mxu0
    %v545 = vadd.f32 %v165, %v544
    %v546 = vpop.f32.mrf.mxu0
    %v547 = vadd.f32 %v161, %v546
    %v548 = vpop.f32.mrf.mxu0
    %v549 = vadd.f32 %v165, %v548
    %550 = vmatprep.mubr.bf16.mxu0 %v89
    %551 = vmatmul.mubr.bf16.gmra.mxu0 %v88
    %v552 = vpop.f32.mrf.mxu0
    %v553 = vadd.f32 %v161, %v552
    %v554 = vpop.f32.mrf.mxu0
    %v555 = vadd.f32 %v165, %v554
    %v556 = vpop.f32.mrf.mxu0
    %v557 = vadd.f32 %v161, %v556
    %v558 = vpop.f32.mrf.mxu0
    %v559 = vadd.f32 %v165, %v558
    %560 = vmatprep.mubr.bf16.mxu0 %v91
    %561 = vmatmul.mubr.bf16.gmra.mxu0 %v90
    %v562 = vpop.f32.mrf.mxu0
    %v563 = vadd.f32 %v161, %v562
    %v564 = vpop.f32.mrf.mxu0
    %v565 = vadd.f32 %v165, %v564
    %v566 = vpop.f32.mrf.mxu0
    %v567 = vadd.f32 %v161, %v566
    %v568 = vpop.f32.mrf.mxu0
    %v569 = vadd.f32 %v165, %v568
    %570 = vdwg.mxu0
    %571 = vmatprep.subr.bf16.mxu0 %v401
    %572 = vmatpush1.bf16.msra.mxu0 %v400
    %573 = vmatprep.subr.bf16.mxu0 %v397
    %574 = vmatpush1.bf16.msra.mxu0 %v396
    %575 = vmatprep.subr.bf16.mxu0 %v393
    %576 = vmatpush1.bf16.msra.mxu0 %v392
    %577 = vmatprep.subr.bf16.mxu0 %v389
    %578 = vmatpush1.bf16.msra.mxu0 %v388
    %579 = vmatprep.subr.bf16.mxu0 %v385
    %580 = vmatpush1.bf16.msra.mxu0 %v384
    %581 = vmatprep.subr.bf16.mxu0 %v381
    %582 = vmatpush1.bf16.msra.mxu0 %v380
    %583 = vmatprep.subr.bf16.mxu0 %v377
    %584 = vmatpush1.bf16.msra.mxu0 %v376
    %585 = vmatprep.subr.bf16.mxu0 %v373
    %586 = vmatpush1.bf16.msra.mxu0 %v372
    %587 = vmatprep.subr.bf16.mxu0 %v433
    %588 = vmatpush2.bf16.msra.mxu0 %v432
    %589 = vmatprep.subr.bf16.mxu0 %v429
    %590 = vmatpush2.bf16.msra.mxu0 %v428
    %591 = vmatprep.subr.bf16.mxu0 %v425
    %592 = vmatpush2.bf16.msra.mxu0 %v424
    %593 = vmatprep.subr.bf16.mxu0 %v421
    %594 = vmatpush2.bf16.msra.mxu0 %v420
    %595 = vmatprep.subr.bf16.mxu0 %v417
    %596 = vmatpush2.bf16.msra.mxu0 %v416
    %597 = vmatprep.subr.bf16.mxu0 %v413
    %598 = vmatpush2.bf16.msra.mxu0 %v412
    %599 = vmatprep.subr.bf16.mxu0 %v409
    %600 = vmatpush2.bf16.msra.mxu0 %v408
    %601 = vmatprep.subr.bf16.mxu0 %v405
    %602 = vmatpush2.bf16.msra.mxu0 %v404
    %603 = vmatprep.mubr.bf16.mxu0 %v85
    %604 = vmatmul.mubr.bf16.gmra.mxu0 %v84
    %v605 = vpop.f32.mrf.mxu0
    %v606 = vadd.f32 %v169, %v605
    %v607 = vpop.f32.mrf.mxu0
    %v608 = vadd.f32 %v173, %v607
    %v609 = vpop.f32.mrf.mxu0
    %v610 = vadd.f32 %v169, %v609
    %v611 = vpop.f32.mrf.mxu0
    %v612 = vadd.f32 %v173, %v611
    %613 = vmatprep.mubr.bf16.mxu0 %v87
    %614 = vmatmul.mubr.bf16.gmra.mxu0 %v86
    %v615 = vpop.f32.mrf.mxu0
    %v616 = vadd.f32 %v169, %v615
    %v617 = vpop.f32.mrf.mxu0
    %v618 = vadd.f32 %v173, %v617
    %v619 = vpop.f32.mrf.mxu0
    %v620 = vadd.f32 %v169, %v619
    %v621 = vpop.f32.mrf.mxu0
    %v622 = vadd.f32 %v173, %v621
    %623 = vmatprep.mubr.bf16.mxu0 %v89
    %624 = vmatmul.mubr.bf16.gmra.mxu0 %v88
    %v625 = vpop.f32.mrf.mxu0
    %v626 = vadd.f32 %v169, %v625
    %v627 = vpop.f32.mrf.mxu0
    %v628 = vadd.f32 %v173, %v627
    %v629 = vpop.f32.mrf.mxu0
    %v630 = vadd.f32 %v169, %v629
    %v631 = vpop.f32.mrf.mxu0
    %v632 = vadd.f32 %v173, %v631
    %633 = vmatprep.mubr.bf16.mxu0 %v91
    %634 = vmatmul.mubr.bf16.gmra.mxu0 %v90
    %v635 = vpop.f32.mrf.mxu0
    %v636 = vadd.f32 %v169, %v635
    %v637 = vpop.f32.mrf.mxu0
    %v638 = vadd.f32 %v173, %v637
    %v639 = vpop.f32.mrf.mxu0
    %v640 = vadd.f32 %v169, %v639
    %v641 = vpop.f32.mrf.mxu0
    %v642 = vadd.f32 %v173, %v641
    %643 = vdwg.mxu0
    %644 = vst [vmem:[#allocation2] sm:$0xff] %v533
    %645 = vst [vmem:[#allocation2 + $0x8] sm:$0xff] %v535
    %646 = vst [vmem:[#allocation2 + $0x10] sm:$0xff] %v606
    %647 = vst [vmem:[#allocation2 + $0x18] sm:$0xff] %v608
    %648 = vst [vmem:[#allocation2 + $0x20] sm:$0xff] %v537
    %649 = vst [vmem:[#allocation2 + $0x28] sm:$0xff] %v539
    %650 = vst [vmem:[#allocation2 + $0x30] sm:$0xff] %v610
    %651 = vst [vmem:[#allocation2 + $0x38] sm:$0xff] %v612
    %652 = vst [vmem:[#allocation2 + $0x40] sm:$0xff] %v543
    %653 = vst [vmem:[#allocation2 + $0x48] sm:$0xff] %v545
    %654 = vst [vmem:[#allocation2 + $0x50] sm:$0xff] %v616
    %655 = vst [vmem:[#allocation2 + $0x58] sm:$0xff] %v618
    %656 = vst [vmem:[#allocation2 + $0x60] sm:$0xff] %v547
    %657 = vst [vmem:[#allocation2 + $0x68] sm:$0xff] %v549
    %658 = vst [vmem:[#allocation2 + $0x70] sm:$0xff] %v620
    %659 = vst [vmem:[#allocation2 + $0x78] sm:$0xff] %v622
    %660 = vst [vmem:[#allocation2 + $0x80] sm:$0xff] %v553
    %661 = vst [vmem:[#allocation2 + $0x88] sm:$0xff] %v555
    %662 = vst [vmem:[#allocation2 + $0x90] sm:$0xff] %v626
    %663 = vst [vmem:[#allocation2 + $0x98] sm:$0xff] %v628
    %664 = vst [vmem:[#allocation2 + $0xa0] sm:$0xff] %v557
    %665 = vst [vmem:[#allocation2 + $0xa8] sm:$0xff] %v559
    %666 = vst [vmem:[#allocation2 + $0xb0] sm:$0xff] %v630
    %667 = vst [vmem:[#allocation2 + $0xb8] sm:$0xff] %v632
    %668 = vst [vmem:[#allocation2 + $0xc0] sm:$0xff] %v563
    %669 = vst [vmem:[#allocation2 + $0xc8] sm:$0xff] %v565
    %670 = vst [vmem:[#allocation2 + $0xd0] sm:$0xff] %v636
    %671 = vst [vmem:[#allocation2 + $0xd8] sm:$0xff] %v638
    %672 = vst [vmem:[#allocation2 + $0xe0] sm:$0xff] %v567
    %673 = vst [vmem:[#allocation2 + $0xe8] sm:$0xff] %v569
    %674 = vst [vmem:[#allocation2 + $0xf0] sm:$0xff] %v640
    %675 = vst [vmem:[#allocation2 + $0xf8] sm:$0xff] %v642
    %v676 = vld [vmem:[%s6] sm:$0xff]
    %v677 = vld [vmem:[%s6 + $0x8] sm:$0xff]
    %v678 = vld [vmem:[%s6 + $0x10] sm:$0xff]
    %v679 = vld [vmem:[%s6 + $0x18] sm:$0xff]
    %v680 = vld [vmem:[%s6 + $0x20] sm:$0xff]
    %v681 = vld [vmem:[%s6 + $0x28] sm:$0xff]
    %v682 = vld [vmem:[%s6 + $0x30] sm:$0xff]
    %v683 = vld [vmem:[%s6 + $0x38] sm:$0xff]
    %v684 = vld [vmem:[%s6 + $0x40] sm:$0xff]
    %v685 = vld [vmem:[%s6 + $0x48] sm:$0xff]
    %v686 = vld [vmem:[%s6 + $0x50] sm:$0xff]
    %v687 = vld [vmem:[%s6 + $0x58] sm:$0xff]
    %v688 = vld [vmem:[%s6 + $0x60] sm:$0xff]
    %v689 = vld [vmem:[%s6 + $0x68] sm:$0xff]
    %v690 = vld [vmem:[%s6 + $0x70] sm:$0xff]
    %v691 = vld [vmem:[%s6 + $0x78] sm:$0xff]
    %v692 = vld [vmem:[%s6 + $0x80] sm:$0xff]
    %v693 = vld [vmem:[%s6 + $0x88] sm:$0xff]
    %v694 = vld [vmem:[%s6 + $0x90] sm:$0xff]
    %v695 = vld [vmem:[%s6 + $0x98] sm:$0xff]
    %v696 = vld [vmem:[%s6 + $0xa0] sm:$0xff]
    %v697 = vld [vmem:[%s6 + $0xa8] sm:$0xff]
    %v698 = vld [vmem:[%s6 + $0xb0] sm:$0xff]
    %v699 = vld [vmem:[%s6 + $0xb8] sm:$0xff]
    %v700 = vld [vmem:[%s6 + $0xc0] sm:$0xff]
    %v701 = vld [vmem:[%s6 + $0xc8] sm:$0xff]
    %v702 = vld [vmem:[%s6 + $0xd0] sm:$0xff]
    %v703 = vld [vmem:[%s6 + $0xd8] sm:$0xff]
    %v704 = vld [vmem:[%s6 + $0xe0] sm:$0xff]
    %v705 = vld [vmem:[%s6 + $0xe8] sm:$0xff]
    %v706 = vld [vmem:[%s6 + $0xf0] sm:$0xff]
    %v707 = vld [vmem:[%s6 + $0xf8] sm:$0xff]
    %v708 = vld [vmem:[%s6 + $0x100] sm:$0xff]
    %v709 = vld [vmem:[%s6 + $0x108] sm:$0xff]
    %v710 = vld [vmem:[%s6 + $0x110] sm:$0xff]
    %v711 = vld [vmem:[%s6 + $0x118] sm:$0xff]
    %v712 = vld [vmem:[%s6 + $0x120] sm:$0xff]
    %v713 = vld [vmem:[%s6 + $0x128] sm:$0xff]
    %v714 = vld [vmem:[%s6 + $0x130] sm:$0xff]
    %v715 = vld [vmem:[%s6 + $0x138] sm:$0xff]
    %v716 = vld [vmem:[%s6 + $0x140] sm:$0xff]
    %v717 = vld [vmem:[%s6 + $0x148] sm:$0xff]
    %v718 = vld [vmem:[%s6 + $0x150] sm:$0xff]
    %v719 = vld [vmem:[%s6 + $0x158] sm:$0xff]
    %v720 = vld [vmem:[%s6 + $0x160] sm:$0xff]
    %v721 = vld [vmem:[%s6 + $0x168] sm:$0xff]
    %v722 = vld [vmem:[%s6 + $0x170] sm:$0xff]
    %v723 = vld [vmem:[%s6 + $0x178] sm:$0xff]
    %v724 = vld [vmem:[%s6 + $0x180] sm:$0xff]
    %v725 = vld [vmem:[%s6 + $0x188] sm:$0xff]
    %v726 = vld [vmem:[%s6 + $0x190] sm:$0xff]
    %v727 = vld [vmem:[%s6 + $0x198] sm:$0xff]
    %v728 = vld [vmem:[%s6 + $0x1a0] sm:$0xff]
    %v729 = vld [vmem:[%s6 + $0x1a8] sm:$0xff]
    %v730 = vld [vmem:[%s6 + $0x1b0] sm:$0xff]
    %v731 = vld [vmem:[%s6 + $0x1b8] sm:$0xff]
    %v732 = vld [vmem:[%s6 + $0x1c0] sm:$0xff]
    %v733 = vld [vmem:[%s6 + $0x1c8] sm:$0xff]
    %v734 = vld [vmem:[%s6 + $0x1d0] sm:$0xff]
    %v735 = vld [vmem:[%s6 + $0x1d8] sm:$0xff]
    %v736 = vld [vmem:[%s6 + $0x1e0] sm:$0xff]
    %v737 = vld [vmem:[%s6 + $0x1e8] sm:$0xff]
    %v738 = vld [vmem:[%s6 + $0x1f0] sm:$0xff]
    %v739 = vld [vmem:[%s6 + $0x1f8] sm:$0xff]
    %v740 = vld [vmem:[%s8] sm:$0xf]
    %v742 = vlaneseq
    %v743 = vshrl.u32 %v742, 7
    %v744 = vsub.s32 0, %v743
    %v745 = vrot.slane %v740, %v744
    %v746 = vlaneseq
    %v747 = vshrl.u32 %v746, 7
    %v748 = vsub.s32 1, %v747
    %v749 = vrot.slane %v740, %v748
    %v750 = vlaneseq
    %v751 = vshrl.u32 %v750, 7
    %v752 = vsub.s32 2, %v751
    %v753 = vrot.slane %v740, %v752
    %v754 = vlaneseq
    %v755 = vshrl.u32 %v754, 7
    %v756 = vsub.s32 3, %v755
    %v757 = vrot.slane %v740, %v756
    %v826 = vunpack.c.l.b16 %v676
    %v827 = vunpack.c.h.b16 %v676
    %v828 = vunpack.c.l.b16 %v677
    %v829 = vunpack.c.h.b16 %v677
    %v830 = vunpack.c.l.b16 %v678
    %v831 = vunpack.c.h.b16 %v678
    %v832 = vunpack.c.l.b16 %v679
    %v833 = vunpack.c.h.b16 %v679
    %v834 = vunpack.c.l.b16 %v680
    %v835 = vunpack.c.h.b16 %v680
    %v836 = vunpack.c.l.b16 %v681
    %v837 = vunpack.c.h.b16 %v681
    %v838 = vunpack.c.l.b16 %v682
    %v839 = vunpack.c.h.b16 %v682
    %v840 = vunpack.c.l.b16 %v683
    %v841 = vunpack.c.h.b16 %v683
    %v842 = vunpack.c.l.b16 %v684
    %v843 = vunpack.c.h.b16 %v684
    %v844 = vunpack.c.l.b16 %v685
    %v845 = vunpack.c.h.b16 %v685
    %v846 = vunpack.c.l.b16 %v686
    %v847 = vunpack.c.h.b16 %v686
    %v848 = vunpack.c.l.b16 %v687
    %v849 = vunpack.c.h.b16 %v687
    %v850 = vunpack.c.l.b16 %v688
    %v851 = vunpack.c.h.b16 %v688
    %v852 = vunpack.c.l.b16 %v689
    %v853 = vunpack.c.h.b16 %v689
    %v854 = vunpack.c.l.b16 %v690
    %v855 = vunpack.c.h.b16 %v690
    %v856 = vunpack.c.l.b16 %v691
    %v857 = vunpack.c.h.b16 %v691
    %v858 = vunpack.c.l.b16 %v692
    %v859 = vunpack.c.h.b16 %v692
    %v860 = vunpack.c.l.b16 %v693
    %v861 = vunpack.c.h.b16 %v693
    %v862 = vunpack.c.l.b16 %v694
    %v863 = vunpack.c.h.b16 %v694
    %v864 = vunpack.c.l.b16 %v695
    %v865 = vunpack.c.h.b16 %v695
    %v866 = vunpack.c.l.b16 %v696
    %v867 = vunpack.c.h.b16 %v696
    %v868 = vunpack.c.l.b16 %v697
    %v869 = vunpack.c.h.b16 %v697
    %v870 = vunpack.c.l.b16 %v698
    %v871 = vunpack.c.h.b16 %v698
    %v872 = vunpack.c.l.b16 %v699
    %v873 = vunpack.c.h.b16 %v699
    %v874 = vunpack.c.l.b16 %v700
    %v875 = vunpack.c.h.b16 %v700
    %v876 = vunpack.c.l.b16 %v701
    %v877 = vunpack.c.h.b16 %v701
    %v878 = vunpack.c.l.b16 %v702
    %v879 = vunpack.c.h.b16 %v702
    %v880 = vunpack.c.l.b16 %v703
    %v881 = vunpack.c.h.b16 %v703
    %v882 = vunpack.c.l.b16 %v704
    %v883 = vunpack.c.h.b16 %v704
    %v884 = vunpack.c.l.b16 %v705
    %v885 = vunpack.c.h.b16 %v705
    %v886 = vunpack.c.l.b16 %v706
    %v887 = vunpack.c.h.b16 %v706
    %v888 = vunpack.c.l.b16 %v707
    %v889 = vunpack.c.h.b16 %v707
    %v890 = vunpack.c.l.b16 %v708
    %v891 = vunpack.c.h.b16 %v708
    %v892 = vunpack.c.l.b16 %v709
    %v893 = vunpack.c.h.b16 %v709
    %v894 = vunpack.c.l.b16 %v710
    %v895 = vunpack.c.h.b16 %v710
    %v896 = vunpack.c.l.b16 %v711
    %v897 = vunpack.c.h.b16 %v711
    %v898 = vunpack.c.l.b16 %v712
    %v899 = vunpack.c.h.b16 %v712
    %v900 = vunpack.c.l.b16 %v713
    %v901 = vunpack.c.h.b16 %v713
    %v902 = vunpack.c.l.b16 %v714
    %v903 = vunpack.c.h.b16 %v714
    %v904 = vunpack.c.l.b16 %v715
    %v905 = vunpack.c.h.b16 %v715
    %v906 = vunpack.c.l.b16 %v716
    %v907 = vunpack.c.h.b16 %v716
    %v908 = vunpack.c.l.b16 %v717
    %v909 = vunpack.c.h.b16 %v717
    %v910 = vunpack.c.l.b16 %v718
    %v911 = vunpack.c.h.b16 %v718
    %v912 = vunpack.c.l.b16 %v719
    %v913 = vunpack.c.h.b16 %v719
    %v914 = vunpack.c.l.b16 %v720
    %v915 = vunpack.c.h.b16 %v720
    %v916 = vunpack.c.l.b16 %v721
    %v917 = vunpack.c.h.b16 %v721
    %v918 = vunpack.c.l.b16 %v722
    %v919 = vunpack.c.h.b16 %v722
    %v920 = vunpack.c.l.b16 %v723
    %v921 = vunpack.c.h.b16 %v723
    %v922 = vunpack.c.l.b16 %v724
    %v923 = vunpack.c.h.b16 %v724
    %v924 = vunpack.c.l.b16 %v725
    %v925 = vunpack.c.h.b16 %v725
    %v926 = vunpack.c.l.b16 %v726
    %v927 = vunpack.c.h.b16 %v726
    %v928 = vunpack.c.l.b16 %v727
    %v929 = vunpack.c.h.b16 %v727
    %v930 = vunpack.c.l.b16 %v728
    %v931 = vunpack.c.h.b16 %v728
    %v932 = vunpack.c.l.b16 %v729
    %v933 = vunpack.c.h.b16 %v729
    %v934 = vunpack.c.l.b16 %v730
    %v935 = vunpack.c.h.b16 %v730
    %v936 = vunpack.c.l.b16 %v731
    %v937 = vunpack.c.h.b16 %v731
    %v938 = vunpack.c.l.b16 %v732
    %v939 = vunpack.c.h.b16 %v732
    %v940 = vunpack.c.l.b16 %v733
    %v941 = vunpack.c.h.b16 %v733
    %v942 = vunpack.c.l.b16 %v734
    %v943 = vunpack.c.h.b16 %v734
    %v944 = vunpack.c.l.b16 %v735
    %v945 = vunpack.c.h.b16 %v735
    %v946 = vunpack.c.l.b16 %v736
    %v947 = vunpack.c.h.b16 %v736
    %v948 = vunpack.c.l.b16 %v737
    %v949 = vunpack.c.h.b16 %v737
    %v950 = vunpack.c.l.b16 %v738
    %v951 = vunpack.c.h.b16 %v738
    %v952 = vunpack.c.l.b16 %v739
    %v953 = vunpack.c.h.b16 %v739
    %v954 = vpack.c.b16 %v830, %v826
    %v955 = vpack.c.b16 %v831, %v827
    %v956 = vpack.c.b16 %v832, %v828
    %v957 = vpack.c.b16 %v833, %v829
    %v958 = vpack.c.b16 %v838, %v834
    %v959 = vpack.c.b16 %v839, %v835
    %v960 = vpack.c.b16 %v840, %v836
    %v961 = vpack.c.b16 %v841, %v837
    %v962 = vpack.c.b16 %v846, %v842
    %v963 = vpack.c.b16 %v847, %v843
    %v964 = vpack.c.b16 %v848, %v844
    %v965 = vpack.c.b16 %v849, %v845
    %v966 = vpack.c.b16 %v854, %v850
    %v967 = vpack.c.b16 %v855, %v851
    %v968 = vpack.c.b16 %v856, %v852
    %v969 = vpack.c.b16 %v857, %v853
    %v970 = vpack.c.b16 %v862, %v858
    %v971 = vpack.c.b16 %v863, %v859
    %v972 = vpack.c.b16 %v864, %v860
    %v973 = vpack.c.b16 %v865, %v861
    %v974 = vpack.c.b16 %v870, %v866
    %v975 = vpack.c.b16 %v871, %v867
    %v976 = vpack.c.b16 %v872, %v868
    %v977 = vpack.c.b16 %v873, %v869
    %v978 = vpack.c.b16 %v878, %v874
    %v979 = vpack.c.b16 %v879, %v875
    %v980 = vpack.c.b16 %v880, %v876
    %v981 = vpack.c.b16 %v881, %v877
    %v982 = vpack.c.b16 %v886, %v882
    %v983 = vpack.c.b16 %v887, %v883
    %v984 = vpack.c.b16 %v888, %v884
    %v985 = vpack.c.b16 %v889, %v885
    %v986 = vpack.c.b16 %v894, %v890
    %v987 = vpack.c.b16 %v895, %v891
    %v988 = vpack.c.b16 %v896, %v892
    %v989 = vpack.c.b16 %v897, %v893
    %v990 = vpack.c.b16 %v902, %v898
    %v991 = vpack.c.b16 %v903, %v899
    %v992 = vpack.c.b16 %v904, %v900
    %v993 = vpack.c.b16 %v905, %v901
    %v994 = vpack.c.b16 %v910, %v906
    %v995 = vpack.c.b16 %v911, %v907
    %v996 = vpack.c.b16 %v912, %v908
    %v997 = vpack.c.b16 %v913, %v909
    %v998 = vpack.c.b16 %v918, %v914
    %v999 = vpack.c.b16 %v919, %v915
    %v1000 = vpack.c.b16 %v920, %v916
    %v1001 = vpack.c.b16 %v921, %v917
    %v1002 = vpack.c.b16 %v926, %v922
    %v1003 = vpack.c.b16 %v927, %v923
    %v1004 = vpack.c.b16 %v928, %v924
    %v1005 = vpack.c.b16 %v929, %v925
    %v1006 = vpack.c.b16 %v934, %v930
    %v1007 = vpack.c.b16 %v935, %v931
    %v1008 = vpack.c.b16 %v936, %v932
    %v1009 = vpack.c.b16 %v937, %v933
    %v1010 = vpack.c.b16 %v942, %v938
    %v1011 = vpack.c.b16 %v943, %v939
    %v1012 = vpack.c.b16 %v944, %v940
    %v1013 = vpack.c.b16 %v945, %v941
    %v1014 = vpack.c.b16 %v950, %v946
    %v1015 = vpack.c.b16 %v951, %v947
    %v1016 = vpack.c.b16 %v952, %v948
    %v1017 = vpack.c.b16 %v953, %v949
    %1082 = vmatprep.subr.bf16.mxu0 %v983
    %1083 = vmatpush1.bf16.msra.mxu0 %v982
    %1084 = vmatprep.subr.bf16.mxu0 %v979
    %1085 = vmatpush1.bf16.msra.mxu0 %v978
    %1086 = vmatprep.subr.bf16.mxu0 %v975
    %1087 = vmatpush1.bf16.msra.mxu0 %v974
    %1088 = vmatprep.subr.bf16.mxu0 %v971
    %1089 = vmatpush1.bf16.msra.mxu0 %v970
    %1090 = vmatprep.subr.bf16.mxu0 %v967
    %1091 = vmatpush1.bf16.msra.mxu0 %v966
    %1092 = vmatprep.subr.bf16.mxu0 %v963
    %1093 = vmatpush1.bf16.msra.mxu0 %v962
    %1094 = vmatprep.subr.bf16.mxu0 %v959
    %1095 = vmatpush1.bf16.msra.mxu0 %v958
    %1096 = vmatprep.subr.bf16.mxu0 %v955
    %1097 = vmatpush1.bf16.msra.mxu0 %v954
    %1098 = vmatprep.subr.bf16.mxu0 %v1015
    %1099 = vmatpush2.bf16.msra.mxu0 %v1014
    %1100 = vmatprep.subr.bf16.mxu0 %v1011
    %1101 = vmatpush2.bf16.msra.mxu0 %v1010
    %1102 = vmatprep.subr.bf16.mxu0 %v1007
    %1103 = vmatpush2.bf16.msra.mxu0 %v1006
    %1104 = vmatprep.subr.bf16.mxu0 %v1003
    %1105 = vmatpush2.bf16.msra.mxu0 %v1002
    %1106 = vmatprep.subr.bf16.mxu0 %v999
    %1107 = vmatpush2.bf16.msra.mxu0 %v998
    %1108 = vmatprep.subr.bf16.mxu0 %v995
    %1109 = vmatpush2.bf16.msra.mxu0 %v994
    %1110 = vmatprep.subr.bf16.mxu0 %v991
    %1111 = vmatpush2.bf16.msra.mxu0 %v990
    %1112 = vmatprep.subr.bf16.mxu0 %v987
    %1113 = vmatpush2.bf16.msra.mxu0 %v986
    %1114 = vmatprep.mubr.bf16.mxu0 %v85
    %1115 = vmatmul.mubr.bf16.gmra.mxu0 %v84
    %v1116 = vpop.f32.mrf.mxu0
    %v1117 = vadd.f32 %v745, %v1116
    %v1118 = vpop.f32.mrf.mxu0
    %v1119 = vadd.f32 %v749, %v1118
    %v1120 = vpop.f32.mrf.mxu0
    %v1121 = vadd.f32 %v745, %v1120
    %v1122 = vpop.f32.mrf.mxu0
    %v1123 = vadd.f32 %v749, %v1122
    %1124 = vmatprep.mubr.bf16.mxu0 %v87
    %1125 = vmatmul.mubr.bf16.gmra.mxu0 %v86
    %v1126 = vpop.f32.mrf.mxu0
    %v1127 = vadd.f32 %v745, %v1126
    %v1128 = vpop.f32.mrf.mxu0
    %v1129 = vadd.f32 %v749, %v1128
    %v1130 = vpop.f32.mrf.mxu0
    %v1131 = vadd.f32 %v745, %v1130
    %v1132 = vpop.f32.mrf.mxu0
    %v1133 = vadd.f32 %v749, %v1132
    %1134 = vmatprep.mubr.bf16.mxu0 %v89
    %1135 = vmatmul.mubr.bf16.gmra.mxu0 %v88
    %v1136 = vpop.f32.mrf.mxu0
    %v1137 = vadd.f32 %v745, %v1136
    %v1138 = vpop.f32.mrf.mxu0
    %v1139 = vadd.f32 %v749, %v1138
    %v1140 = vpop.f32.mrf.mxu0
    %v1141 = vadd.f32 %v745, %v1140
    %v1142 = vpop.f32.mrf.mxu0
    %v1143 = vadd.f32 %v749, %v1142
    %1144 = vmatprep.mubr.bf16.mxu0 %v91
    %1145 = vmatmul.mubr.bf16.gmra.mxu0 %v90
    %v1146 = vpop.f32.mrf.mxu0
    %v1147 = vadd.f32 %v745, %v1146
    %v1148 = vpop.f32.mrf.mxu0
    %v1149 = vadd.f32 %v749, %v1148
    %v1150 = vpop.f32.mrf.mxu0
    %v1151 = vadd.f32 %v745, %v1150
    %v1152 = vpop.f32.mrf.mxu0
    %v1153 = vadd.f32 %v749, %v1152
    %1154 = vdwg.mxu0
    %1155 = vmatprep.subr.bf16.mxu0 %v985
    %1156 = vmatpush1.bf16.msra.mxu0 %v984
    %1157 = vmatprep.subr.bf16.mxu0 %v981
    %1158 = vmatpush1.bf16.msra.mxu0 %v980
    %1159 = vmatprep.subr.bf16.mxu0 %v977
    %1160 = vmatpush1.bf16.msra.mxu0 %v976
    %1161 = vmatprep.subr.bf16.mxu0 %v973
    %1162 = vmatpush1.bf16.msra.mxu0 %v972
    %1163 = vmatprep.subr.bf16.mxu0 %v969
    %1164 = vmatpush1.bf16.msra.mxu0 %v968
    %1165 = vmatprep.subr.bf16.mxu0 %v965
    %1166 = vmatpush1.bf16.msra.mxu0 %v964
    %1167 = vmatprep.subr.bf16.mxu0 %v961
    %1168 = vmatpush1.bf16.msra.mxu0 %v960
    %1169 = vmatprep.subr.bf16.mxu0 %v957
    %1170 = vmatpush1.bf16.msra.mxu0 %v956
    %1171 = vmatprep.subr.bf16.mxu0 %v1017
    %1172 = vmatpush2.bf16.msra.mxu0 %v1016
    %1173 = vmatprep.subr.bf16.mxu0 %v1013
    %1174 = vmatpush2.bf16.msra.mxu0 %v1012
    %1175 = vmatprep.subr.bf16.mxu0 %v1009
    %1176 = vmatpush2.bf16.msra.mxu0 %v1008
    %1177 = vmatprep.subr.bf16.mxu0 %v1005
    %1178 = vmatpush2.bf16.msra.mxu0 %v1004
    %1179 = vmatprep.subr.bf16.mxu0 %v1001
    %1180 = vmatpush2.bf16.msra.mxu0 %v1000
    %1181 = vmatprep.subr.bf16.mxu0 %v997
    %1182 = vmatpush2.bf16.msra.mxu0 %v996
    %1183 = vmatprep.subr.bf16.mxu0 %v993
    %1184 = vmatpush2.bf16.msra.mxu0 %v992
    %1185 = vmatprep.subr.bf16.mxu0 %v989
    %1186 = vmatpush2.bf16.msra.mxu0 %v988
    %1187 = vmatprep.mubr.bf16.mxu0 %v85
    %1188 = vmatmul.mubr.bf16.gmra.mxu0 %v84
    %v1189 = vpop.f32.mrf.mxu0
    %v1190 = vadd.f32 %v753, %v1189
    %v1191 = vpop.f32.mrf.mxu0
    %v1192 = vadd.f32 %v757, %v1191
    %v1193 = vpop.f32.mrf.mxu0
    %v1194 = vadd.f32 %v753, %v1193
    %v1195 = vpop.f32.mrf.mxu0
    %v1196 = vadd.f32 %v757, %v1195
    %1197 = vmatprep.mubr.bf16.mxu0 %v87
    %1198 = vmatmul.mubr.bf16.gmra.mxu0 %v86
    %v1199 = vpop.f32.mrf.mxu0
    %v1200 = vadd.f32 %v753, %v1199
    %v1201 = vpop.f32.mrf.mxu0
    %v1202 = vadd.f32 %v757, %v1201
    %v1203 = vpop.f32.mrf.mxu0
    %v1204 = vadd.f32 %v753, %v1203
    %v1205 = vpop.f32.mrf.mxu0
    %v1206 = vadd.f32 %v757, %v1205
    %1207 = vmatprep.mubr.bf16.mxu0 %v89
    %1208 = vmatmul.mubr.bf16.gmra.mxu0 %v88
    %v1209 = vpop.f32.mrf.mxu0
    %v1210 = vadd.f32 %v753, %v1209
    %v1211 = vpop.f32.mrf.mxu0
    %v1212 = vadd.f32 %v757, %v1211
    %v1213 = vpop.f32.mrf.mxu0
    %v1214 = vadd.f32 %v753, %v1213
    %v1215 = vpop.f32.mrf.mxu0
    %v1216 = vadd.f32 %v757, %v1215
    %1217 = vmatprep.mubr.bf16.mxu0 %v91
    %1218 = vmatmul.mubr.bf16.gmra.mxu0 %v90
    %v1219 = vpop.f32.mrf.mxu0
    %v1220 = vadd.f32 %v753, %v1219
    %v1221 = vpop.f32.mrf.mxu0
    %v1222 = vadd.f32 %v757, %v1221
    %v1223 = vpop.f32.mrf.mxu0
    %v1224 = vadd.f32 %v753, %v1223
    %v1225 = vpop.f32.mrf.mxu0
    %v1226 = vadd.f32 %v757, %v1225
    %1227 = vdwg.mxu0
    %1228 = vst [vmem:[#allocation3] sm:$0xff] %v1117
    %1229 = vst [vmem:[#allocation3 + $0x8] sm:$0xff] %v1119
    %1230 = vst [vmem:[#allocation3 + $0x10] sm:$0xff] %v1190
    %1231 = vst [vmem:[#allocation3 + $0x18] sm:$0xff] %v1192
    %1232 = vst [vmem:[#allocation3 + $0x20] sm:$0xff] %v1121
    %1233 = vst [vmem:[#allocation3 + $0x28] sm:$0xff] %v1123
    %1234 = vst [vmem:[#allocation3 + $0x30] sm:$0xff] %v1194
    %1235 = vst [vmem:[#allocation3 + $0x38] sm:$0xff] %v1196
    %1236 = vst [vmem:[#allocation3 + $0x40] sm:$0xff] %v1127
    %1237 = vst [vmem:[#allocation3 + $0x48] sm:$0xff] %v1129
    %1238 = vst [vmem:[#allocation3 + $0x50] sm:$0xff] %v1200
    %1239 = vst [vmem:[#allocation3 + $0x58] sm:$0xff] %v1202
    %1240 = vst [vmem:[#allocation3 + $0x60] sm:$0xff] %v1131
    %1241 = vst [vmem:[#allocation3 + $0x68] sm:$0xff] %v1133
    %1242 = vst [vmem:[#allocation3 + $0x70] sm:$0xff] %v1204
    %1243 = vst [vmem:[#allocation3 + $0x78] sm:$0xff] %v1206
    %1244 = vst [vmem:[#allocation3 + $0x80] sm:$0xff] %v1137
    %1245 = vst [vmem:[#allocation3 + $0x88] sm:$0xff] %v1139
    %1246 = vst [vmem:[#allocation3 + $0x90] sm:$0xff] %v1210
    %1247 = vst [vmem:[#allocation3 + $0x98] sm:$0xff] %v1212
    %1248 = vst [vmem:[#allocation3 + $0xa0] sm:$0xff] %v1141
    %1249 = vst [vmem:[#allocation3 + $0xa8] sm:$0xff] %v1143
    %1250 = vst [vmem:[#allocation3 + $0xb0] sm:$0xff] %v1214
    %1251 = vst [vmem:[#allocation3 + $0xb8] sm:$0xff] %v1216
    %1252 = vst [vmem:[#allocation3 + $0xc0] sm:$0xff] %v1147
    %1253 = vst [vmem:[#allocation3 + $0xc8] sm:$0xff] %v1149
    %1254 = vst [vmem:[#allocation3 + $0xd0] sm:$0xff] %v1220
    %1255 = vst [vmem:[#allocation3 + $0xd8] sm:$0xff] %v1222
    %1256 = vst [vmem:[#allocation3 + $0xe0] sm:$0xff] %v1151
    %1257 = vst [vmem:[#allocation3 + $0xe8] sm:$0xff] %v1153
    %1258 = vst [vmem:[#allocation3 + $0xf0] sm:$0xff] %v1224
    %1259 = vst [vmem:[#allocation3 + $0xf8] sm:$0xff] %v1226
    %1260 = vst [vmem:[#allocation10] sm:$0xff] 0.0
    %1261 = vst [vmem:[#allocation10 + $0x8] sm:$0xff] 0.0
    %1262 = vst [vmem:[#allocation10 + $0x10] sm:$0xff] 0.0
    %1263 = vst [vmem:[#allocation10 + $0x18] sm:$0xff] 0.0
    %1264 = vst [vmem:[#allocation10 + $0x20] sm:$0xff] 0.0
    %1265 = vst [vmem:[#allocation10 + $0x28] sm:$0xff] 0.0
    %1266 = vst [vmem:[#allocation10 + $0x30] sm:$0xff] 0.0
    %1267 = vst [vmem:[#allocation10 + $0x38] sm:$0xff] 0.0
    %1268 = vst [vmem:[#allocation10 + $0x40] sm:$0xff] 0.0
    %1269 = vst [vmem:[#allocation10 + $0x48] sm:$0xff] 0.0
    %1270 = vst [vmem:[#allocation10 + $0x50] sm:$0xff] 0.0
    %1271 = vst [vmem:[#allocation10 + $0x58] sm:$0xff] 0.0
    %1272 = vst [vmem:[#allocation10 + $0x60] sm:$0xff] 0.0
    %1273 = vst [vmem:[#allocation10 + $0x68] sm:$0xff] 0.0
    %1274 = vst [vmem:[#allocation10 + $0x70] sm:$0xff] 0.0
    %1275 = vst [vmem:[#allocation10 + $0x78] sm:$0xff] 0.0
    // While loop
    $region46: #{model_forward.3} parent=1 // loop_pre_header
      _
    $region47: #{model_forward.3} parent=1 // loop_header
      %s1277 = sphi 0, %s1279
      %p1278 = scmp.ge.s32.totalorder %s1277, %s66
      %v1282 = vphi 0.0, %v1604
      %v1283 = vphi 0.0, %v1605
      %v1284 = vphi 0.0, %v1927
      %v1285 = vphi 0.0, %v1928
    $region48: #{model_forward.3} parent=1 // loop_header_branch
      %1281 = sbr.rel (%p1278) target = $region52
    $region49: #{model_forward.3} parent=1 // loop_body
      %s1286 = ssub.s32 %s66, 1
      %s1287 = ssub.s32 %s1286, %s1277
      %s1288 = smul.u32 %s1277, 8
      %v1289 = vpack.c.bf16 %v1282, %v1282
      %v1290 = vld [vmem:[#allocation5] sm:$0xff]
      %v1291 = vld [vmem:[#allocation5 + $0x8] sm:$0xff]
      %v1292 = vld [vmem:[#allocation5 + $0x10] sm:$0xff]
      %v1293 = vld [vmem:[#allocation5 + $0x18] sm:$0xff]
      %v1294 = vld [vmem:[#allocation5 + $0x20] sm:$0xff]
      %v1295 = vld [vmem:[#allocation5 + $0x28] sm:$0xff]
      %v1296 = vld [vmem:[#allocation5 + $0x30] sm:$0xff]
      %v1297 = vld [vmem:[#allocation5 + $0x38] sm:$0xff]
      %v1298 = vld [vmem:[#allocation5 + $0x40] sm:$0xff]
      %v1299 = vld [vmem:[#allocation5 + $0x48] sm:$0xff]
      %v1300 = vld [vmem:[#allocation5 + $0x50] sm:$0xff]
      %v1301 = vld [vmem:[#allocation5 + $0x58] sm:$0xff]
      %v1302 = vld [vmem:[#allocation5 + $0x60] sm:$0xff]
      %v1303 = vld [vmem:[#allocation5 + $0x68] sm:$0xff]
      %v1304 = vld [vmem:[#allocation5 + $0x70] sm:$0xff]
      %v1305 = vld [vmem:[#allocation5 + $0x78] sm:$0xff]
      %v1306 = vld [vmem:[#allocation5 + $0x80] sm:$0xff]
      %v1307 = vld [vmem:[#allocation5 + $0x88] sm:$0xff]
      %v1308 = vld [vmem:[#allocation5 + $0x90] sm:$0xff]
      %v1309 = vld [vmem:[#allocation5 + $0x98] sm:$0xff]
      %v1310 = vld [vmem:[#allocation5 + $0xa0] sm:$0xff]
      %v1311 = vld [vmem:[#allocation5 + $0xa8] sm:$0xff]
      %v1312 = vld [vmem:[#allocation5 + $0xb0] sm:$0xff]
      %v1313 = vld [vmem:[#allocation5 + $0xb8] sm:$0xff]
      %v1314 = vld [vmem:[#allocation5 + $0xc0] sm:$0xff]
      %v1315 = vld [vmem:[#allocation5 + $0xc8] sm:$0xff]
      %v1316 = vld [vmem:[#allocation5 + $0xd0] sm:$0xff]
      %v1317 = vld [vmem:[#allocation5 + $0xd8] sm:$0xff]
      %v1318 = vld [vmem:[#allocation5 + $0xe0] sm:$0xff]
      %v1319 = vld [vmem:[#allocation5 + $0xe8] sm:$0xff]
      %v1320 = vld [vmem:[#allocation5 + $0xf0] sm:$0xff]
      %v1321 = vld [vmem:[#allocation5 + $0xf8] sm:$0xff]
      %s1322 = sshra.s32 %s1288, 3
      %s1323 = sand.u32 %s1288, 7
      %s1324 = smul.u32 %s1322, 4
      %s1325 = smul.addr %s1324, 8
      %s1326 = scalar_lea.vmem [#allocation2], %s1325
      %v1327 = vld [vmem:[%s1326] sm:$0xff]
      %v1328 = vld [vmem:[%s1326 + $0x8] sm:$0xff]
      %v1329 = vld [vmem:[%s1326 + $0x10] sm:$0xff]
      %v1330 = vld [vmem:[%s1326 + $0x18] sm:$0xff]
      %v1363 = vunpack.c.l.b16 %v1290
      %v1364 = vunpack.c.h.b16 %v1290
      %v1365 = vunpack.c.l.b16 %v1291
      %v1366 = vunpack.c.h.b16 %v1291
      %v1367 = vunpack.c.l.b16 %v1292
      %v1368 = vunpack.c.h.b16 %v1292
      %v1369 = vunpack.c.l.b16 %v1293
      %v1370 = vunpack.c.h.b16 %v1293
      %v1371 = vunpack.c.l.b16 %v1294
      %v1372 = vunpack.c.h.b16 %v1294
      %v1373 = vunpack.c.l.b16 %v1295
      %v1374 = vunpack.c.h.b16 %v1295
      %v1375 = vunpack.c.l.b16 %v1296
      %v1376 = vunpack.c.h.b16 %v1296
      %v1377 = vunpack.c.l.b16 %v1297
      %v1378 = vunpack.c.h.b16 %v1297
      %v1379 = vunpack.c.l.b16 %v1298
      %v1380 = vunpack.c.h.b16 %v1298
      %v1381 = vunpack.c.l.b16 %v1299
      %v1382 = vunpack.c.h.b16 %v1299
      %v1383 = vunpack.c.l.b16 %v1300
      %v1384 = vunpack.c.h.b16 %v1300
      %v1385 = vunpack.c.l.b16 %v1301
      %v1386 = vunpack.c.h.b16 %v1301
      %v1387 = vunpack.c.l.b16 %v1302
      %v1388 = vunpack.c.h.b16 %v1302
      %v1389 = vunpack.c.l.b16 %v1303
      %v1390 = vunpack.c.h.b16 %v1303
      %v1391 = vunpack.c.l.b16 %v1304
      %v1392 = vunpack.c.h.b16 %v1304
      %v1393 = vunpack.c.l.b16 %v1305
      %v1394 = vunpack.c.h.b16 %v1305
      %v1395 = vunpack.c.l.b16 %v1306
      %v1396 = vunpack.c.h.b16 %v1306
      %v1397 = vunpack.c.l.b16 %v1307
      %v1398 = vunpack.c.h.b16 %v1307
      %v1399 = vunpack.c.l.b16 %v1308
      %v1400 = vunpack.c.h.b16 %v1308
      %v1401 = vunpack.c.l.b16 %v1309
      %v1402 = vunpack.c.h.b16 %v1309
      %v1403 = vunpack.c.l.b16 %v1310
      %v1404 = vunpack.c.h.b16 %v1310
      %v1405 = vunpack.c.l.b16 %v1311
      %v1406 = vunpack.c.h.b16 %v1311
      %v1407 = vunpack.c.l.b16 %v1312
      %v1408 = vunpack.c.h.b16 %v1312
      %v1409 = vunpack.c.l.b16 %v1313
      %v1410 = vunpack.c.h.b16 %v1313
      %v1411 = vunpack.c.l.b16 %v1314
      %v1412 = vunpack.c.h.b16 %v1314
      %v1413 = vunpack.c.l.b16 %v1315
      %v1414 = vunpack.c.h.b16 %v1315
      %v1415 = vunpack.c.l.b16 %v1316
      %v1416 = vunpack.c.h.b16 %v1316
      %v1417 = vunpack.c.l.b16 %v1317
      %v1418 = vunpack.c.h.b16 %v1317
      %v1419 = vunpack.c.l.b16 %v1318
      %v1420 = vunpack.c.h.b16 %v1318
      %v1421 = vunpack.c.l.b16 %v1319
      %v1422 = vunpack.c.h.b16 %v1319
      %v1423 = vunpack.c.l.b16 %v1320
      %v1424 = vunpack.c.h.b16 %v1320
      %v1425 = vunpack.c.l.b16 %v1321
      %v1426 = vunpack.c.h.b16 %v1321
      %v1427 = vpack.c.b16 %v1367, %v1363
      %v1428 = vpack.c.b16 %v1368, %v1364
      %v1429 = vpack.c.b16 %v1369, %v1365
      %v1430 = vpack.c.b16 %v1370, %v1366
      %v1431 = vpack.c.b16 %v1375, %v1371
      %v1432 = vpack.c.b16 %v1376, %v1372
      %v1433 = vpack.c.b16 %v1377, %v1373
      %v1434 = vpack.c.b16 %v1378, %v1374
      %v1435 = vpack.c.b16 %v1383, %v1379
      %v1436 = vpack.c.b16 %v1384, %v1380
      %v1437 = vpack.c.b16 %v1385, %v1381
      %v1438 = vpack.c.b16 %v1386, %v1382
      %v1439 = vpack.c.b16 %v1391, %v1387
      %v1440 = vpack.c.b16 %v1392, %v1388
      %v1441 = vpack.c.b16 %v1393, %v1389
      %v1442 = vpack.c.b16 %v1394, %v1390
      %v1443 = vpack.c.b16 %v1399, %v1395
      %v1444 = vpack.c.b16 %v1400, %v1396
      %v1445 = vpack.c.b16 %v1401, %v1397
      %v1446 = vpack.c.b16 %v1402, %v1398
      %v1447 = vpack.c.b16 %v1407, %v1403
      %v1448 = vpack.c.b16 %v1408, %v1404
      %v1449 = vpack.c.b16 %v1409, %v1405
      %v1450 = vpack.c.b16 %v1410, %v1406
      %v1451 = vpack.c.b16 %v1415, %v1411
      %v1452 = vpack.c.b16 %v1416, %v1412
      %v1453 = vpack.c.b16 %v1417, %v1413
      %v1454 = vpack.c.b16 %v1418, %v1414
      %v1455 = vpack.c.b16 %v1423, %v1419
      %v1456 = vpack.c.b16 %v1424, %v1420
      %v1457 = vpack.c.b16 %v1425, %v1421
      %v1458 = vpack.c.b16 %v1426, %v1422
      %1491 = vmatprep.subr.bf16.mxu0 %v1456
      %1492 = vmatpush1.bf16.msra.mxu0 %v1455
      %1493 = vmatprep.subr.bf16.mxu0 %v1452
      %1494 = vmatpush1.bf16.msra.mxu0 %v1451
      %1495 = vmatprep.subr.bf16.mxu0 %v1448
      %1496 = vmatpush1.bf16.msra.mxu0 %v1447
      %1497 = vmatprep.subr.bf16.mxu0 %v1444
      %1498 = vmatpush1.bf16.msra.mxu0 %v1443
      %1499 = vmatprep.subr.bf16.mxu0 %v1440
      %1500 = vmatpush1.bf16.msra.mxu0 %v1439
      %1501 = vmatprep.subr.bf16.mxu0 %v1436
      %1502 = vmatpush1.bf16.msra.mxu0 %v1435
      %1503 = vmatprep.subr.bf16.mxu0 %v1432
      %1504 = vmatpush1.bf16.msra.mxu0 %v1431
      %1505 = vmatprep.subr.bf16.mxu0 %v1428
      %1506 = vmatpush1.bf16.msra.mxu0 %v1427
      %1507 = vmatprep.subr.bf16.mxu0 0
      %1508 = vmatpush2.bf16.msra.mxu0 0
      %1509 = vmatprep.subr.bf16.mxu0 0
      %1510 = vmatpush2.bf16.msra.mxu0 0
      %1511 = vmatprep.subr.bf16.mxu0 0
      %1512 = vmatpush2.bf16.msra.mxu0 0
      %1513 = vmatprep.subr.bf16.mxu0 0
      %1514 = vmatpush2.bf16.msra.mxu0 0
      %1515 = vmatprep.subr.bf16.mxu0 0
      %1516 = vmatpush2.bf16.msra.mxu0 0
      %1517 = vmatprep.subr.bf16.mxu0 0
      %1518 = vmatpush2.bf16.msra.mxu0 0
      %1519 = vmatprep.subr.bf16.mxu0 0
      %1520 = vmatpush2.bf16.msra.mxu0 0
      %1521 = vmatprep.subr.bf16.mxu0 0
      %1522 = vmatpush2.bf16.msra.mxu0 0
      %1523 = vmatprep.mubr.bf16.mxu0 0
      %1524 = vmatmul.mubr.bf16.gmra.mxu0 %v1289
      %v1525 = vpop.f32.mrf.mxu0
      %v1526 = vadd.f32 %v1327, %v1525
      %v1527 = vpop.f32.mrf.mxu0
      %v1528 = vadd.f32 %v1328, %v1527
      %v1529 = vpop.f32.mrf.mxu0
      %v1530 = vpop.f32.mrf.mxu0
      %1531 = vdwg.mxu0
      %1532 = vmatprep.subr.bf16.mxu0 %v1458
      %1533 = vmatpush1.bf16.msra.mxu0 %v1457
      %1534 = vmatprep.subr.bf16.mxu0 %v1454
      %1535 = vmatpush1.bf16.msra.mxu0 %v1453
      %1536 = vmatprep.subr.bf16.mxu0 %v1450
      %1537 = vmatpush1.bf16.msra.mxu0 %v1449
      %1538 = vmatprep.subr.bf16.mxu0 %v1446
      %1539 = vmatpush1.bf16.msra.mxu0 %v1445
      %1540 = vmatprep.subr.bf16.mxu0 %v1442
      %1541 = vmatpush1.bf16.msra.mxu0 %v1441
      %1542 = vmatprep.subr.bf16.mxu0 %v1438
      %1543 = vmatpush1.bf16.msra.mxu0 %v1437
      %1544 = vmatprep.subr.bf16.mxu0 %v1434
      %1545 = vmatpush1.bf16.msra.mxu0 %v1433
      %1546 = vmatprep.subr.bf16.mxu0 %v1430
      %1547 = vmatpush1.bf16.msra.mxu0 %v1429
      %1548 = vmatprep.subr.bf16.mxu0 0
      %1549 = vmatpush2.bf16.msra.mxu0 0
      %1550 = vmatprep.subr.bf16.mxu0 0
      %1551 = vmatpush2.bf16.msra.mxu0 0
      %1552 = vmatprep.subr.bf16.mxu0 0
      %1553 = vmatpush2.bf16.msra.mxu0 0
      %1554 = vmatprep.subr.bf16.mxu0 0
      %1555 = vmatpush2.bf16.msra.mxu0 0
      %1556 = vmatprep.subr.bf16.mxu0 0
      %1557 = vmatpush2.bf16.msra.mxu0 0
      %1558 = vmatprep.subr.bf16.mxu0 0
      %1559 = vmatpush2.bf16.msra.mxu0 0
      %1560 = vmatprep.subr.bf16.mxu0 0
      %1561 = vmatpush2.bf16.msra.mxu0 0
      %1562 = vmatprep.subr.bf16.mxu0 0
      %1563 = vmatpush2.bf16.msra.mxu0 0
      %1564 = vmatprep.mubr.bf16.mxu0 0
      %1565 = vmatmul.mubr.bf16.gmra.mxu0 %v1289
      %v1566 = vpop.f32.mrf.mxu0
      %v1567 = vadd.f32 %v1329, %v1566
      %v1568 = vpop.f32.mrf.mxu0
      %v1569 = vadd.f32 %v1330, %v1568
      %v1570 = vpop.f32.mrf.mxu0
      %v1571 = vpop.f32.mrf.mxu0
      %1572 = vdwg.mxu0
      %v1573 = vstv %s1277
      %vm1574 = vcmp.lt.s32.totalorder %v1573, %v67
      %v1575 = vxor.u32 %v1526, 2147483648
      %v1576 = vmul.f32 %v1575, 1.442695
      %v1577 = vpow.pop %v1576
      %v1578 = vadd.f32 %v1577, 1.0
      %v1579 = vrcp.pop %v1578
      %v1580 = vmul.f32 1.0, %v1579
      %v1581 = vxor.u32 %v1528, 2147483648
      %v1582 = vmul.f32 %v1581, 1.442695
      %v1583 = vpow.pop %v1582
      %v1584 = vadd.f32 %v1583, 1.0
      %v1585 = vrcp.pop %v1584
      %v1586 = vmul.f32 1.0, %v1585
      %v1587 = vtanh.pop %v1567
      %v1588 = vxor.u32 %v1569, 2147483648
      %v1589 = vmul.f32 %v1588, 1.442695
      %v1590 = vpow.pop %v1589
      %v1591 = vadd.f32 %v1590, 1.0
      %v1592 = vrcp.pop %v1591
      %v1593 = vmul.f32 1.0, %v1592
      %v1594 = vmul.f32 %v1586, %v1283
      %v1595 = vmul.f32 %v1580, %v1587
      %v1596 = vadd.f32 %v1594, %v1595
      %v1597 = vtanh.pop %v1596
      %v1598 = vmul.f32 %v1593, %v1597
      %v1599 = vsel %vm1574, 1, 0
      %1600 = vset.pattern.permute.xlu0 0
      %1601 = vperm.xlu0 %1600, %v1599
      %v1602 = vpop.permute.xlu0 %1601
      %vm1603 = vcmp.eq.s32.totalorder %v1602, 1
      %v1604 = vsel %vm1603, %v1598, %v1282
      %v1605 = vsel %vm1603, %v1596, %v1283
      %v1606 = vsel %vm1603, %v1598, 0.0
      %s1607 = smul.u32 %s1277, 2
      %s1608 = smul.addr %s1607, 8
      %s1609 = scalar_lea.vmem [#allocation10], %s1608
      %1610 = vst [vmem:[%s1609] sm:$0xff] %v1606
      %s1611 = smul.u32 %s1287, 8
      %v1612 = vpack.c.bf16 %v1284, %v1284
      %v1613 = vld [vmem:[#allocation8] sm:$0xff]
      %v1614 = vld [vmem:[#allocation8 + $0x8] sm:$0xff]
      %v1615 = vld [vmem:[#allocation8 + $0x10] sm:$0xff]
      %v1616 = vld [vmem:[#allocation8 + $0x18] sm:$0xff]
      %v1617 = vld [vmem:[#allocation8 + $0x20] sm:$0xff]
      %v1618 = vld [vmem:[#allocation8 + $0x28] sm:$0xff]
      %v1619 = vld [vmem:[#allocation8 + $0x30] sm:$0xff]
      %v1620 = vld [vmem:[#allocation8 + $0x38] sm:$0xff]
      %v1621 = vld [vmem:[#allocation8 + $0x40] sm:$0xff]
      %v1622 = vld [vmem:[#allocation8 + $0x48] sm:$0xff]
      %v1623 = vld [vmem:[#allocation8 + $0x50] sm:$0xff]
      %v1624 = vld [vmem:[#allocation8 + $0x58] sm:$0xff]
      %v1625 = vld [vmem:[#allocation8 + $0x60] sm:$0xff]
      %v1626 = vld [vmem:[#allocation8 + $0x68] sm:$0xff]
      %v1627 = vld [vmem:[#allocation8 + $0x70] sm:$0xff]
      %v1628 = vld [vmem:[#allocation8 + $0x78] sm:$0xff]
      %v1629 = vld [vmem:[#allocation8 + $0x80] sm:$0xff]
      %v1630 = vld [vmem:[#allocation8 + $0x88] sm:$0xff]
      %v1631 = vld [vmem:[#allocation8 + $0x90] sm:$0xff]
      %v1632 = vld [vmem:[#allocation8 + $0x98] sm:$0xff]
      %v1633 = vld [vmem:[#allocation8 + $0xa0] sm:$0xff]
      %v1634 = vld [vmem:[#allocation8 + $0xa8] sm:$0xff]
      %v1635 = vld [vmem:[#allocation8 + $0xb0] sm:$0xff]
      %v1636 = vld [vmem:[#allocation8 + $0xb8] sm:$0xff]
      %v1637 = vld [vmem:[#allocation8 + $0xc0] sm:$0xff]
      %v1638 = vld [vmem:[#allocation8 + $0xc8] sm:$0xff]
      %v1639 = vld [vmem:[#allocation8 + $0xd0] sm:$0xff]
      %v1640 = vld [vmem:[#allocation8 + $0xd8] sm:$0xff]
      %v1641 = vld [vmem:[#allocation8 + $0xe0] sm:$0xff]
      %v1642 = vld [vmem:[#allocation8 + $0xe8] sm:$0xff]
      %v1643 = vld [vmem:[#allocation8 + $0xf0] sm:$0xff]
      %v1644 = vld [vmem:[#allocation8 + $0xf8] sm:$0xff]
      %s1645 = sshra.s32 %s1611, 3
      %s1646 = sand.u32 %s1611, 7
      %s1647 = smul.u32 %s1645, 4
      %s1648 = smul.addr %s1647, 8
      %s1649 = scalar_lea.vmem [#allocation3], %s1648
      %v1650 = vld [vmem:[%s1649] sm:$0xff]
      %v1651 = vld [vmem:[%s1649 + $0x8] sm:$0xff]
      %v1652 = vld [vmem:[%s1649 + $0x10] sm:$0xff]
      %v1653 = vld [vmem:[%s1649 + $0x18] sm:$0xff]
      %v1686 = vunpack.c.l.b16 %v1613
      %v1687 = vunpack.c.h.b16 %v1613
      %v1688 = vunpack.c.l.b16 %v1614
      %v1689 = vunpack.c.h.b16 %v1614
      %v1690 = vunpack.c.l.b16 %v1615
      %v1691 = vunpack.c.h.b16 %v1615
      %v1692 = vunpack.c.l.b16 %v1616
      %v1693 = vunpack.c.h.b16 %v1616
      %v1694 = vunpack.c.l.b16 %v1617
      %v1695 = vunpack.c.h.b16 %v1617
      %v1696 = vunpack.c.l.b16 %v1618
      %v1697 = vunpack.c.h.b16 %v1618
      %v1698 = vunpack.c.l.b16 %v1619
      %v1699 = vunpack.c.h.b16 %v1619
      %v1700 = vunpack.c.l.b16 %v1620
      %v1701 = vunpack.c.h.b16 %v1620
      %v1702 = vunpack.c.l.b16 %v1621
      %v1703 = vunpack.c.h.b16 %v1621
      %v1704 = vunpack.c.l.b16 %v1622
      %v1705 = vunpack.c.h.b16 %v1622
      %v1706 = vunpack.c.l.b16 %v1623
      %v1707 = vunpack.c.h.b16 %v1623
      %v1708 = vunpack.c.l.b16 %v1624
      %v1709 = vunpack.c.h.b16 %v1624
      %v1710 = vunpack.c.l.b16 %v1625
      %v1711 = vunpack.c.h.b16 %v1625
      %v1712 = vunpack.c.l.b16 %v1626
      %v1713 = vunpack.c.h.b16 %v1626
      %v1714 = vunpack.c.l.b16 %v1627
      %v1715 = vunpack.c.h.b16 %v1627
      %v1716 = vunpack.c.l.b16 %v1628
      %v1717 = vunpack.c.h.b16 %v1628
      %v1718 = vunpack.c.l.b16 %v1629
      %v1719 = vunpack.c.h.b16 %v1629
      %v1720 = vunpack.c.l.b16 %v1630
      %v1721 = vunpack.c.h.b16 %v1630
      %v1722 = vunpack.c.l.b16 %v1631
      %v1723 = vunpack.c.h.b16 %v1631
      %v1724 = vunpack.c.l.b16 %v1632
      %v1725 = vunpack.c.h.b16 %v1632
      %v1726 = vunpack.c.l.b16 %v1633
      %v1727 = vunpack.c.h.b16 %v1633
      %v1728 = vunpack.c.l.b16 %v1634
      %v1729 = vunpack.c.h.b16 %v1634
      %v1730 = vunpack.c.l.b16 %v1635
      %v1731 = vunpack.c.h.b16 %v1635
      %v1732 = vunpack.c.l.b16 %v1636
      %v1733 = vunpack.c.h.b16 %v1636
      %v1734 = vunpack.c.l.b16 %v1637
      %v1735 = vunpack.c.h.b16 %v1637
      %v1736 = vunpack.c.l.b16 %v1638
      %v1737 = vunpack.c.h.b16 %v1638
      %v1738 = vunpack.c.l.b16 %v1639
      %v1739 = vunpack.c.h.b16 %v1639
      %v1740 = vunpack.c.l.b16 %v1640
      %v1741 = vunpack.c.h.b16 %v1640
      %v1742 = vunpack.c.l.b16 %v1641
      %v1743 = vunpack.c.h.b16 %v1641
      %v1744 = vunpack.c.l.b16 %v1642
      %v1745 = vunpack.c.h.b16 %v1642
      %v1746 = vunpack.c.l.b16 %v1643
      %v1747 = vunpack.c.h.b16 %v1643
      %v1748 = vunpack.c.l.b16 %v1644
      %v1749 = vunpack.c.h.b16 %v1644
      %v1750 = vpack.c.b16 %v1690, %v1686
      %v1751 = vpack.c.b16 %v1691, %v1687
      %v1752 = vpack.c.b16 %v1692, %v1688
      %v1753 = vpack.c.b16 %v1693, %v1689
      %v1754 = vpack.c.b16 %v1698, %v1694
      %v1755 = vpack.c.b16 %v1699, %v1695
      %v1756 = vpack.c.b16 %v1700, %v1696
      %v1757 = vpack.c.b16 %v1701, %v1697
      %v1758 = vpack.c.b16 %v1706, %v1702
      %v1759 = vpack.c.b16 %v1707, %v1703
      %v1760 = vpack.c.b16 %v1708, %v1704
      %v1761 = vpack.c.b16 %v1709, %v1705
      %v1762 = vpack.c.b16 %v1714, %v1710
      %v1763 = vpack.c.b16 %v1715, %v1711
      %v1764 = vpack.c.b16 %v1716, %v1712
      %v1765 = vpack.c.b16 %v1717, %v1713
      %v1766 = vpack.c.b16 %v1722, %v1718
      %v1767 = vpack.c.b16 %v1723, %v1719
      %v1768 = vpack.c.b16 %v1724, %v1720
      %v1769 = vpack.c.b16 %v1725, %v1721
      %v1770 = vpack.c.b16 %v1730, %v1726
      %v1771 = vpack.c.b16 %v1731, %v1727
      %v1772 = vpack.c.b16 %v1732, %v1728
      %v1773 = vpack.c.b16 %v1733, %v1729
      %v1774 = vpack.c.b16 %v1738, %v1734
      %v1775 = vpack.c.b16 %v1739, %v1735
      %v1776 = vpack.c.b16 %v1740, %v1736
      %v1777 = vpack.c.b16 %v1741, %v1737
      %v1778 = vpack.c.b16 %v1746, %v1742
      %v1779 = vpack.c.b16 %v1747, %v1743
      %v1780 = vpack.c.b16 %v1748, %v1744
      %v1781 = vpack.c.b16 %v1749, %v1745
      %1814 = vmatprep.subr.bf16.mxu0 %v1779
      %1815 = vmatpush1.bf16.msra.mxu0 %v1778
      %1816 = vmatprep.subr.bf16.mxu0 %v1775
      %1817 = vmatpush1.bf16.msra.mxu0 %v1774
      %1818 = vmatprep.subr.bf16.mxu0 %v1771
      %1819 = vmatpush1.bf16.msra.mxu0 %v1770
      %1820 = vmatprep.subr.bf16.mxu0 %v1767
      %1821 = vmatpush1.bf16.msra.mxu0 %v1766
      %1822 = vmatprep.subr.bf16.mxu0 %v1763
      %1823 = vmatpush1.bf16.msra.mxu0 %v1762
      %1824 = vmatprep.subr.bf16.mxu0 %v1759
      %1825 = vmatpush1.bf16.msra.mxu0 %v1758
      %1826 = vmatprep.subr.bf16.mxu0 %v1755
      %1827 = vmatpush1.bf16.msra.mxu0 %v1754
      %1828 = vmatprep.subr.bf16.mxu0 %v1751
      %1829 = vmatpush1.bf16.msra.mxu0 %v1750
      %1830 = vmatprep.subr.bf16.mxu0 0
      %1831 = vmatpush2.bf16.msra.mxu0 0
      %1832 = vmatprep.subr.bf16.mxu0 0
      %1833 = vmatpush2.bf16.msra.mxu0 0
      %1834 = vmatprep.subr.bf16.mxu0 0
      %1835 = vmatpush2.bf16.msra.mxu0 0
      %1836 = vmatprep.subr.bf16.mxu0 0
      %1837 = vmatpush2.bf16.msra.mxu0 0
      %1838 = vmatprep.subr.bf16.mxu0 0
      %1839 = vmatpush2.bf16.msra.mxu0 0
      %1840 = vmatprep.subr.bf16.mxu0 0
      %1841 = vmatpush2.bf16.msra.mxu0 0
      %1842 = vmatprep.subr.bf16.mxu0 0
      %1843 = vmatpush2.bf16.msra.mxu0 0
      %1844 = vmatprep.subr.bf16.mxu0 0
      %1845 = vmatpush2.bf16.msra.mxu0 0
      %1846 = vmatprep.mubr.bf16.mxu0 0
      %1847 = vmatmul.mubr.bf16.gmra.mxu0 %v1612
      %v1848 = vpop.f32.mrf.mxu0
      %v1849 = vadd.f32 %v1650, %v1848
      %v1850 = vpop.f32.mrf.mxu0
      %v1851 = vadd.f32 %v1651, %v1850
      %v1852 = vpop.f32.mrf.mxu0
      %v1853 = vpop.f32.mrf.mxu0
      %1854 = vdwg.mxu0
      %1855 = vmatprep.subr.bf16.mxu0 %v1781
      %1856 = vmatpush1.bf16.msra.mxu0 %v1780
      %1857 = vmatprep.subr.bf16.mxu0 %v1777
      %1858 = vmatpush1.bf16.msra.mxu0 %v1776
      %1859 = vmatprep.subr.bf16.mxu0 %v1773
      %1860 = vmatpush1.bf16.msra.mxu0 %v1772
      %1861 = vmatprep.subr.bf16.mxu0 %v1769
      %1862 = vmatpush1.bf16.msra.mxu0 %v1768
      %1863 = vmatprep.subr.bf16.mxu0 %v1765
      %1864 = vmatpush1.bf16.msra.mxu0 %v1764
      %1865 = vmatprep.subr.bf16.mxu0 %v1761
      %1866 = vmatpush1.bf16.msra.mxu0 %v1760
      %1867 = vmatprep.subr.bf16.mxu0 %v1757
      %1868 = vmatpush1.bf16.msra.mxu0 %v1756
      %1869 = vmatprep.subr.bf16.mxu0 %v1753
      %1870 = vmatpush1.bf16.msra.mxu0 %v1752
      %1871 = vmatprep.subr.bf16.mxu0 0
      %1872 = vmatpush2.bf16.msra.mxu0 0
      %1873 = vmatprep.subr.bf16.mxu0 0
      %1874 = vmatpush2.bf16.msra.mxu0 0
      %1875 = vmatprep.subr.bf16.mxu0 0
      %1876 = vmatpush2.bf16.msra.mxu0 0
      %1877 = vmatprep.subr.bf16.mxu0 0
      %1878 = vmatpush2.bf16.msra.mxu0 0
      %1879 = vmatprep.subr.bf16.mxu0 0
      %1880 = vmatpush2.bf16.msra.mxu0 0
      %1881 = vmatprep.subr.bf16.mxu0 0
      %1882 = vmatpush2.bf16.msra.mxu0 0
      %1883 = vmatprep.subr.bf16.mxu0 0
      %1884 = vmatpush2.bf16.msra.mxu0 0
      %1885 = vmatprep.subr.bf16.mxu0 0
      %1886 = vmatpush2.bf16.msra.mxu0 0
      %1887 = vmatprep.mubr.bf16.mxu0 0
      %1888 = vmatmul.mubr.bf16.gmra.mxu0 %v1612
      %v1889 = vpop.f32.mrf.mxu0
      %v1890 = vadd.f32 %v1652, %v1889
      %v1891 = vpop.f32.mrf.mxu0
      %v1892 = vadd.f32 %v1653, %v1891
      %v1893 = vpop.f32.mrf.mxu0
      %v1894 = vpop.f32.mrf.mxu0
      %1895 = vdwg.mxu0
      %v1896 = vstv %s1287
      %vm1897 = vcmp.lt.s32.totalorder %v1896, %v67
      %v1898 = vxor.u32 %v1849, 2147483648
      %v1899 = vmul.f32 %v1898, 1.442695
      %v1900 = vpow.pop %v1899
      %v1901 = vadd.f32 %v1900, 1.0
      %v1902 = vrcp.pop %v1901
      %v1903 = vmul.f32 1.0, %v1902
      %v1904 = vxor.u32 %v1851, 2147483648
      %v1905 = vmul.f32 %v1904, 1.442695
      %v1906 = vpow.pop %v1905
      %v1907 = vadd.f32 %v1906, 1.0
      %v1908 = vrcp.pop %v1907
      %v1909 = vmul.f32 1.0, %v1908
      %v1910 = vtanh.pop %v1890
      %v1911 = vxor.u32 %v1892, 2147483648
      %v1912 = vmul.f32 %v1911, 1.442695
      %v1913 = vpow.pop %v1912
      %v1914 = vadd.f32 %v1913, 1.0
      %v1915 = vrcp.pop %v1914
      %v1916 = vmul.f32 1.0, %v1915
      %v1917 = vmul.f32 %v1909, %v1285
      %v1918 = vmul.f32 %v1903, %v1910
      %v1919 = vadd.f32 %v1917, %v1918
      %v1920 = vtanh.pop %v1919
      %v1921 = vmul.f32 %v1916, %v1920
      %v1922 = vsel %vm1897, 1, 0
      %1923 = vset.pattern.permute.xlu0 0
      %1924 = vperm.xlu0 %1923, %v1922
      %v1925 = vpop.permute.xlu0 %1924
      %vm1926 = vcmp.eq.s32.totalorder %v1925, 1
      %v1927 = vsel %vm1926, %v1921, %v1284
      %v1928 = vsel %vm1926, %v1919, %v1285
      %v1929 = vsel %vm1926, %v1921, 0.0
      %s1930 = smul.u32 %s1287, 2
      %s1931 = smul.addr %s1930, 8
      %s1932 = scalar_lea.vmem [#allocation10], %s1931
      %1933 = vst [vmem:[%s1932 + $0x8] sm:$0xff] %v1929
    $region50: #{model_forward.3} parent=1 // loop_footer
      %s1279 = sadd.s32 %s1277, 1
    $region51: #{model_forward.3} parent=1 // loop_footer_branch
      %1276 = sbr.rel target = $region47
    $region52: #{model_forward.3} parent=1 // loop_exit
      _
    %1934 = vst [vmem:[%s10] sm:$0xff] %v1282
    %1935 = vst [vmem:[%s11] sm:$0xff] %v1284
    // Predicated region
    $region53: #{model_forward.3} parent=1 // pred_check
      _
    $region54: #{model_forward.3} parent=1 // pred_check_branch
      %1937 = sbr.rel (0) target = $region56
    $region55: #{model_forward.3} parent=1 // pred_region
      %s1939 = ssub.s32 2048, 2048
      %1940 = vsyncadd [#allocation7], %s1939
      %s1941 = sshll.u32 [#allocation10], 4
      %s1942 = int_to_ptr.vmem [resolvable:$true] %s1941
      %1947 = dma.vmem_to_hbm [thread:$0]  %s1942, 2048, %s9, [#allocation7], 256, 256, 16
    $region56: #{model_forward.3} parent=1 // pred_fallthru
      _
    // Predicated region
    $region57: #{model_forward.3} parent=1 // pred_check
      _
    $region58: #{model_forward.3} parent=1 // pred_check_branch
      %1949 = sbr.rel (0) target = $region60
    $region59: #{model_forward.3} parent=1 // pred_region
      _
    $region60: #{model_forward.3} parent=1 // pred_fallthru
      _
    // Predicated region
    $region61: #{model_forward.3} parent=1 // pred_check
      _
    $region62: #{model_forward.3} parent=1 // pred_check_branch
      %1951 = sbr.rel (0) target = $region64
    $region63: #{model_forward.3} parent=1 // pred_region
      _
    $region64: #{model_forward.3} parent=1 // pred_fallthru
      _
    // Predicated region
    $region65: #{model_forward.3} parent=1 // pred_check
      _
    $region66: #{model_forward.3} parent=1 // pred_check_branch
      %1953 = sbr.rel (0) target = $region68
    $region67: #{model_forward.3} parent=1 // pred_region
      %1954 = dma.done [#allocation7], 2048
    $region68: #{model_forward.3} parent=1 // pred_fallthru
      _
    // Predicated region
    $region69: #{model_forward.3} parent=1 // pred_check
      _
    $region70: #{model_forward.3} parent=1 // pred_check_branch
      %1956 = sbr.rel (0) target = $region72
    $region71: #{model_forward.3} parent=1 // pred_region
      _
    $region72: #{model_forward.3} parent=1 // pred_fallthru
      _
    // Predicated region
    $region73: #{model_forward.3} parent=1 // pred_check
      _
    $region74: #{model_forward.3} parent=1 // pred_check_branch
      %1958 = sbr.rel (0) target = $region76
    $region75: #{model_forward.3} parent=1 // pred_region
      _
    $region76: #{model_forward.3} parent=1 // pred_fallthru
      _
    %1959 = vsyncpa [#allocation6], 1
    %1960 = vsyncpa [#allocation9], 1
    %1961 = vsyncpa [#allocation7], 1

</llo_original>
